<compile_context>
chip_gen: v7x
topology: tpu7x:2x2x1
jax: 0.10.0
libtpu: 0.0.40
codegen_flags: <defaults>
</compile_context>

<pallas_src>
import functools
import math

import jax
import jax.numpy as jnp
from jax.experimental import pallas as pl
from jax.experimental.pallas import tpu as pltpu


# ------------------------- Fused attention-layer kernel -------------------------
def _fused_attention_kernel(xq_ref, xk_ref, xv_ref,
                            wq_ref, bq_ref, wk_ref, bk_ref, wv_ref, bv_ref,
                            wo_ref, bo_ref, o_ref, *, num_heads, causal):
    tb, Nt, D = xq_ref.shape
    Ns = xk_ref.shape[1]
    hd = D // num_heads

    # ---- fused Q/K/V projections (1/sqrt(hd) already folded into wq, bq) ----
    xq = xq_ref[...].reshape(tb * Nt, D)
    xk = xk_ref[...].reshape(tb * Ns, D)
    xv = xv_ref[...].reshape(tb * Ns, D)
    q = (jnp.dot(xq, wq_ref[...], preferred_element_type=jnp.float32)
         + bq_ref[...]).reshape(tb, Nt, D)
    k = (jnp.dot(xk, wk_ref[...], preferred_element_type=jnp.float32)
         + bk_ref[...]).reshape(tb, Ns, D)
    v = (jnp.dot(xv, wv_ref[...], preferred_element_type=jnp.float32)
         + bv_ref[...]).reshape(tb, Ns, D)

    if causal:
        # Hoisted once (shared by all heads / all rows of this block).
        rows = jax.lax.broadcasted_iota(jnp.int32, (1, Nt, Ns), 1)
        cols = jax.lax.broadcasted_iota(jnp.int32, (1, Nt, Ns), 2)
        keep = cols <= rows  # lower-triangular incl. diagonal (matches torch tril)

    # ---- per-head attention + accumulated output projection (all in VMEM) ----
    # out_proj(concat_h(o_h)) == sum_h o_h @ W_out[h*hd:(h+1)*hd, :] + b_out
    acc = jnp.broadcast_to(bo_ref[...].astype(jnp.float32), (tb * Nt, D))
    for h in range(num_heads):
        sl = slice(h * hd, (h + 1) * hd)
        qh = q[:, :, sl]                                    # (tb, Nt, hd)
        kh = k[:, :, sl]                                    # (tb, Ns, hd)
        vh = v[:, :, sl]                                    # (tb, Ns, hd)
        # Contract last dims directly -> no explicit k transpose (MXU path).
        s = jnp.einsum("bqd,bkd->bqk", qh, kh,
                       preferred_element_type=jnp.float32)   # (tb, Nt, Ns)
        if causal:
            s = jnp.where(keep, s, -jnp.inf)
        m = jnp.max(s, axis=-1, keepdims=True)
        p = jnp.exp(s - m)
        denom = jnp.sum(p, axis=-1, keepdims=True)
        attn = p * pl.reciprocal(denom, approx=True)          # EUP reciprocal
        oh = jnp.einsum("bqk,bkd->bqd", attn, vh,
                        preferred_element_type=jnp.float32)   # (tb, Nt, hd)
        acc = acc + jnp.dot(oh.reshape(tb * Nt, hd),
                            wo_ref[sl, :],
                            preferred_element_type=jnp.float32)

    o_ref[...] = acc.reshape(tb, Nt, D).astype(o_ref.dtype)


def _pick_rows_per_block(n_rows, max_rows=8):
    """Largest divisor of n_rows <= max_rows, keeping >= 2 grid steps when
    possible (v7x has 2 TensorCores; don't collapse the parallel axis)."""
    limit = max(1, min(max_rows, n_rows if n_rows < 2 else n_rows // 2))
    tb = 1
    for d in range(1, limit + 1):
        if n_rows % d == 0:
            tb = d
    return tb


def attention_layer_pallas(query, key, value, params, num_heads, causal):
    """Full AttentionLayer forward in one pallas_call.

    query: (B, T, Nt, D); key/value: (B, T, Ns, D) -> output (B, T, Nt, D).
    """
    B, T, Nt, D = query.shape
    Ns = key.shape[2]
    hd = D // num_heads
    scale = 1.0 / math.sqrt(hd)

    BT = B * T
    # Free reshapes (no transpose): collapse (B, T) into one grid axis.
    xq = query.reshape(BT, Nt, D)
    xk = key.reshape(BT, Ns, D)
    xv = value.reshape(BT, Ns, D)

    wq, bq, wk, bk, wv, bv, wo, bo = params
    # Fold the attention score scale into the Q projection (completely free).
    wq_s = wq * scale
    bq_s = (bq * scale).reshape(1, D)
    bk2 = bk.reshape(1, D)
    bv2 = bv.reshape(1, D)
    bo2 = bo.reshape(1, D)

    tb = _pick_rows_per_block(BT)
    grid = (BT // tb,)

    kern = functools.partial(_fused_attention_kernel,
                             num_heads=num_heads, causal=causal)
    full = lambda i: (0, 0)

    out = pl.pallas_call(
        kern,
        out_shape=jax.ShapeDtypeStruct((BT, Nt, D), query.dtype),
        grid_spec=pltpu.PrefetchScalarGridSpec(
            num_scalar_prefetch=0,
            grid=grid,
            in_specs=[
                pl.BlockSpec((tb, Nt, D), lambda i: (i, 0, 0)),
                pl.BlockSpec((tb, Ns, D), lambda i: (i, 0, 0)),
                pl.BlockSpec((tb, Ns, D), lambda i: (i, 0, 0)),
                pl.BlockSpec((D, D), full), pl.BlockSpec((1, D), full),
                pl.BlockSpec((D, D), full), pl.BlockSpec((1, D), full),
                pl.BlockSpec((D, D), full), pl.BlockSpec((1, D), full),
                pl.BlockSpec((D, D), full), pl.BlockSpec((1, D), full),
            ],
            out_specs=pl.BlockSpec((tb, Nt, D), lambda i: (i, 0, 0)),
        ),
        compiler_params=pltpu.CompilerParams(dimension_semantics=("parallel",)),
    )(xq, xk, xv, wq_s, bq_s, wk, bk2, wv, bv2, wo, bo2)

    return out.reshape(B, T, Nt, D)


# ------------------------------ Module equivalent --------------------------------
class AttentionLayerPallas:
    """JAX/Pallas port of the ImputeFormer AttentionLayer (forward pass)."""

    def __init__(self, model_dim, num_heads=8, mask=False, key=None):
        assert model_dim % num_heads == 0
        self.model_dim = model_dim
        self.num_heads = num_heads
        self.mask = mask
        self.head_dim = model_dim // num_heads

        if key is None:
            key = jax.random.PRNGKey(0)
        ks = jax.random.split(key, 8)
        bound = 1.0 / (model_dim ** 0.5)  # torch.nn.Linear default init range

        def u(k, shape):
            return jax.random.uniform(k, shape, jnp.float32, -bound, bound)

        # Weights stored as (in, out) so y = x @ W + b.
        self.wq, self.bq = u(ks[0], (model_dim, model_dim)), u(ks[1], (model_dim,))
        self.wk, self.bk = u(ks[2], (model_dim, model_dim)), u(ks[3], (model_dim,))
        self.wv, self.bv = u(ks[4], (model_dim, model_dim)), u(ks[5], (model_dim,))
        self.wo, self.bo = u(ks[6], (model_dim, model_dim)), u(ks[7], (model_dim,))

    def __call__(self, query, key, value):
        params = (self.wq, self.bq, self.wk, self.bk,
                  self.wv, self.bv, self.wo, self.bo)
        return attention_layer_pallas(query, key, value, params,
                                      self.num_heads, self.mask)


# --------------------------------- Reference --------------------------------------
def reference_forward(layer, query, key, value):
    """Pure-JAX mirror of the PyTorch forward for correctness checking."""
    B = query.shape[0]
    H, hd, D = layer.num_heads, layer.head_dim, layer.model_dim
    q = query @ layer.wq + layer.bq
    k = key @ layer.wk + layer.bk
    v = value @ layer.wv + layer.bv

    def split_heads(x):
        B_, T_, N_, _ = x.shape
        return jnp.transpose(x.reshape(B_, T_, N_, H, hd),
                             (3, 0, 1, 2, 4)).reshape(H * B_, T_, N_, hd)

    qh, kh, vh = split_heads(q), split_heads(k), split_heads(v)
    s = jnp.einsum("btqd,btkd->btqk", qh, kh) / (hd ** 0.5)
    if layer.mask:
        Nt, Ns = s.shape[-2], s.shape[-1]
        tril = jnp.tril(jnp.ones((Nt, Ns), dtype=bool))
        s = jnp.where(tril, s, -jnp.inf)
    a = jax.nn.softmax(s, axis=-1)
    oh = jnp.einsum("btqk,btkd->btqd", a, vh)
    T_, Nt_ = oh.shape[1], oh.shape[2]
    o = jnp.transpose(oh.reshape(H, B, T_, Nt_, hd),
                      (1, 2, 3, 0, 4)).reshape(B, T_, Nt_, D)
    return o @ layer.wo + layer.bo


# ----------------------------------- Main ------------------------------------------
if __name__ == "__main__":
    model_dim = 32
    num_heads = 4
    B, T, N = 2, 4, 16   # (batch, in_steps, num_nodes)

    root = jax.random.PRNGKey(0)
    k_param, k_q, k_k, k_v = jax.random.split(root, 4)

    query = jax.random.normal(k_q, (B, T, N, model_dim), jnp.float32)
    key = jax.random.normal(k_k, (B, T, N, model_dim), jnp.float32)
    value = jax.random.normal(k_v, (B, T, N, model_dim), jnp.float32)

    ok = True
    for use_mask in (False, True):
        layer = AttentionLayerPallas(model_dim, num_heads=num_heads,
                                     mask=use_mask, key=k_param)
        out = jax.block_until_ready(layer(query, key, value))
        ref = jax.block_until_ready(reference_forward(layer, query, key, value))
        assert out.shape == (B, T, N, model_dim)
        # Tolerance slightly relaxed vs pure f32: the softmax denominator uses
        # the hardware approximate reciprocal (pl.reciprocal(..., approx=True)).
        ok &= bool(jnp.allclose(out, ref, atol=2e-3, rtol=2e-3))

    assert ok, "mismatch vs reference"
    print("KERNEL_OK")
</pallas_src>

<mosaic_0001>
module attributes {stable_mosaic.version = 11 : i64} {
  func.func @_fused_attention_kernel(%arg0: i32, %arg1: memref<4x16x32xf32, #tpu.memory_space<vmem>>, %arg2: memref<4x16x32xf32, #tpu.memory_space<vmem>>, %arg3: memref<4x16x32xf32, #tpu.memory_space<vmem>>, %arg4: memref<32x32xf32, #tpu.memory_space<vmem>>, %arg5: memref<1x32xf32, #tpu.memory_space<vmem>>, %arg6: memref<32x32xf32, #tpu.memory_space<vmem>>, %arg7: memref<1x32xf32, #tpu.memory_space<vmem>>, %arg8: memref<32x32xf32, #tpu.memory_space<vmem>>, %arg9: memref<1x32xf32, #tpu.memory_space<vmem>>, %arg10: memref<32x32xf32, #tpu.memory_space<vmem>>, %arg11: memref<1x32xf32, #tpu.memory_space<vmem>>, %arg12: memref<4x16x32xf32, #tpu.memory_space<vmem>>) attributes {dimension_semantics = [#tpu.dimension_semantics<parallel>], iteration_bounds = array<i64: 2>, scalar_prefetch = 0 : i64, scratch_operands = 0 : i64, tpu.core_type = #tpu.core_type<tc>, window_params = [{transform_indices = @transform_0, window_bounds = array<i64: 4, 16, 32>}, {transform_indices = @transform_1, window_bounds = array<i64: 4, 16, 32>}, {transform_indices = @transform_2, window_bounds = array<i64: 4, 16, 32>}, {pipeline_mode = #tpu.pipeline_mode<synchronous>, transform_indices = @transform_3, window_bounds = array<i64: 32, 32>}, {pipeline_mode = #tpu.pipeline_mode<synchronous>, transform_indices = @transform_4, window_bounds = array<i64: 1, 32>}, {pipeline_mode = #tpu.pipeline_mode<synchronous>, transform_indices = @transform_5, window_bounds = array<i64: 32, 32>}, {pipeline_mode = #tpu.pipeline_mode<synchronous>, transform_indices = @transform_6, window_bounds = array<i64: 1, 32>}, {pipeline_mode = #tpu.pipeline_mode<synchronous>, transform_indices = @transform_7, window_bounds = array<i64: 32, 32>}, {pipeline_mode = #tpu.pipeline_mode<synchronous>, transform_indices = @transform_8, window_bounds = array<i64: 1, 32>}, {pipeline_mode = #tpu.pipeline_mode<synchronous>, transform_indices = @transform_9, window_bounds = array<i64: 32, 32>}, {pipeline_mode = #tpu.pipeline_mode<synchronous>, transform_indices = @transform_10, window_bounds = array<i64: 1, 32>}, {transform_indices = @transform_11, window_bounds = array<i64: 4, 16, 32>}]} {
    %c0 = arith.constant 0 : index
    %c0_0 = arith.constant 0 : index
    %c0_1 = arith.constant 0 : index
    %0 = vector.load %arg1[%c0, %c0_0, %c0_1] : memref<4x16x32xf32, #tpu.memory_space<vmem>>, vector<4x16x32xf32>
    %1 = vector.shape_cast %0 : vector<4x16x32xf32> to vector<64x32xf32>
    %c0_2 = arith.constant 0 : index
    %c0_3 = arith.constant 0 : index
    %c0_4 = arith.constant 0 : index
    %2 = vector.load %arg2[%c0_2, %c0_3, %c0_4] : memref<4x16x32xf32, #tpu.memory_space<vmem>>, vector<4x16x32xf32>
    %3 = vector.shape_cast %2 : vector<4x16x32xf32> to vector<64x32xf32>
    %c0_5 = arith.constant 0 : index
    %c0_6 = arith.constant 0 : index
    %c0_7 = arith.constant 0 : index
    %4 = vector.load %arg3[%c0_5, %c0_6, %c0_7] : memref<4x16x32xf32, #tpu.memory_space<vmem>>, vector<4x16x32xf32>
    %5 = vector.shape_cast %4 : vector<4x16x32xf32> to vector<64x32xf32>
    %c0_8 = arith.constant 0 : index
    %c0_9 = arith.constant 0 : index
    %6 = vector.load %arg4[%c0_8, %c0_9] : memref<32x32xf32, #tpu.memory_space<vmem>>, vector<32x32xf32>
    %cst = arith.constant dense<0.000000e+00> : vector<64x32xf32>
    %7 = tpu.matmul %1, %6, %cst {dimension_numbers = #tpu.dot_dimension_numbers<[1], [0], [0], [1], [0, 0, 1, 1], [], []>} : vector<64x32xf32>, vector<32x32xf32>, vector<64x32xf32> -> vector<64x32xf32>
    %c0_10 = arith.constant 0 : index
    %c0_11 = arith.constant 0 : index
    %8 = vector.load %arg5[%c0_10, %c0_11] : memref<1x32xf32, #tpu.memory_space<vmem>>, vector<1x32xf32>
    %9 = vector.broadcast %8 : vector<1x32xf32> to vector<64x32xf32>
    %10 = arith.addf %7, %9 : vector<64x32xf32>
    %11 = vector.shape_cast %10 : vector<64x32xf32> to vector<4x16x32xf32>
    %c0_12 = arith.constant 0 : index
    %c0_13 = arith.constant 0 : index
    %12 = vector.load %arg6[%c0_12, %c0_13] : memref<32x32xf32, #tpu.memory_space<vmem>>, vector<32x32xf32>
    %cst_14 = arith.constant dense<0.000000e+00> : vector<64x32xf32>
    %13 = tpu.matmul %3, %12, %cst_14 {dimension_numbers = #tpu.dot_dimension_numbers<[1], [0], [0], [1], [0, 0, 1, 1], [], []>} : vector<64x32xf32>, vector<32x32xf32>, vector<64x32xf32> -> vector<64x32xf32>
    %c0_15 = arith.constant 0 : index
    %c0_16 = arith.constant 0 : index
    %14 = vector.load %arg7[%c0_15, %c0_16] : memref<1x32xf32, #tpu.memory_space<vmem>>, vector<1x32xf32>
    %15 = vector.broadcast %14 : vector<1x32xf32> to vector<64x32xf32>
    %16 = arith.addf %13, %15 : vector<64x32xf32>
    %17 = vector.shape_cast %16 : vector<64x32xf32> to vector<4x16x32xf32>
    %c0_17 = arith.constant 0 : index
    %c0_18 = arith.constant 0 : index
    %18 = vector.load %arg8[%c0_17, %c0_18] : memref<32x32xf32, #tpu.memory_space<vmem>>, vector<32x32xf32>
    %cst_19 = arith.constant dense<0.000000e+00> : vector<64x32xf32>
    %19 = tpu.matmul %5, %18, %cst_19 {dimension_numbers = #tpu.dot_dimension_numbers<[1], [0], [0], [1], [0, 0, 1, 1], [], []>} : vector<64x32xf32>, vector<32x32xf32>, vector<64x32xf32> -> vector<64x32xf32>
    %c0_20 = arith.constant 0 : index
    %c0_21 = arith.constant 0 : index
    %20 = vector.load %arg9[%c0_20, %c0_21] : memref<1x32xf32, #tpu.memory_space<vmem>>, vector<1x32xf32>
    %21 = vector.broadcast %20 : vector<1x32xf32> to vector<64x32xf32>
    %22 = arith.addf %19, %21 : vector<64x32xf32>
    %23 = vector.shape_cast %22 : vector<64x32xf32> to vector<4x16x32xf32>
    %c0_22 = arith.constant 0 : index
    %c0_23 = arith.constant 0 : index
    %24 = vector.load %arg11[%c0_22, %c0_23] : memref<1x32xf32, #tpu.memory_space<vmem>>, vector<1x32xf32>
    %25 = vector.shape_cast %24 : vector<1x32xf32> to vector<1x32xf32>
    %26 = vector.broadcast %25 : vector<1x32xf32> to vector<64x32xf32>
    %27 = vector.extract_strided_slice %11 {offsets = [0, 0, 0], sizes = [4, 16, 8], strides = [1, 1, 1]} : vector<4x16x32xf32> to vector<4x16x8xf32>
    %28 = vector.extract_strided_slice %17 {offsets = [0, 0, 0], sizes = [4, 16, 8], strides = [1, 1, 1]} : vector<4x16x32xf32> to vector<4x16x8xf32>
    %29 = vector.extract_strided_slice %23 {offsets = [0, 0, 0], sizes = [4, 16, 8], strides = [1, 1, 1]} : vector<4x16x32xf32> to vector<4x16x8xf32>
    "tpu.trace_start"() <{level = 10 : i32, message = "bqd,bkd->bqk"}> : () -> ()
    %cst_24 = arith.constant dense<0.000000e+00> : vector<4x16x16xf32>
    %30 = tpu.matmul %27, %28, %cst_24 {dimension_numbers = #tpu.dot_dimension_numbers<[2], [2], [1], [1], [0, 0, 0, 1, 1, 1], [0], [0]>} : vector<4x16x8xf32>, vector<4x16x8xf32>, vector<4x16x16xf32> -> vector<4x16x16xf32>
    "tpu.trace_stop"() : () -> ()
    %cst_25 = arith.constant dense<0xFF800000> : vector<4x16xf32>
    %31 = vector.multi_reduction <maximumf>, %30, %cst_25 [2] : vector<4x16x16xf32> to vector<4x16xf32>
    %32 = vector.shape_cast %31 : vector<4x16xf32> to vector<4x16x1xf32>
    %33 = vector.broadcast %32 : vector<4x16x1xf32> to vector<4x16x16xf32>
    %34 = arith.subf %30, %33 : vector<4x16x16xf32>
    %35 = math.exp %34 : vector<4x16x16xf32>
    %cst_26 = arith.constant dense<0.000000e+00> : vector<4x16xf32>
    %36 = vector.multi_reduction <add>, %35, %cst_26 [2] : vector<4x16x16xf32> to vector<4x16xf32>
    %37 = vector.shape_cast %36 : vector<4x16xf32> to vector<4x16x1xf32>
    %38 = tpu.reciprocal %37 {approx = true} : vector<4x16x1xf32> -> vector<4x16x1xf32>
    %39 = vector.broadcast %38 : vector<4x16x1xf32> to vector<4x16x16xf32>
    %40 = arith.mulf %35, %39 : vector<4x16x16xf32>
    "tpu.trace_start"() <{level = 10 : i32, message = "bqk,bkd->bqd"}> : () -> ()
    %cst_27 = arith.constant dense<0.000000e+00> : vector<4x16x8xf32>
    %41 = tpu.matmul %40, %29, %cst_27 {dimension_numbers = #tpu.dot_dimension_numbers<[2], [1], [1], [2], [0, 0, 0, 1, 1, 2], [0], [0]>} : vector<4x16x16xf32>, vector<4x16x8xf32>, vector<4x16x8xf32> -> vector<4x16x8xf32>
    "tpu.trace_stop"() : () -> ()
    %42 = vector.shape_cast %41 : vector<4x16x8xf32> to vector<64x8xf32>
    %c0_28 = arith.constant 0 : index
    %c0_29 = arith.constant 0 : index
    %43 = vector.load %arg10[%c0_28, %c0_29] : memref<32x32xf32, #tpu.memory_space<vmem>>, vector<8x32xf32>
    %cst_30 = arith.constant dense<0.000000e+00> : vector<64x32xf32>
    %44 = tpu.matmul %42, %43, %cst_30 {dimension_numbers = #tpu.dot_dimension_numbers<[1], [0], [0], [1], [0, 0, 1, 1], [], []>} : vector<64x8xf32>, vector<8x32xf32>, vector<64x32xf32> -> vector<64x32xf32>
    %45 = arith.addf %26, %44 : vector<64x32xf32>
    %46 = vector.extract_strided_slice %11 {offsets = [0, 0, 8], sizes = [4, 16, 8], strides = [1, 1, 1]} : vector<4x16x32xf32> to vector<4x16x8xf32>
    %47 = vector.extract_strided_slice %17 {offsets = [0, 0, 8], sizes = [4, 16, 8], strides = [1, 1, 1]} : vector<4x16x32xf32> to vector<4x16x8xf32>
    %48 = vector.extract_strided_slice %23 {offsets = [0, 0, 8], sizes = [4, 16, 8], strides = [1, 1, 1]} : vector<4x16x32xf32> to vector<4x16x8xf32>
    "tpu.trace_start"() <{level = 10 : i32, message = "bqd,bkd->bqk"}> : () -> ()
    %cst_31 = arith.constant dense<0.000000e+00> : vector<4x16x16xf32>
    %49 = tpu.matmul %46, %47, %cst_31 {dimension_numbers = #tpu.dot_dimension_numbers<[2], [2], [1], [1], [0, 0, 0, 1, 1, 1], [0], [0]>} : vector<4x16x8xf32>, vector<4x16x8xf32>, vector<4x16x16xf32> -> vector<4x16x16xf32>
    "tpu.trace_stop"() : () -> ()
    %cst_32 = arith.constant dense<0xFF800000> : vector<4x16xf32>
    %50 = vector.multi_reduction <maximumf>, %49, %cst_32 [2] : vector<4x16x16xf32> to vector<4x16xf32>
    %51 = vector.shape_cast %50 : vector<4x16xf32> to vector<4x16x1xf32>
    %52 = vector.broadcast %51 : vector<4x16x1xf32> to vector<4x16x16xf32>
    %53 = arith.subf %49, %52 : vector<4x16x16xf32>
    %54 = math.exp %53 : vector<4x16x16xf32>
    %cst_33 = arith.constant dense<0.000000e+00> : vector<4x16xf32>
    %55 = vector.multi_reduction <add>, %54, %cst_33 [2] : vector<4x16x16xf32> to vector<4x16xf32>
    %56 = vector.shape_cast %55 : vector<4x16xf32> to vector<4x16x1xf32>
    %57 = tpu.reciprocal %56 {approx = true} : vector<4x16x1xf32> -> vector<4x16x1xf32>
    %58 = vector.broadcast %57 : vector<4x16x1xf32> to vector<4x16x16xf32>
    %59 = arith.mulf %54, %58 : vector<4x16x16xf32>
    "tpu.trace_start"() <{level = 10 : i32, message = "bqk,bkd->bqd"}> : () -> ()
    %cst_34 = arith.constant dense<0.000000e+00> : vector<4x16x8xf32>
    %60 = tpu.matmul %59, %48, %cst_34 {dimension_numbers = #tpu.dot_dimension_numbers<[2], [1], [1], [2], [0, 0, 0, 1, 1, 2], [0], [0]>} : vector<4x16x16xf32>, vector<4x16x8xf32>, vector<4x16x8xf32> -> vector<4x16x8xf32>
    "tpu.trace_stop"() : () -> ()
    %61 = vector.shape_cast %60 : vector<4x16x8xf32> to vector<64x8xf32>
    %c8 = arith.constant 8 : index
    %c0_35 = arith.constant 0 : index
    %62 = vector.load %arg10[%c8, %c0_35] : memref<32x32xf32, #tpu.memory_space<vmem>>, vector<8x32xf32>
    %cst_36 = arith.constant dense<0.000000e+00> : vector<64x32xf32>
    %63 = tpu.matmul %61, %62, %cst_36 {dimension_numbers = #tpu.dot_dimension_numbers<[1], [0], [0], [1], [0, 0, 1, 1], [], []>} : vector<64x8xf32>, vector<8x32xf32>, vector<64x32xf32> -> vector<64x32xf32>
    %64 = arith.addf %45, %63 : vector<64x32xf32>
    %65 = vector.extract_strided_slice %11 {offsets = [0, 0, 16], sizes = [4, 16, 8], strides = [1, 1, 1]} : vector<4x16x32xf32> to vector<4x16x8xf32>
    %66 = vector.extract_strided_slice %17 {offsets = [0, 0, 16], sizes = [4, 16, 8], strides = [1, 1, 1]} : vector<4x16x32xf32> to vector<4x16x8xf32>
    %67 = vector.extract_strided_slice %23 {offsets = [0, 0, 16], sizes = [4, 16, 8], strides = [1, 1, 1]} : vector<4x16x32xf32> to vector<4x16x8xf32>
    "tpu.trace_start"() <{level = 10 : i32, message = "bqd,bkd->bqk"}> : () -> ()
    %cst_37 = arith.constant dense<0.000000e+00> : vector<4x16x16xf32>
    %68 = tpu.matmul %65, %66, %cst_37 {dimension_numbers = #tpu.dot_dimension_numbers<[2], [2], [1], [1], [0, 0, 0, 1, 1, 1], [0], [0]>} : vector<4x16x8xf32>, vector<4x16x8xf32>, vector<4x16x16xf32> -> vector<4x16x16xf32>
    "tpu.trace_stop"() : () -> ()
    %cst_38 = arith.constant dense<0xFF800000> : vector<4x16xf32>
    %69 = vector.multi_reduction <maximumf>, %68, %cst_38 [2] : vector<4x16x16xf32> to vector<4x16xf32>
    %70 = vector.shape_cast %69 : vector<4x16xf32> to vector<4x16x1xf32>
    %71 = vector.broadcast %70 : vector<4x16x1xf32> to vector<4x16x16xf32>
    %72 = arith.subf %68, %71 : vector<4x16x16xf32>
    %73 = math.exp %72 : vector<4x16x16xf32>
    %cst_39 = arith.constant dense<0.000000e+00> : vector<4x16xf32>
    %74 = vector.multi_reduction <add>, %73, %cst_39 [2] : vector<4x16x16xf32> to vector<4x16xf32>
    %75 = vector.shape_cast %74 : vector<4x16xf32> to vector<4x16x1xf32>
    %76 = tpu.reciprocal %75 {approx = true} : vector<4x16x1xf32> -> vector<4x16x1xf32>
    %77 = vector.broadcast %76 : vector<4x16x1xf32> to vector<4x16x16xf32>
    %78 = arith.mulf %73, %77 : vector<4x16x16xf32>
    "tpu.trace_start"() <{level = 10 : i32, message = "bqk,bkd->bqd"}> : () -> ()
    %cst_40 = arith.constant dense<0.000000e+00> : vector<4x16x8xf32>
    %79 = tpu.matmul %78, %67, %cst_40 {dimension_numbers = #tpu.dot_dimension_numbers<[2], [1], [1], [2], [0, 0, 0, 1, 1, 2], [0], [0]>} : vector<4x16x16xf32>, vector<4x16x8xf32>, vector<4x16x8xf32> -> vector<4x16x8xf32>
    "tpu.trace_stop"() : () -> ()
    %80 = vector.shape_cast %79 : vector<4x16x8xf32> to vector<64x8xf32>
    %c16 = arith.constant 16 : index
    %c0_41 = arith.constant 0 : index
    %81 = vector.load %arg10[%c16, %c0_41] : memref<32x32xf32, #tpu.memory_space<vmem>>, vector<8x32xf32>
    %cst_42 = arith.constant dense<0.000000e+00> : vector<64x32xf32>
    %82 = tpu.matmul %80, %81, %cst_42 {dimension_numbers = #tpu.dot_dimension_numbers<[1], [0], [0], [1], [0, 0, 1, 1], [], []>} : vector<64x8xf32>, vector<8x32xf32>, vector<64x32xf32> -> vector<64x32xf32>
    %83 = arith.addf %64, %82 : vector<64x32xf32>
    %84 = vector.extract_strided_slice %11 {offsets = [0, 0, 24], sizes = [4, 16, 8], strides = [1, 1, 1]} : vector<4x16x32xf32> to vector<4x16x8xf32>
    %85 = vector.extract_strided_slice %17 {offsets = [0, 0, 24], sizes = [4, 16, 8], strides = [1, 1, 1]} : vector<4x16x32xf32> to vector<4x16x8xf32>
    %86 = vector.extract_strided_slice %23 {offsets = [0, 0, 24], sizes = [4, 16, 8], strides = [1, 1, 1]} : vector<4x16x32xf32> to vector<4x16x8xf32>
    "tpu.trace_start"() <{level = 10 : i32, message = "bqd,bkd->bqk"}> : () -> ()
    %cst_43 = arith.constant dense<0.000000e+00> : vector<4x16x16xf32>
    %87 = tpu.matmul %84, %85, %cst_43 {dimension_numbers = #tpu.dot_dimension_numbers<[2], [2], [1], [1], [0, 0, 0, 1, 1, 1], [0], [0]>} : vector<4x16x8xf32>, vector<4x16x8xf32>, vector<4x16x16xf32> -> vector<4x16x16xf32>
    "tpu.trace_stop"() : () -> ()
    %cst_44 = arith.constant dense<0xFF800000> : vector<4x16xf32>
    %88 = vector.multi_reduction <maximumf>, %87, %cst_44 [2] : vector<4x16x16xf32> to vector<4x16xf32>
    %89 = vector.shape_cast %88 : vector<4x16xf32> to vector<4x16x1xf32>
    %90 = vector.broadcast %89 : vector<4x16x1xf32> to vector<4x16x16xf32>
    %91 = arith.subf %87, %90 : vector<4x16x16xf32>
    %92 = math.exp %91 : vector<4x16x16xf32>
    %cst_45 = arith.constant dense<0.000000e+00> : vector<4x16xf32>
    %93 = vector.multi_reduction <add>, %92, %cst_45 [2] : vector<4x16x16xf32> to vector<4x16xf32>
    %94 = vector.shape_cast %93 : vector<4x16xf32> to vector<4x16x1xf32>
    %95 = tpu.reciprocal %94 {approx = true} : vector<4x16x1xf32> -> vector<4x16x1xf32>
    %96 = vector.broadcast %95 : vector<4x16x1xf32> to vector<4x16x16xf32>
    %97 = arith.mulf %92, %96 : vector<4x16x16xf32>
    "tpu.trace_start"() <{level = 10 : i32, message = "bqk,bkd->bqd"}> : () -> ()
    %cst_46 = arith.constant dense<0.000000e+00> : vector<4x16x8xf32>
    %98 = tpu.matmul %97, %86, %cst_46 {dimension_numbers = #tpu.dot_dimension_numbers<[2], [1], [1], [2], [0, 0, 0, 1, 1, 2], [0], [0]>} : vector<4x16x16xf32>, vector<4x16x8xf32>, vector<4x16x8xf32> -> vector<4x16x8xf32>
    "tpu.trace_stop"() : () -> ()
    %99 = vector.shape_cast %98 : vector<4x16x8xf32> to vector<64x8xf32>
    %c24 = arith.constant 24 : index
    %c0_47 = arith.constant 0 : index
    %100 = vector.load %arg10[%c24, %c0_47] : memref<32x32xf32, #tpu.memory_space<vmem>>, vector<8x32xf32>
    %cst_48 = arith.constant dense<0.000000e+00> : vector<64x32xf32>
    %101 = tpu.matmul %99, %100, %cst_48 {dimension_numbers = #tpu.dot_dimension_numbers<[1], [0], [0], [1], [0, 0, 1, 1], [], []>} : vector<64x8xf32>, vector<8x32xf32>, vector<64x32xf32> -> vector<64x32xf32>
    %102 = arith.addf %83, %101 : vector<64x32xf32>
    %103 = vector.shape_cast %102 : vector<64x32xf32> to vector<4x16x32xf32>
    %c0_49 = arith.constant 0 : index
    %c0_50 = arith.constant 0 : index
    %c0_51 = arith.constant 0 : index
    %104 = vector.load %arg12[%c0_49, %c0_50, %c0_51] : memref<4x16x32xf32, #tpu.memory_space<vmem>>, vector<4x16x32xf32>
    tpu.vector_store %arg12[%c0_49, %c0_50, %c0_51], %103 {strides = array<i32>} : memref<4x16x32xf32, #tpu.memory_space<vmem>>, vector<4x16x32xf32>,
    return
  }
  func.func @transform_0(%arg0: i32) -> (i32, i32, i32) {
    %c0_i32 = arith.constant 0 : i32
    %c0_i32_0 = arith.constant 0 : i32
    %c0_i32_1 = arith.constant 0 : i32
    return %arg0, %c0_i32, %c0_i32_0 : i32, i32, i32
  }
  func.func @transform_1(%arg0: i32) -> (i32, i32, i32) {
    %c0_i32 = arith.constant 0 : i32
    %c0_i32_0 = arith.constant 0 : i32
    %c0_i32_1 = arith.constant 0 : i32
    return %arg0, %c0_i32, %c0_i32_0 : i32, i32, i32
  }
  func.func @transform_2(%arg0: i32) -> (i32, i32, i32) {
    %c0_i32 = arith.constant 0 : i32
    %c0_i32_0 = arith.constant 0 : i32
    %c0_i32_1 = arith.constant 0 : i32
    return %arg0, %c0_i32, %c0_i32_0 : i32, i32, i32
  }
  func.func @transform_3(%arg0: i32) -> (i32, i32) {
    %c0_i32 = arith.constant 0 : i32
    %c0_i32_0 = arith.constant 0 : i32
    %c0_i32_1 = arith.constant 0 : i32
    return %c0_i32, %c0_i32_0 : i32, i32
  }
  func.func @transform_4(%arg0: i32) -> (i32, i32) {
    %c0_i32 = arith.constant 0 : i32
    %c0_i32_0 = arith.constant 0 : i32
    %c0_i32_1 = arith.constant 0 : i32
    return %c0_i32, %c0_i32_0 : i32, i32
  }
  func.func @transform_5(%arg0: i32) -> (i32, i32) {
    %c0_i32 = arith.constant 0 : i32
    %c0_i32_0 = arith.constant 0 : i32
    %c0_i32_1 = arith.constant 0 : i32
    return %c0_i32, %c0_i32_0 : i32, i32
  }
  func.func @transform_6(%arg0: i32) -> (i32, i32) {
    %c0_i32 = arith.constant 0 : i32
    %c0_i32_0 = arith.constant 0 : i32
    %c0_i32_1 = arith.constant 0 : i32
    return %c0_i32, %c0_i32_0 : i32, i32
  }
  func.func @transform_7(%arg0: i32) -> (i32, i32) {
    %c0_i32 = arith.constant 0 : i32
    %c0_i32_0 = arith.constant 0 : i32
    %c0_i32_1 = arith.constant 0 : i32
    return %c0_i32, %c0_i32_0 : i32, i32
  }
  func.func @transform_8(%arg0: i32) -> (i32, i32) {
    %c0_i32 = arith.constant 0 : i32
    %c0_i32_0 = arith.constant 0 : i32
    %c0_i32_1 = arith.constant 0 : i32
    return %c0_i32, %c0_i32_0 : i32, i32
  }
  func.func @transform_9(%arg0: i32) -> (i32, i32) {
    %c0_i32 = arith.constant 0 : i32
    %c0_i32_0 = arith.constant 0 : i32
    %c0_i32_1 = arith.constant 0 : i32
    return %c0_i32, %c0_i32_0 : i32, i32
  }
  func.func @transform_10(%arg0: i32) -> (i32, i32) {
    %c0_i32 = arith.constant 0 : i32
    %c0_i32_0 = arith.constant 0 : i32
    %c0_i32_1 = arith.constant 0 : i32
    return %c0_i32, %c0_i32_0 : i32, i32
  }
  func.func @transform_11(%arg0: i32) -> (i32, i32, i32) {
    %c0_i32 = arith.constant 0 : i32
    %c0_i32_0 = arith.constant 0 : i32
    %c0_i32_1 = arith.constant 0 : i32
    return %arg0, %c0_i32, %c0_i32_0 : i32, i32, i32
  }
}

</mosaic_0001>

<llo_original>
// kernel: tpu_custom_call.1
$region0: #{tpu_custom_call.1}
  #allocation0 [shape = 'u32[]', space=smem, size = 0x4, offset = 0x4, fixed_abs, tag = 'smem constant byte address 0x4 - core index']
  #allocation1 [shape = 'u32[144,128]{1,0:T(1,128)}', space=vmem, size = 0x12000, scoped, tag = 'internal scratch']
  %s0 = inlined_call_operand.hbm [shape: f32[8,16,32], index: 0, kind: input, shape index: {}]
  %s1 = inlined_call_operand.hbm [shape: f32[8,16,32], index: 1, kind: input, shape index: {}]
  %s2 = inlined_call_operand.hbm [shape: f32[8,16,32], index: 2, kind: input, shape index: {}]
  %s3 = inlined_call_operand.hbm [shape: f32[32,32], index: 3, kind: input, shape index: {}]
  %s4 = inlined_call_operand.vmem [shape: f32[1,32], index: 4, kind: input, shape index: {}]
  %s5 = inlined_call_operand.hbm [shape: f32[32,32], index: 5, kind: input, shape index: {}]
  %s6 = inlined_call_operand.vmem [shape: f32[1,32], index: 6, kind: input, shape index: {}]
  %s7 = inlined_call_operand.hbm [shape: f32[32,32], index: 7, kind: input, shape index: {}]
  %s8 = inlined_call_operand.hbm [shape: f32[1,32], index: 8, kind: input, shape index: {}]
  %s9 = inlined_call_operand.vmem [shape: f32[32,32], index: 9, kind: input, shape index: {}]
  %s10 = inlined_call_operand.vmem [shape: f32[1,32], index: 10, kind: input, shape index: {}]
  %s11 = inlined_call_operand.hbm [shape: f32[8,16,32], index: 11, kind: output, shape index: {}]
  %s12 = sld [smem:[#allocation0]]
  $region105: #{tpu_custom_call.1} parent=0
    _
  %s14 = ssub.s32 1, %s12
  %s15 = scalar_select 0, %s14, %s12
  $region1: #{tpu_custom_call.1} parent=0
    #allocation2 [shape = 'u8[65536]{0}', space=vmem, size = 0x10000, scoped, tag = 'input window, operand 0']
    #allocation3 [shape = 's32[2]{0}', space=sflag, size = 0x8, scoped, tag = 'scoped memory for tpu_custom_call.1']
    #allocation4 [shape = 's32[2]{0}', space=sflag, size = 0x8, scoped, tag = 'scoped memory for tpu_custom_call.1']
    #allocation5 [shape = 'u8[65536]{0}', space=vmem, size = 0x10000, scoped, tag = 'input window, operand 1']
    #allocation6 [shape = 's32[2]{0}', space=sflag, size = 0x8, scoped, tag = 'scoped memory for tpu_custom_call.1']
    #allocation7 [shape = 'u8[65536]{0}', space=vmem, size = 0x10000, scoped, tag = 'input window, operand 2']
    #allocation8 [shape = 'u8[16384]{0}', space=vmem, size = 0x4000, scoped, tag = 'input window, operand 3, single buffered']
    #allocation9 [shape = 's32[1]{0}', space=sflag, size = 0x4, scoped, tag = 'scoped memory for tpu_custom_call.1']
    #allocation10 [shape = 'u8[16384]{0}', space=vmem, size = 0x4000, scoped, tag = 'input window, operand 5, single buffered']
    #allocation11 [shape = 'u8[16384]{0}', space=vmem, size = 0x4000, scoped, tag = 'input window, operand 7, single buffered']
    #allocation12 [shape = 's32[1]{0}', space=sflag, size = 0x4, scoped, tag = 'scoped memory for tpu_custom_call.1']
    #allocation13 [shape = 'u8[512]{0}', space=vmem, size = 0x400, scoped, tag = 'input window, operand 8, single buffered']
    #allocation14 [shape = 'u8[65536]{0}', space=vmem, size = 0x10000, scoped, tag = 'output window, operand 0']
    %16 = vsyncpa [#allocation3], 0
    %s17 = scalar_lea.sflag [#allocation3], 1
    %18 = vsyncpa %s17, 0
    %19 = vsyncpa [#allocation6], 0
    %s20 = scalar_lea.sflag [#allocation6], 1
    %21 = vsyncpa %s20, 0
    %22 = vsyncpa [#allocation9], 0
    %23 = vsyncpa [#allocation12], 0
    %24 = vsyncpa [#allocation4], 0
    %s25 = scalar_lea.sflag [#allocation4], 1
    %26 = vsyncpa %s25, 0
    loop: start=0, step=1, limit=4
    $region2: #{tpu_custom_call.1} parent=1 // loop_pre_header
      _
    $region3: #{tpu_custom_call.1} parent=1 // loop_header
      %s28 = sphi 0, %s32
      %p29 = scmp.ge.s32.totalorder %s28, 4
      %s38 = sphi 0, %s40
      %s41 = sphi 0, %s38
      %s42 = sphi 0, %s41
      %s58 = sphi 0, %s42
      %s64 = sphi 0, %s66
      %s67 = sphi 0, %s64
      %s68 = sphi 0, %s67
      %s84 = sphi 0, %s68
      %s90 = sphi 0, %s92
      %s93 = sphi 0, %s90
      %s94 = sphi 0, %s93
      %s110 = sphi 0, %s94
      %s114 = sphi 0, %s114
      %s116 = sphi 0, %s114
      %s117 = sphi 0, %s116
      %s131 = sphi 0, %s117
      %s135 = sphi 0, %s135
      %s137 = sphi 0, %s135
      %s138 = sphi 0, %s137
      %s152 = sphi 0, %s138
      %s156 = sphi 0, %s156
      %s158 = sphi 0, %s156
      %s159 = sphi 0, %s158
      %s173 = sphi 0, %s159
      %s177 = sphi 0, %s177
      %s179 = sphi 0, %s177
      %s180 = sphi 0, %s179
      %s194 = sphi 0, %s180
      %s198 = sphi 0, %s198
      %s200 = sphi 0, %s198
      %s201 = sphi 0, %s200
      %s215 = sphi 0, %s201
      %s219 = sphi 0, %s219
      %s221 = sphi 0, %s219
      %s222 = sphi 0, %s221
      %s236 = sphi 0, %s222
      %s240 = sphi 0, %s240
      %s242 = sphi 0, %s240
      %s243 = sphi 0, %s242
      %s257 = sphi 0, %s243
      %s261 = sphi 0, %s261
      %s263 = sphi 0, %s261
      %s264 = sphi 0, %s263
      %s278 = sphi 0, %s264
      %s284 = sphi 0, %s286
      %s287 = sphi 0, %s284
      %s288 = sphi 0, %s287
      %s304 = sphi 0, %s288
    $region4: #{tpu_custom_call.1} parent=1 // loop_header_branch
      %31 = sbr.rel (%p29) target = $region8
    $region5: #{tpu_custom_call.1} parent=1 // loop_body
      %s33 = ssub.s32 %s28, 1
      %s34 = ssub.s32 %s28, 2
      %s35 = sadd.s32 %s28, 1
      %s36 = ssub.s32 %s28, %s35
      %p37 = scmp.eq.s32.totalorder %s36, 0
      %s39 = sadd.s32 %s38, 1
      %s40 = scalar_select %p37, %s38, %s39
      %p43 = pneg %p37
      %p44 = scmp.eq.s32.totalorder %s28, 1
      %p45 = por %p43, %p44
      %p46 = scmp.ne.s32.totalorder %s38, %s41
      %p47 = scmp.eq.s32.totalorder %s28, 0
      %p48 = por %p46, %p47
      %p49 = scmp.ne.s32.totalorder %s38, %s41
      %p50 = scmp.eq.s32.totalorder %s33, 1
      %p51 = por %p49, %p50
      %p52 = scmp.ne.s32.totalorder %s41, %s42
      %p53 = scmp.eq.s32.totalorder %s33, 0
      %p54 = por %p52, %p53
      %p55 = scmp.ne.s32.totalorder %s41, %s42
      %p56 = scmp.eq.s32.totalorder %s34, 1
      %p57 = por %p55, %p56
      %p59 = scmp.ne.s32.totalorder %s42, %s58
      %p60 = scmp.eq.s32.totalorder %s34, 0
      %p61 = por %p59, %p60
      %s62 = ssub.s32 %s28, %s35
      %p63 = scmp.eq.s32.totalorder %s62, 0
      %s65 = sadd.s32 %s64, 1
      %s66 = scalar_select %p63, %s64, %s65
      %p69 = pneg %p63
      %p70 = scmp.eq.s32.totalorder %s28, 1
      %p71 = por %p69, %p70
      %p72 = scmp.ne.s32.totalorder %s64, %s67
      %p73 = scmp.eq.s32.totalorder %s28, 0
      %p74 = por %p72, %p73
      %p75 = scmp.ne.s32.totalorder %s64, %s67
      %p76 = scmp.eq.s32.totalorder %s33, 1
      %p77 = por %p75, %p76
      %p78 = scmp.ne.s32.totalorder %s67, %s68
      %p79 = scmp.eq.s32.totalorder %s33, 0
      %p80 = por %p78, %p79
      %p81 = scmp.ne.s32.totalorder %s67, %s68
      %p82 = scmp.eq.s32.totalorder %s34, 1
      %p83 = por %p81, %p82
      %p85 = scmp.ne.s32.totalorder %s68, %s84
      %p86 = scmp.eq.s32.totalorder %s34, 0
      %p87 = por %p85, %p86
      %s88 = ssub.s32 %s28, %s35
      %p89 = scmp.eq.s32.totalorder %s88, 0
      %s91 = sadd.s32 %s90, 1
      %s92 = scalar_select %p89, %s90, %s91
      %p95 = pneg %p89
      %p96 = scmp.eq.s32.totalorder %s28, 1
      %p97 = por %p95, %p96
      %p98 = scmp.ne.s32.totalorder %s90, %s93
      %p99 = scmp.eq.s32.totalorder %s28, 0
      %p100 = por %p98, %p99
      %p101 = scmp.ne.s32.totalorder %s90, %s93
      %p102 = scmp.eq.s32.totalorder %s33, 1
      %p103 = por %p101, %p102
      %p104 = scmp.ne.s32.totalorder %s93, %s94
      %p105 = scmp.eq.s32.totalorder %s33, 0
      %p106 = por %p104, %p105
      %p107 = scmp.ne.s32.totalorder %s93, %s94
      %p108 = scmp.eq.s32.totalorder %s34, 1
      %p109 = por %p107, %p108
      %p111 = scmp.ne.s32.totalorder %s94, %s110
      %p112 = scmp.eq.s32.totalorder %s34, 0
      %p113 = por %p111, %p112
      %s115 = sadd.s32 %s114, 1
      %p118 = scmp.eq.s32.totalorder %s28, 1
      %p119 = scmp.ne.s32.totalorder %s114, %s116
      %p120 = scmp.eq.s32.totalorder %s28, 0
      %p121 = por %p119, %p120
      %p122 = scmp.ne.s32.totalorder %s114, %s116
      %p123 = scmp.eq.s32.totalorder %s33, 1
      %p124 = por %p122, %p123
      %p125 = scmp.ne.s32.totalorder %s116, %s117
      %p126 = scmp.eq.s32.totalorder %s33, 0
      %p127 = por %p125, %p126
      %p128 = scmp.ne.s32.totalorder %s116, %s117
      %p129 = scmp.eq.s32.totalorder %s34, 1
      %p130 = por %p128, %p129
      %p132 = scmp.ne.s32.totalorder %s117, %s131
      %p133 = scmp.eq.s32.totalorder %s34, 0
      %p134 = por %p132, %p133
      %s136 = sadd.s32 %s135, 1
      %p139 = scmp.eq.s32.totalorder %s28, 1
      %p140 = scmp.ne.s32.totalorder %s135, %s137
      %p141 = scmp.eq.s32.totalorder %s28, 0
      %p142 = por %p140, %p141
      %p143 = scmp.ne.s32.totalorder %s135, %s137
      %p144 = scmp.eq.s32.totalorder %s33, 1
      %p145 = por %p143, %p144
      %p146 = scmp.ne.s32.totalorder %s137, %s138
      %p147 = scmp.eq.s32.totalorder %s33, 0
      %p148 = por %p146, %p147
      %p149 = scmp.ne.s32.totalorder %s137, %s138
      %p150 = scmp.eq.s32.totalorder %s34, 1
      %p151 = por %p149, %p150
      %p153 = scmp.ne.s32.totalorder %s138, %s152
      %p154 = scmp.eq.s32.totalorder %s34, 0
      %p155 = por %p153, %p154
      %s157 = sadd.s32 %s156, 1
      %p160 = scmp.eq.s32.totalorder %s28, 1
      %p161 = scmp.ne.s32.totalorder %s156, %s158
      %p162 = scmp.eq.s32.totalorder %s28, 0
      %p163 = por %p161, %p162
      %p164 = scmp.ne.s32.totalorder %s156, %s158
      %p165 = scmp.eq.s32.totalorder %s33, 1
      %p166 = por %p164, %p165
      %p167 = scmp.ne.s32.totalorder %s158, %s159
      %p168 = scmp.eq.s32.totalorder %s33, 0
      %p169 = por %p167, %p168
      %p170 = scmp.ne.s32.totalorder %s158, %s159
      %p171 = scmp.eq.s32.totalorder %s34, 1
      %p172 = por %p170, %p171
      %p174 = scmp.ne.s32.totalorder %s159, %s173
      %p175 = scmp.eq.s32.totalorder %s34, 0
      %p176 = por %p174, %p175
      %s178 = sadd.s32 %s177, 1
      %p181 = scmp.eq.s32.totalorder %s28, 1
      %p182 = scmp.ne.s32.totalorder %s177, %s179
      %p183 = scmp.eq.s32.totalorder %s28, 0
      %p184 = por %p182, %p183
      %p185 = scmp.ne.s32.totalorder %s177, %s179
      %p186 = scmp.eq.s32.totalorder %s33, 1
      %p187 = por %p185, %p186
      %p188 = scmp.ne.s32.totalorder %s179, %s180
      %p189 = scmp.eq.s32.totalorder %s33, 0
      %p190 = por %p188, %p189
      %p191 = scmp.ne.s32.totalorder %s179, %s180
      %p192 = scmp.eq.s32.totalorder %s34, 1
      %p193 = por %p191, %p192
      %p195 = scmp.ne.s32.totalorder %s180, %s194
      %p196 = scmp.eq.s32.totalorder %s34, 0
      %p197 = por %p195, %p196
      %s199 = sadd.s32 %s198, 1
      %p202 = scmp.eq.s32.totalorder %s28, 1
      %p203 = scmp.ne.s32.totalorder %s198, %s200
      %p204 = scmp.eq.s32.totalorder %s28, 0
      %p205 = por %p203, %p204
      %p206 = scmp.ne.s32.totalorder %s198, %s200
      %p207 = scmp.eq.s32.totalorder %s33, 1
      %p208 = por %p206, %p207
      %p209 = scmp.ne.s32.totalorder %s200, %s201
      %p210 = scmp.eq.s32.totalorder %s33, 0
      %p211 = por %p209, %p210
      %p212 = scmp.ne.s32.totalorder %s200, %s201
      %p213 = scmp.eq.s32.totalorder %s34, 1
      %p214 = por %p212, %p213
      %p216 = scmp.ne.s32.totalorder %s201, %s215
      %p217 = scmp.eq.s32.totalorder %s34, 0
      %p218 = por %p216, %p217
      %s220 = sadd.s32 %s219, 1
      %p223 = scmp.eq.s32.totalorder %s28, 1
      %p224 = scmp.ne.s32.totalorder %s219, %s221
      %p225 = scmp.eq.s32.totalorder %s28, 0
      %p226 = por %p224, %p225
      %p227 = scmp.ne.s32.totalorder %s219, %s221
      %p228 = scmp.eq.s32.totalorder %s33, 1
      %p229 = por %p227, %p228
      %p230 = scmp.ne.s32.totalorder %s221, %s222
      %p231 = scmp.eq.s32.totalorder %s33, 0
      %p232 = por %p230, %p231
      %p233 = scmp.ne.s32.totalorder %s221, %s222
      %p234 = scmp.eq.s32.totalorder %s34, 1
      %p235 = por %p233, %p234
      %p237 = scmp.ne.s32.totalorder %s222, %s236
      %p238 = scmp.eq.s32.totalorder %s34, 0
      %p239 = por %p237, %p238
      %s241 = sadd.s32 %s240, 1
      %p244 = scmp.eq.s32.totalorder %s28, 1
      %p245 = scmp.ne.s32.totalorder %s240, %s242
      %p246 = scmp.eq.s32.totalorder %s28, 0
      %p247 = por %p245, %p246
      %p248 = scmp.ne.s32.totalorder %s240, %s242
      %p249 = scmp.eq.s32.totalorder %s33, 1
      %p250 = por %p248, %p249
      %p251 = scmp.ne.s32.totalorder %s242, %s243
      %p252 = scmp.eq.s32.totalorder %s33, 0
      %p253 = por %p251, %p252
      %p254 = scmp.ne.s32.totalorder %s242, %s243
      %p255 = scmp.eq.s32.totalorder %s34, 1
      %p256 = por %p254, %p255
      %p258 = scmp.ne.s32.totalorder %s243, %s257
      %p259 = scmp.eq.s32.totalorder %s34, 0
      %p260 = por %p258, %p259
      %s262 = sadd.s32 %s261, 1
      %p265 = scmp.eq.s32.totalorder %s28, 1
      %p266 = scmp.ne.s32.totalorder %s261, %s263
      %p267 = scmp.eq.s32.totalorder %s28, 0
      %p268 = por %p266, %p267
      %p269 = scmp.ne.s32.totalorder %s261, %s263
      %p270 = scmp.eq.s32.totalorder %s33, 1
      %p271 = por %p269, %p270
      %p272 = scmp.ne.s32.totalorder %s263, %s264
      %p273 = scmp.eq.s32.totalorder %s33, 0
      %p274 = por %p272, %p273
      %p275 = scmp.ne.s32.totalorder %s263, %s264
      %p276 = scmp.eq.s32.totalorder %s34, 1
      %p277 = por %p275, %p276
      %p279 = scmp.ne.s32.totalorder %s264, %s278
      %p280 = scmp.eq.s32.totalorder %s34, 0
      %p281 = por %p279, %p280
      %s282 = ssub.s32 %s28, %s35
      %p283 = scmp.eq.s32.totalorder %s282, 0
      %s285 = sadd.s32 %s284, 1
      %s286 = scalar_select %p283, %s284, %s285
      %p289 = pneg %p283
      %p290 = scmp.eq.s32.totalorder %s28, 1
      %p291 = por %p289, %p290
      %p292 = scmp.ne.s32.totalorder %s284, %s287
      %p293 = scmp.eq.s32.totalorder %s28, 0
      %p294 = por %p292, %p293
      %p295 = scmp.ne.s32.totalorder %s284, %s287
      %p296 = scmp.eq.s32.totalorder %s33, 1
      %p297 = por %p295, %p296
      %p298 = scmp.ne.s32.totalorder %s287, %s288
      %p299 = scmp.eq.s32.totalorder %s33, 0
      %p300 = por %p298, %p299
      %p301 = scmp.ne.s32.totalorder %s287, %s288
      %p302 = scmp.eq.s32.totalorder %s34, 1
      %p303 = por %p301, %p302
      %p305 = scmp.ne.s32.totalorder %s288, %s304
      %p306 = scmp.eq.s32.totalorder %s34, 0
      %p307 = por %p305, %p306
      %p308 = scmp.le.s32.totalorder 1, %s28
      %p309 = scmp.lt.s32.totalorder %s28, 3
      %p310 = pnand %p308, %p309
      %p311 = pneg %p310
      // Predicated region
      $region9: #{tpu_custom_call.1} parent=5 // pred_check
        _
      $region10: #{tpu_custom_call.1} parent=5 // pred_check_branch
        %313 = sbr.rel (%p310) target = $region12
      $region11: #{tpu_custom_call.1} parent=5 // pred_region
        %s314 = ssub.s32 %s28, 1
        // Predicated region
        $region13: #{tpu_custom_call.1} parent=11 // pred_check
          %p315 = pneg %p127
        $region14: #{tpu_custom_call.1} parent=11 // pred_check_branch
          %317 = sbr.rel (%p315) target = $region16
        $region15: #{tpu_custom_call.1} parent=11 // pred_region
          %s319 = ssub.s32 512, 512
          %320 = vsyncadd [#allocation9], %s319
          %s321 = sshll.u32 [#allocation8], 4
          %s322 = int_to_ptr.vmem [resolvable:$true] %s321
          %327 = dma.hbm_to_vmem [thread:$0]  %s3, 512, %s322, [#allocation9], 128, 128, 8
        $region16: #{tpu_custom_call.1} parent=11 // pred_fallthru
          _
        // Predicated region
        $region17: #{tpu_custom_call.1} parent=11 // pred_check
          %p328 = pneg %p148
        $region18: #{tpu_custom_call.1} parent=11 // pred_check_branch
          %330 = sbr.rel (%p328) target = $region20
        $region19: #{tpu_custom_call.1} parent=11 // pred_region
          _
        $region20: #{tpu_custom_call.1} parent=11 // pred_fallthru
          _
        // Predicated region
        $region21: #{tpu_custom_call.1} parent=11 // pred_check
          %p331 = pneg %p169
        $region22: #{tpu_custom_call.1} parent=11 // pred_check_branch
          %333 = sbr.rel (%p331) target = $region24
        $region23: #{tpu_custom_call.1} parent=11 // pred_region
          %s335 = ssub.s32 512, 512
          %336 = vsyncadd [#allocation9], %s335
          %s337 = sshll.u32 [#allocation10], 4
          %s338 = int_to_ptr.vmem [resolvable:$true] %s337
          %343 = dma.hbm_to_vmem [thread:$0]  %s5, 512, %s338, [#allocation9], 128, 128, 8
        $region24: #{tpu_custom_call.1} parent=11 // pred_fallthru
          _
        // Predicated region
        $region25: #{tpu_custom_call.1} parent=11 // pred_check
          %p344 = pneg %p190
        $region26: #{tpu_custom_call.1} parent=11 // pred_check_branch
          %346 = sbr.rel (%p344) target = $region28
        $region27: #{tpu_custom_call.1} parent=11 // pred_region
          _
        $region28: #{tpu_custom_call.1} parent=11 // pred_fallthru
          _
        // Predicated region
        $region29: #{tpu_custom_call.1} parent=11 // pred_check
          %p347 = pneg %p211
        $region30: #{tpu_custom_call.1} parent=11 // pred_check_branch
          %349 = sbr.rel (%p347) target = $region32
        $region31: #{tpu_custom_call.1} parent=11 // pred_region
          %s351 = ssub.s32 512, 512
          %352 = vsyncadd [#allocation12], %s351
          %s353 = sshll.u32 [#allocation11], 4
          %s354 = int_to_ptr.vmem [resolvable:$true] %s353
          %359 = dma.hbm_to_vmem [thread:$0]  %s7, 512, %s354, [#allocation12], 128, 128, 8
        $region32: #{tpu_custom_call.1} parent=11 // pred_fallthru
          _
        // Predicated region
        $region33: #{tpu_custom_call.1} parent=11 // pred_check
          %p360 = pneg %p232
        $region34: #{tpu_custom_call.1} parent=11 // pred_check_branch
          %362 = sbr.rel (%p360) target = $region36
        $region35: #{tpu_custom_call.1} parent=11 // pred_region
          %s364 = ssub.s32 16, 16
          %365 = vsyncadd [#allocation12], %s364
          %s367 = sshll.u32 [#allocation13], 4
          %s368 = int_to_ptr.vmem [resolvable:$true] %s367
          %370 = dma.hbm_to_vmem [thread:$0]  %s8, 16, %s368, [#allocation12]
        $region36: #{tpu_custom_call.1} parent=11 // pred_fallthru
          _
        // Predicated region
        $region37: #{tpu_custom_call.1} parent=11 // pred_check
          %p371 = pneg %p253
        $region38: #{tpu_custom_call.1} parent=11 // pred_check_branch
          %373 = sbr.rel (%p371) target = $region40
        $region39: #{tpu_custom_call.1} parent=11 // pred_region
          _
        $region40: #{tpu_custom_call.1} parent=11 // pred_fallthru
          _
        // Predicated region
        $region41: #{tpu_custom_call.1} parent=11 // pred_check
          %p374 = pneg %p274
        $region42: #{tpu_custom_call.1} parent=11 // pred_check_branch
          %376 = sbr.rel (%p374) target = $region44
        $region43: #{tpu_custom_call.1} parent=11 // pred_region
          _
        $region44: #{tpu_custom_call.1} parent=11 // pred_fallthru
          _
      $region12: #{tpu_custom_call.1} parent=5 // pred_fallthru
        _
      %p377 = scmp.lt.s32.totalorder %s28, 2
      // Predicated region
      $region45: #{tpu_custom_call.1} parent=5 // pred_check
        %p378 = pneg %p377
      $region46: #{tpu_custom_call.1} parent=5 // pred_check_branch
        %380 = sbr.rel (%p378) target = $region48
      $region47: #{tpu_custom_call.1} parent=5 // pred_region
        // Predicated region
        $region49: #{tpu_custom_call.1} parent=47 // pred_check
          %p381 = pneg %p48
        $region50: #{tpu_custom_call.1} parent=47 // pred_check_branch
          %383 = sbr.rel (%p381) target = $region52
        $region51: #{tpu_custom_call.1} parent=47 // pred_region
          %s384 = sand.u32 %s38, 1
          %s385 = scalar_lea.sflag [#allocation3], %s384
          %s386 = sand.u32 %s38, 1
          %s387 = smul.addr %s386, 64
          %s388 = scalar_lea.vmem [#allocation2], %s387
          %s389 = smul.u32 4, %s28
          %s391 = ssub.s32 1024, 1024
          %392 = vsyncadd %s385, %s391
          %s393 = smul.addr %s389, 2
          %s394 = smul.addr %s393, 128
          %s395 = scalar_lea.hbm %s0, %s394
          %s396 = sshll.u32 %s388, 4
          %s397 = int_to_ptr.vmem [resolvable:$true] %s396
          %402 = dma.hbm_to_vmem [thread:$0]  %s395, 1024, %s397, %s385, 128, 128, 8
        $region52: #{tpu_custom_call.1} parent=47 // pred_fallthru
          _
        // Predicated region
        $region53: #{tpu_custom_call.1} parent=47 // pred_check
          %p403 = pneg %p74
        $region54: #{tpu_custom_call.1} parent=47 // pred_check_branch
          %405 = sbr.rel (%p403) target = $region56
        $region55: #{tpu_custom_call.1} parent=47 // pred_region
          %s406 = sand.u32 %s28, 1
          %s407 = scalar_lea.sflag [#allocation6], %s406
          %s408 = sand.u32 %s64, 1
          %s409 = smul.addr %s408, 64
          %s410 = scalar_lea.vmem [#allocation5], %s409
          %s411 = smul.u32 4, %s28
          %s413 = ssub.s32 1024, 1024
          %414 = vsyncadd %s407, %s413
          %s415 = smul.addr %s411, 2
          %s416 = smul.addr %s415, 128
          %s417 = scalar_lea.hbm %s1, %s416
          %s418 = sshll.u32 %s410, 4
          %s419 = int_to_ptr.vmem [resolvable:$true] %s418
          %424 = dma.hbm_to_vmem [thread:$0]  %s417, 1024, %s419, %s407, 128, 128, 8
        $region56: #{tpu_custom_call.1} parent=47 // pred_fallthru
          _
        // Predicated region
        $region57: #{tpu_custom_call.1} parent=47 // pred_check
          %p425 = pneg %p100
        $region58: #{tpu_custom_call.1} parent=47 // pred_check_branch
          %427 = sbr.rel (%p425) target = $region60
        $region59: #{tpu_custom_call.1} parent=47 // pred_region
          %s428 = sand.u32 %s28, 1
          %s429 = scalar_lea.sflag [#allocation6], %s428
          %s430 = sand.u32 %s90, 1
          %s431 = smul.addr %s430, 64
          %s432 = scalar_lea.vmem [#allocation7], %s431
          %s433 = smul.u32 4, %s28
          %s435 = ssub.s32 1024, 1024
          %436 = vsyncadd %s429, %s435
          %s437 = smul.addr %s433, 2
          %s438 = smul.addr %s437, 128
          %s439 = scalar_lea.hbm %s2, %s438
          %s440 = sshll.u32 %s432, 4
          %s441 = int_to_ptr.vmem [resolvable:$true] %s440
          %446 = dma.hbm_to_vmem [thread:$0]  %s439, 1024, %s441, %s429, 128, 128, 8
        $region60: #{tpu_custom_call.1} parent=47 // pred_fallthru
          _
      $region48: #{tpu_custom_call.1} parent=5 // pred_fallthru
        _
      %p447 = scmp.le.s32.totalorder 1, %s28
      %p448 = scmp.lt.s32.totalorder %s28, 3
      %p449 = pnand %p447, %p448
      %p450 = pneg %p449
      // Predicated region
      $region61: #{tpu_custom_call.1} parent=5 // pred_check
        _
      $region62: #{tpu_custom_call.1} parent=5 // pred_check_branch
        %452 = sbr.rel (%p449) target = $region64
      $region63: #{tpu_custom_call.1} parent=5 // pred_region
        %s453 = ssub.s32 %s28, 1
        %s454 = sand.u32 %s41, 1
        %s455 = scalar_lea.sflag [#allocation3], %s454
        %s456 = sand.u32 %s41, 1
        %s457 = smul.addr %s456, 64
        %s458 = scalar_lea.vmem [#allocation2], %s457
        // Predicated region
        $region65: #{tpu_custom_call.1} parent=63 // pred_check
          %p459 = pneg %p54
        $region66: #{tpu_custom_call.1} parent=63 // pred_check_branch
          %461 = sbr.rel (%p459) target = $region68
        $region67: #{tpu_custom_call.1} parent=63 // pred_region
          %462 = dma.done %s455, 1024
        $region68: #{tpu_custom_call.1} parent=63 // pred_fallthru
          _
        %s463 = sand.u32 %s33, 1
        %s464 = scalar_lea.sflag [#allocation6], %s463
        %s465 = sand.u32 %s67, 1
        %s466 = smul.addr %s465, 64
        %s467 = scalar_lea.vmem [#allocation5], %s466
        // Predicated region
        $region69: #{tpu_custom_call.1} parent=63 // pred_check
          %p468 = pneg %p80
        $region70: #{tpu_custom_call.1} parent=63 // pred_check_branch
          %470 = sbr.rel (%p468) target = $region72
        $region71: #{tpu_custom_call.1} parent=63 // pred_region
          %471 = dma.done %s464, 1024
        $region72: #{tpu_custom_call.1} parent=63 // pred_fallthru
          _
        %s472 = sand.u32 %s33, 1
        %s473 = scalar_lea.sflag [#allocation6], %s472
        %s474 = sand.u32 %s93, 1
        %s475 = smul.addr %s474, 64
        %s476 = scalar_lea.vmem [#allocation7], %s475
        // Predicated region
        $region73: #{tpu_custom_call.1} parent=63 // pred_check
          %p477 = pneg %p106
        $region74: #{tpu_custom_call.1} parent=63 // pred_check_branch
          %479 = sbr.rel (%p477) target = $region76
        $region75: #{tpu_custom_call.1} parent=63 // pred_region
          %480 = dma.done %s473, 1024
        $region76: #{tpu_custom_call.1} parent=63 // pred_fallthru
          _
        // Predicated region
        $region77: #{tpu_custom_call.1} parent=63 // pred_check
          %p481 = pneg %p127
        $region78: #{tpu_custom_call.1} parent=63 // pred_check_branch
          %483 = sbr.rel (%p481) target = $region80
        $region79: #{tpu_custom_call.1} parent=63 // pred_region
          %484 = dma.done [#allocation9], 512
        $region80: #{tpu_custom_call.1} parent=63 // pred_fallthru
          _
        // Predicated region
        $region81: #{tpu_custom_call.1} parent=63 // pred_check
          %p485 = pneg %p169
        $region82: #{tpu_custom_call.1} parent=63 // pred_check_branch
          %487 = sbr.rel (%p485) target = $region84
        $region83: #{tpu_custom_call.1} parent=63 // pred_region
          %488 = dma.done [#allocation9], 512
        $region84: #{tpu_custom_call.1} parent=63 // pred_fallthru
          _
        // Predicated region
        $region85: #{tpu_custom_call.1} parent=63 // pred_check
          %p489 = pneg %p211
        $region86: #{tpu_custom_call.1} parent=63 // pred_check_branch
          %491 = sbr.rel (%p489) target = $region88
        $region87: #{tpu_custom_call.1} parent=63 // pred_region
          %492 = dma.done [#allocation12], 512
        $region88: #{tpu_custom_call.1} parent=63 // pred_fallthru
          _
        // Predicated region
        $region89: #{tpu_custom_call.1} parent=63 // pred_check
          %p493 = pneg %p232
        $region90: #{tpu_custom_call.1} parent=63 // pred_check_branch
          %495 = sbr.rel (%p493) target = $region92
        $region91: #{tpu_custom_call.1} parent=63 // pred_region
          %496 = dma.done [#allocation12], 16
        $region92: #{tpu_custom_call.1} parent=63 // pred_fallthru
          _
        %s497 = sand.u32 %s41, 1
        %s498 = scalar_lea.sflag [#allocation3], %s497
        %s499 = sand.u32 %s41, 1
        %s500 = smul.addr %s499, 64
        %s501 = scalar_lea.vmem [#allocation2], %s500
        %p502 = pneg %p54
        %p503 = pneg %p51
        %s504 = sand.u32 %s33, 1
        %s505 = scalar_lea.sflag [#allocation6], %s504
        %s506 = sand.u32 %s67, 1
        %s507 = smul.addr %s506, 64
        %s508 = scalar_lea.vmem [#allocation5], %s507
        %p509 = pneg %p80
        %p510 = pneg %p77
        %s511 = sand.u32 %s33, 1
        %s512 = scalar_lea.sflag [#allocation6], %s511
        %s513 = sand.u32 %s93, 1
        %s514 = smul.addr %s513, 64
        %s515 = scalar_lea.vmem [#allocation7], %s514
        %p516 = pneg %p106
        %p517 = pneg %p103
        %p518 = pneg %p127
        %p519 = pneg %p124
        %p520 = pneg %p148
        %p521 = pneg %p145
        %p522 = pneg %p169
        %p523 = pneg %p166
        %p524 = pneg %p190
        %p525 = pneg %p187
        %p526 = pneg %p211
        %p527 = pneg %p208
        %p528 = pneg %p232
        %p529 = pneg %p229
        %p530 = pneg %p253
        %p531 = pneg %p250
        %p532 = pneg %p274
        %p533 = pneg %p271
        %p534 = pneg %p300
        %p535 = pneg %p297
        %s536 = sand.u32 %s287, 1
        %s537 = scalar_lea.sflag [#allocation4], %s536
        %s538 = sand.u32 %s287, 1
        %s539 = smul.addr %s538, 64
        %s540 = scalar_lea.vmem [#allocation14], %s539
        %s541 = smul.u32 4, %s33
        %s542 = smul.u32 4, %s33
        %s543 = smul.u32 4, %s33
        %s544 = smul.u32 4, %s33
        %v545 = vld [vmem:[%s458] sm:$0xff]
        %v546 = vld [vmem:[%s458 + $0x8] sm:$0xff]
        %v547 = vld [vmem:[%s458 + $0x10] sm:$0xff]
        %v548 = vld [vmem:[%s458 + $0x18] sm:$0xff]
        %v549 = vld [vmem:[%s458 + $0x20] sm:$0xff]
        %v550 = vld [vmem:[%s458 + $0x28] sm:$0xff]
        %v551 = vld [vmem:[%s458 + $0x30] sm:$0xff]
        %v552 = vld [vmem:[%s458 + $0x38] sm:$0xff]
        %v553 = vld [vmem:[%s467] sm:$0xff]
        %v554 = vld [vmem:[%s467 + $0x8] sm:$0xff]
        %v555 = vld [vmem:[%s467 + $0x10] sm:$0xff]
        %v556 = vld [vmem:[%s467 + $0x18] sm:$0xff]
        %v557 = vld [vmem:[%s467 + $0x20] sm:$0xff]
        %v558 = vld [vmem:[%s467 + $0x28] sm:$0xff]
        %v559 = vld [vmem:[%s467 + $0x30] sm:$0xff]
        %v560 = vld [vmem:[%s467 + $0x38] sm:$0xff]
        %v561 = vld [vmem:[%s476] sm:$0xff]
        %v562 = vld [vmem:[%s476 + $0x8] sm:$0xff]
        %v563 = vld [vmem:[%s476 + $0x10] sm:$0xff]
        %v564 = vld [vmem:[%s476 + $0x18] sm:$0xff]
        %v565 = vld [vmem:[%s476 + $0x20] sm:$0xff]
        %v566 = vld [vmem:[%s476 + $0x28] sm:$0xff]
        %v567 = vld [vmem:[%s476 + $0x30] sm:$0xff]
        %v568 = vld [vmem:[%s476 + $0x38] sm:$0xff]
        %v569 = vld [vmem:[#allocation8] sm:$0xff]
        %v570 = vld [vmem:[#allocation8 + $0x8] sm:$0xff]
        %v571 = vld [vmem:[#allocation8 + $0x10] sm:$0xff]
        %v572 = vld [vmem:[#allocation8 + $0x18] sm:$0xff]
        %v573 = vld [vmem:[%s4] sm:$0x1]
        %v575 = vlaneseq
        %v576 = vshrl.u32 %v575, 7
        %v577 = vsub.s32 0, %v576
        %v578 = vrot.slane %v573, %v577
        %vm580 = vcmask 261120
        %v582 = vsel %vm580, %v545, 0
        %v585 = vsel %vm580, %v546, 0
        %v588 = vsel %vm580, %v547, 0
        %v591 = vsel %vm580, %v548, 0
        %v594 = vsel %vm580, %v549, 0
        %v597 = vsel %vm580, %v550, 0
        %v600 = vsel %vm580, %v551, 0
        %v603 = vsel %vm580, %v552, 0
        %605 = vmatprep.subr.mxu0 0.0
        %606 = vmatpush1.msra.mxu0 %v569
        %607 = vmatprep.subr.mxu0 0.0
        %608 = vmatpush1.msra.mxu0 %v570
        %609 = vmatprep.subr.mxu0 0.0
        %610 = vmatpush1.msra.mxu0 %v571
        %611 = vmatprep.subr.mxu0 0.0
        %612 = vmatpush1.msra.mxu0 %v572
        %613 = vmatprep.subr.mxu0 0.0
        %614 = vmatpush1.msra.mxu0 0.0
        %615 = vmatprep.subr.mxu0 0.0
        %616 = vmatpush1.msra.mxu0 0.0
        %617 = vmatprep.subr.mxu0 0.0
        %618 = vmatpush1.msra.mxu0 0.0
        %619 = vmatprep.subr.mxu0 0.0
        %620 = vmatpush1.msra.mxu0 0.0
        %621 = vmatprep.subr.mxu0 0.0
        %622 = vmatpush1.msra.mxu0 0.0
        %623 = vmatprep.subr.mxu0 0.0
        %624 = vmatpush1.msra.mxu0 0.0
        %625 = vmatprep.subr.mxu0 0.0
        %626 = vmatpush1.msra.mxu0 0.0
        %627 = vmatprep.subr.mxu0 0.0
        %628 = vmatpush1.msra.mxu0 0.0
        %629 = vmatprep.subr.mxu0 0.0
        %630 = vmatpush1.msra.mxu0 0.0
        %631 = vmatprep.subr.mxu0 0.0
        %632 = vmatpush1.msra.mxu0 0.0
        %633 = vmatprep.subr.mxu0 0.0
        %634 = vmatpush1.msra.mxu0 0.0
        %635 = vmatprep.subr.mxu0 0.0
        %636 = vmatpush1.msra.mxu0 0.0
        %637 = vmatprep.subr.mxu0 0.0
        %638 = vmatpush1.msra.mxu0 0.0
        %639 = vmatprep.subr.mxu0 0.0
        %640 = vmatpush1.msra.mxu0 0.0
        %641 = vmatprep.subr.mxu0 0.0
        %642 = vmatpush1.msra.mxu0 0.0
        %643 = vmatprep.subr.mxu0 0.0
        %644 = vmatpush1.msra.mxu0 0.0
        %645 = vmatprep.subr.mxu0 0.0
        %646 = vmatpush1.msra.mxu0 0.0
        %647 = vmatprep.subr.mxu0 0.0
        %648 = vmatpush1.msra.mxu0 0.0
        %649 = vmatprep.subr.mxu0 0.0
        %650 = vmatpush1.msra.mxu0 0.0
        %651 = vmatprep.subr.mxu0 0.0
        %652 = vmatpush1.msra.mxu0 0.0
        %653 = vmatprep.subr.mxu0 0.0
        %654 = vmatpush1.msra.mxu0 0.0
        %655 = vmatprep.subr.mxu0 0.0
        %656 = vmatpush1.msra.mxu0 0.0
        %657 = vmatprep.subr.mxu0 0.0
        %658 = vmatpush1.msra.mxu0 0.0
        %659 = vmatprep.subr.mxu0 0.0
        %660 = vmatpush1.msra.mxu0 0.0
        %661 = vmatprep.subr.mxu0 0.0
        %662 = vmatpush1.msra.mxu0 0.0
        %663 = vmatprep.subr.mxu0 0.0
        %664 = vmatpush1.msra.mxu0 0.0
        %665 = vmatprep.subr.mxu0 0.0
        %666 = vmatpush1.msra.mxu0 0.0
        %667 = vmatprep.subr.mxu0 0.0
        %668 = vmatpush1.msra.mxu0 0.0
        %669 = vmatprep.mubr.f32.mxu0 0.0
        %670 = vmatmul.mubr.f32.gmra.mrb[0].mxu0 %v582
        %v671 = vpop.f32.mrb[0].mxu0
        %v672 = vadd.f32 %v578, %v671
        %v673 = vpop.f32.mrb[0].mxu0
        %674 = vmatprep.mubr.f32.mxu0 0.0
        %675 = vmatmul.mubr.f32.gmra.mrb[0].mxu0 %v585
        %v676 = vpop.f32.mrb[0].mxu0
        %v677 = vadd.f32 %v578, %v676
        %v678 = vpop.f32.mrb[0].mxu0
        %679 = vmatprep.mubr.f32.mxu0 0.0
        %680 = vmatmul.mubr.f32.gmra.mrb[0].mxu0 %v588
        %v681 = vpop.f32.mrb[0].mxu0
        %v682 = vadd.f32 %v578, %v681
        %v683 = vpop.f32.mrb[0].mxu0
        %684 = vmatprep.mubr.f32.mxu0 0.0
        %685 = vmatmul.mubr.f32.gmra.mrb[0].mxu0 %v591
        %v686 = vpop.f32.mrb[0].mxu0
        %v687 = vadd.f32 %v578, %v686
        %v688 = vpop.f32.mrb[0].mxu0
        %689 = vmatprep.mubr.f32.mxu0 0.0
        %690 = vmatmul.mubr.f32.gmra.mrb[0].mxu0 %v594
        %v691 = vpop.f32.mrb[0].mxu0
        %v692 = vadd.f32 %v578, %v691
        %v693 = vpop.f32.mrb[0].mxu0
        %694 = vmatprep.mubr.f32.mxu0 0.0
        %695 = vmatmul.mubr.f32.gmra.mrb[0].mxu0 %v597
        %v696 = vpop.f32.mrb[0].mxu0
        %v697 = vadd.f32 %v578, %v696
        %v698 = vpop.f32.mrb[0].mxu0
        %699 = vmatprep.mubr.f32.mxu0 0.0
        %700 = vmatmul.mubr.f32.gmra.mrb[0].mxu0 %v600
        %v701 = vpop.f32.mrb[0].mxu0
        %v702 = vadd.f32 %v578, %v701
        %v703 = vpop.f32.mrb[0].mxu0
        %704 = vmatprep.mubr.f32.mxu0 0.0
        %705 = vmatmul.mubr.f32.gmra.mrb[0].mxu0 %v603
        %v706 = vpop.f32.mrb[0].mxu0
        %v707 = vadd.f32 %v578, %v706
        %v708 = vpop.f32.mrb[0].mxu0
        %709 = vdwg.mxu0
        %v710 = vld [vmem:[#allocation10] sm:$0xff]
        %v711 = vld [vmem:[#allocation10 + $0x8] sm:$0xff]
        %v712 = vld [vmem:[#allocation10 + $0x10] sm:$0xff]
        %v713 = vld [vmem:[#allocation10 + $0x18] sm:$0xff]
        %v714 = vld [vmem:[%s6] sm:$0x1]
        %v716 = vlaneseq
        %v717 = vshrl.u32 %v716, 7
        %v718 = vsub.s32 0, %v717
        %v719 = vrot.slane %v714, %v718
        %v722 = vsel %vm580, %v553, 0
        %v725 = vsel %vm580, %v554, 0
        %v728 = vsel %vm580, %v555, 0
        %v731 = vsel %vm580, %v556, 0
        %v734 = vsel %vm580, %v557, 0
        %v737 = vsel %vm580, %v558, 0
        %v740 = vsel %vm580, %v559, 0
        %v743 = vsel %vm580, %v560, 0
        %745 = vmatprep.subr.mxu0 0.0
        %746 = vmatpush1.msra.mxu0 %v710
        %747 = vmatprep.subr.mxu0 0.0
        %748 = vmatpush1.msra.mxu0 %v711
        %749 = vmatprep.subr.mxu0 0.0
        %750 = vmatpush1.msra.mxu0 %v712
        %751 = vmatprep.subr.mxu0 0.0
        %752 = vmatpush1.msra.mxu0 %v713
        %753 = vmatprep.subr.mxu0 0.0
        %754 = vmatpush1.msra.mxu0 0.0
        %755 = vmatprep.subr.mxu0 0.0
        %756 = vmatpush1.msra.mxu0 0.0
        %757 = vmatprep.subr.mxu0 0.0
        %758 = vmatpush1.msra.mxu0 0.0
        %759 = vmatprep.subr.mxu0 0.0
        %760 = vmatpush1.msra.mxu0 0.0
        %761 = vmatprep.subr.mxu0 0.0
        %762 = vmatpush1.msra.mxu0 0.0
        %763 = vmatprep.subr.mxu0 0.0
        %764 = vmatpush1.msra.mxu0 0.0
        %765 = vmatprep.subr.mxu0 0.0
        %766 = vmatpush1.msra.mxu0 0.0
        %767 = vmatprep.subr.mxu0 0.0
        %768 = vmatpush1.msra.mxu0 0.0
        %769 = vmatprep.subr.mxu0 0.0
        %770 = vmatpush1.msra.mxu0 0.0
        %771 = vmatprep.subr.mxu0 0.0
        %772 = vmatpush1.msra.mxu0 0.0
        %773 = vmatprep.subr.mxu0 0.0
        %774 = vmatpush1.msra.mxu0 0.0
        %775 = vmatprep.subr.mxu0 0.0
        %776 = vmatpush1.msra.mxu0 0.0
        %777 = vmatprep.subr.mxu0 0.0
        %778 = vmatpush1.msra.mxu0 0.0
        %779 = vmatprep.subr.mxu0 0.0
        %780 = vmatpush1.msra.mxu0 0.0
        %781 = vmatprep.subr.mxu0 0.0
        %782 = vmatpush1.msra.mxu0 0.0
        %783 = vmatprep.subr.mxu0 0.0
        %784 = vmatpush1.msra.mxu0 0.0
        %785 = vmatprep.subr.mxu0 0.0
        %786 = vmatpush1.msra.mxu0 0.0
        %787 = vmatprep.subr.mxu0 0.0
        %788 = vmatpush1.msra.mxu0 0.0
        %789 = vmatprep.subr.mxu0 0.0
        %790 = vmatpush1.msra.mxu0 0.0
        %791 = vmatprep.subr.mxu0 0.0
        %792 = vmatpush1.msra.mxu0 0.0
        %793 = vmatprep.subr.mxu0 0.0
        %794 = vmatpush1.msra.mxu0 0.0
        %795 = vmatprep.subr.mxu0 0.0
        %796 = vmatpush1.msra.mxu0 0.0
        %797 = vmatprep.subr.mxu0 0.0
        %798 = vmatpush1.msra.mxu0 0.0
        %799 = vmatprep.subr.mxu0 0.0
        %800 = vmatpush1.msra.mxu0 0.0
        %801 = vmatprep.subr.mxu0 0.0
        %802 = vmatpush1.msra.mxu0 0.0
        %803 = vmatprep.subr.mxu0 0.0
        %804 = vmatpush1.msra.mxu0 0.0
        %805 = vmatprep.subr.mxu0 0.0
        %806 = vmatpush1.msra.mxu0 0.0
        %807 = vmatprep.subr.mxu0 0.0
        %808 = vmatpush1.msra.mxu0 0.0
        %809 = vmatprep.mubr.f32.mxu0 0.0
        %810 = vmatmul.mubr.f32.gmra.mrb[0].mxu0 %v722
        %v811 = vpop.f32.mrb[0].mxu0
        %v812 = vadd.f32 %v719, %v811
        %v813 = vpop.f32.mrb[0].mxu0
        %814 = vmatprep.mubr.f32.mxu0 0.0
        %815 = vmatmul.mubr.f32.gmra.mrb[0].mxu0 %v725
        %v816 = vpop.f32.mrb[0].mxu0
        %v817 = vadd.f32 %v719, %v816
        %v818 = vpop.f32.mrb[0].mxu0
        %819 = vmatprep.mubr.f32.mxu0 0.0
        %820 = vmatmul.mubr.f32.gmra.mrb[0].mxu0 %v728
        %v821 = vpop.f32.mrb[0].mxu0
        %v822 = vadd.f32 %v719, %v821
        %v823 = vpop.f32.mrb[0].mxu0
        %824 = vmatprep.mubr.f32.mxu0 0.0
        %825 = vmatmul.mubr.f32.gmra.mrb[0].mxu0 %v731
        %v826 = vpop.f32.mrb[0].mxu0
        %v827 = vadd.f32 %v719, %v826
        %v828 = vpop.f32.mrb[0].mxu0
        %829 = vmatprep.mubr.f32.mxu0 0.0
        %830 = vmatmul.mubr.f32.gmra.mrb[0].mxu0 %v734
        %v831 = vpop.f32.mrb[0].mxu0
        %v832 = vadd.f32 %v719, %v831
        %v833 = vpop.f32.mrb[0].mxu0
        %834 = vmatprep.mubr.f32.mxu0 0.0
        %835 = vmatmul.mubr.f32.gmra.mrb[0].mxu0 %v737
        %v836 = vpop.f32.mrb[0].mxu0
        %v837 = vadd.f32 %v719, %v836
        %v838 = vpop.f32.mrb[0].mxu0
        %839 = vmatprep.mubr.f32.mxu0 0.0
        %840 = vmatmul.mubr.f32.gmra.mrb[0].mxu0 %v740
        %v841 = vpop.f32.mrb[0].mxu0
        %v842 = vadd.f32 %v719, %v841
        %v843 = vpop.f32.mrb[0].mxu0
        %844 = vmatprep.mubr.f32.mxu0 0.0
        %845 = vmatmul.mubr.f32.gmra.mrb[0].mxu0 %v743
        %v846 = vpop.f32.mrb[0].mxu0
        %v847 = vadd.f32 %v719, %v846
        %v848 = vpop.f32.mrb[0].mxu0
        %849 = vdwg.mxu0
        %v850 = vld [vmem:[#allocation11] sm:$0xff]
        %v851 = vld [vmem:[#allocation11 + $0x8] sm:$0xff]
        %v852 = vld [vmem:[#allocation11 + $0x10] sm:$0xff]
        %v853 = vld [vmem:[#allocation11 + $0x18] sm:$0xff]
        %v854 = vld [vmem:[#allocation13] sm:$0x1]
        %v856 = vlaneseq
        %v857 = vshrl.u32 %v856, 7
        %v858 = vsub.s32 0, %v857
        %v859 = vrot.slane %v854, %v858
        %v862 = vsel %vm580, %v561, 0
        %v865 = vsel %vm580, %v562, 0
        %v868 = vsel %vm580, %v563, 0
        %v871 = vsel %vm580, %v564, 0
        %v874 = vsel %vm580, %v565, 0
        %v877 = vsel %vm580, %v566, 0
        %v880 = vsel %vm580, %v567, 0
        %v883 = vsel %vm580, %v568, 0
        %885 = vmatprep.subr.mxu0 0.0
        %886 = vmatpush1.msra.mxu0 %v850
        %887 = vmatprep.subr.mxu0 0.0
        %888 = vmatpush1.msra.mxu0 %v851
        %889 = vmatprep.subr.mxu0 0.0
        %890 = vmatpush1.msra.mxu0 %v852
        %891 = vmatprep.subr.mxu0 0.0
        %892 = vmatpush1.msra.mxu0 %v853
        %893 = vmatprep.subr.mxu0 0.0
        %894 = vmatpush1.msra.mxu0 0.0
        %895 = vmatprep.subr.mxu0 0.0
        %896 = vmatpush1.msra.mxu0 0.0
        %897 = vmatprep.subr.mxu0 0.0
        %898 = vmatpush1.msra.mxu0 0.0
        %899 = vmatprep.subr.mxu0 0.0
        %900 = vmatpush1.msra.mxu0 0.0
        %901 = vmatprep.subr.mxu0 0.0
        %902 = vmatpush1.msra.mxu0 0.0
        %903 = vmatprep.subr.mxu0 0.0
        %904 = vmatpush1.msra.mxu0 0.0
        %905 = vmatprep.subr.mxu0 0.0
        %906 = vmatpush1.msra.mxu0 0.0
        %907 = vmatprep.subr.mxu0 0.0
        %908 = vmatpush1.msra.mxu0 0.0
        %909 = vmatprep.subr.mxu0 0.0
        %910 = vmatpush1.msra.mxu0 0.0
        %911 = vmatprep.subr.mxu0 0.0
        %912 = vmatpush1.msra.mxu0 0.0
        %913 = vmatprep.subr.mxu0 0.0
        %914 = vmatpush1.msra.mxu0 0.0
        %915 = vmatprep.subr.mxu0 0.0
        %916 = vmatpush1.msra.mxu0 0.0
        %917 = vmatprep.subr.mxu0 0.0
        %918 = vmatpush1.msra.mxu0 0.0
        %919 = vmatprep.subr.mxu0 0.0
        %920 = vmatpush1.msra.mxu0 0.0
        %921 = vmatprep.subr.mxu0 0.0
        %922 = vmatpush1.msra.mxu0 0.0
        %923 = vmatprep.subr.mxu0 0.0
        %924 = vmatpush1.msra.mxu0 0.0
        %925 = vmatprep.subr.mxu0 0.0
        %926 = vmatpush1.msra.mxu0 0.0
        %927 = vmatprep.subr.mxu0 0.0
        %928 = vmatpush1.msra.mxu0 0.0
        %929 = vmatprep.subr.mxu0 0.0
        %930 = vmatpush1.msra.mxu0 0.0
        %931 = vmatprep.subr.mxu0 0.0
        %932 = vmatpush1.msra.mxu0 0.0
        %933 = vmatprep.subr.mxu0 0.0
        %934 = vmatpush1.msra.mxu0 0.0
        %935 = vmatprep.subr.mxu0 0.0
        %936 = vmatpush1.msra.mxu0 0.0
        %937 = vmatprep.subr.mxu0 0.0
        %938 = vmatpush1.msra.mxu0 0.0
        %939 = vmatprep.subr.mxu0 0.0
        %940 = vmatpush1.msra.mxu0 0.0
        %941 = vmatprep.subr.mxu0 0.0
        %942 = vmatpush1.msra.mxu0 0.0
        %943 = vmatprep.subr.mxu0 0.0
        %944 = vmatpush1.msra.mxu0 0.0
        %945 = vmatprep.subr.mxu0 0.0
        %946 = vmatpush1.msra.mxu0 0.0
        %947 = vmatprep.subr.mxu0 0.0
        %948 = vmatpush1.msra.mxu0 0.0
        %949 = vmatprep.mubr.f32.mxu0 0.0
        %950 = vmatmul.mubr.f32.gmra.mrb[0].mxu0 %v862
        %v951 = vpop.f32.mrb[0].mxu0
        %v952 = vadd.f32 %v859, %v951
        %v953 = vpop.f32.mrb[0].mxu0
        %954 = vmatprep.mubr.f32.mxu0 0.0
        %955 = vmatmul.mubr.f32.gmra.mrb[0].mxu0 %v865
        %v956 = vpop.f32.mrb[0].mxu0
        %v957 = vadd.f32 %v859, %v956
        %v958 = vpop.f32.mrb[0].mxu0
        %959 = vmatprep.mubr.f32.mxu0 0.0
        %960 = vmatmul.mubr.f32.gmra.mrb[0].mxu0 %v868
        %v961 = vpop.f32.mrb[0].mxu0
        %v962 = vadd.f32 %v859, %v961
        %v963 = vpop.f32.mrb[0].mxu0
        %964 = vmatprep.mubr.f32.mxu0 0.0
        %965 = vmatmul.mubr.f32.gmra.mrb[0].mxu0 %v871
        %v966 = vpop.f32.mrb[0].mxu0
        %v967 = vadd.f32 %v859, %v966
        %v968 = vpop.f32.mrb[0].mxu0
        %969 = vmatprep.mubr.f32.mxu0 0.0
        %970 = vmatmul.mubr.f32.gmra.mrb[0].mxu0 %v874
        %v971 = vpop.f32.mrb[0].mxu0
        %v972 = vadd.f32 %v859, %v971
        %v973 = vpop.f32.mrb[0].mxu0
        %974 = vmatprep.mubr.f32.mxu0 0.0
        %975 = vmatmul.mubr.f32.gmra.mrb[0].mxu0 %v877
        %v976 = vpop.f32.mrb[0].mxu0
        %v977 = vadd.f32 %v859, %v976
        %v978 = vpop.f32.mrb[0].mxu0
        %979 = vmatprep.mubr.f32.mxu0 0.0
        %980 = vmatmul.mubr.f32.gmra.mrb[0].mxu0 %v880
        %v981 = vpop.f32.mrb[0].mxu0
        %v982 = vadd.f32 %v859, %v981
        %v983 = vpop.f32.mrb[0].mxu0
        %984 = vmatprep.mubr.f32.mxu0 0.0
        %985 = vmatmul.mubr.f32.gmra.mrb[0].mxu0 %v883
        %v986 = vpop.f32.mrb[0].mxu0
        %v987 = vadd.f32 %v859, %v986
        %v988 = vpop.f32.mrb[0].mxu0
        %989 = vdwg.mxu0
        %v990 = vld [vmem:[%s10] sm:$0x1]
        %v992 = vlaneseq
        %v993 = vshrl.u32 %v992, 7
        %v994 = vsub.s32 0, %v993
        %v995 = vrot.slane %v990, %v994
        %vm997 = vcmask 64512
        %v999 = vsel %vm997, %v672, 0
        %v1002 = vsel %vm997, %v677, 0
        %v1005 = vsel %vm997, %v812, 0
        %v1008 = vsel %vm997, %v817, 0
        %1010 = vmatprep.subr.mxu0 0.0
        %1011 = vmatpush1.xpose.msra.mxu0 %v1005
        %1012 = vmatprep.subr.mxu0 0.0
        %1013 = vmatpush1.xpose.msra.mxu0 %v1008
        %1014 = vmatprep.subr.mxu0 0.0
        %1015 = vmatpush1.xpose.msra.mxu0 0.0
        %1016 = vmatprep.subr.mxu0 0.0
        %1017 = vmatpush1.xpose.msra.mxu0 0.0
        %1018 = vmatprep.subr.mxu0 0.0
        %1019 = vmatpush1.xpose.msra.mxu0 0.0
        %1020 = vmatprep.subr.mxu0 0.0
        %1021 = vmatpush1.xpose.msra.mxu0 0.0
        %1022 = vmatprep.subr.mxu0 0.0
        %1023 = vmatpush1.xpose.msra.mxu0 0.0
        %1024 = vmatprep.subr.mxu0 0.0
        %1025 = vmatpush1.xpose.msra.mxu0 0.0
        %1026 = vmatprep.subr.mxu0 0.0
        %1027 = vmatpush1.xpose.msra.mxu0 0.0
        %1028 = vmatprep.subr.mxu0 0.0
        %1029 = vmatpush1.xpose.msra.mxu0 0.0
        %1030 = vmatprep.subr.mxu0 0.0
        %1031 = vmatpush1.xpose.msra.mxu0 0.0
        %1032 = vmatprep.subr.mxu0 0.0
        %1033 = vmatpush1.xpose.msra.mxu0 0.0
        %1034 = vmatprep.subr.mxu0 0.0
        %1035 = vmatpush1.xpose.msra.mxu0 0.0
        %1036 = vmatprep.subr.mxu0 0.0
        %1037 = vmatpush1.xpose.msra.mxu0 0.0
        %1038 = vmatprep.subr.mxu0 0.0
        %1039 = vmatpush1.xpose.msra.mxu0 0.0
        %1040 = vmatprep.subr.mxu0 0.0
        %1041 = vmatpush1.xpose.msra.mxu0 0.0
        %1042 = vmatprep.subr.mxu0 0.0
        %1043 = vmatpush1.xpose.msra.mxu0 0.0
        %1044 = vmatprep.subr.mxu0 0.0
        %1045 = vmatpush1.xpose.msra.mxu0 0.0
        %1046 = vmatprep.subr.mxu0 0.0
        %1047 = vmatpush1.xpose.msra.mxu0 0.0
        %1048 = vmatprep.subr.mxu0 0.0
        %1049 = vmatpush1.xpose.msra.mxu0 0.0
        %1050 = vmatprep.subr.mxu0 0.0
        %1051 = vmatpush1.xpose.msra.mxu0 0.0
        %1052 = vmatprep.subr.mxu0 0.0
        %1053 = vmatpush1.xpose.msra.mxu0 0.0
        %1054 = vmatprep.subr.mxu0 0.0
        %1055 = vmatpush1.xpose.msra.mxu0 0.0
        %1056 = vmatprep.subr.mxu0 0.0
        %1057 = vmatpush1.xpose.msra.mxu0 0.0
        %1058 = vmatprep.subr.mxu0 0.0
        %1059 = vmatpush1.xpose.msra.mxu0 0.0
        %1060 = vmatprep.subr.mxu0 0.0
        %1061 = vmatpush1.xpose.msra.mxu0 0.0
        %1062 = vmatprep.subr.mxu0 0.0
        %1063 = vmatpush1.xpose.msra.mxu0 0.0
        %1064 = vmatprep.subr.mxu0 0.0
        %1065 = vmatpush1.xpose.msra.mxu0 0.0
        %1066 = vmatprep.subr.mxu0 0.0
        %1067 = vmatpush1.xpose.msra.mxu0 0.0
        %1068 = vmatprep.subr.mxu0 0.0
        %1069 = vmatpush1.xpose.msra.mxu0 0.0
        %1070 = vmatprep.subr.mxu0 0.0
        %1071 = vmatpush1.xpose.msra.mxu0 0.0
        %1072 = vmatprep.subr.mxu0 0.0
        %1073 = vmatpush1.xpose.msra.mxu0 0.0
        %1074 = vmatprep.mubr.f32.mxu0 0.0
        %1075 = vmatmul.mubr.f32.gmra.mrb[0].mxu0 %v999
        %v1076 = vpop.f32.mrb[0].mxu0
        %v1077 = vadd.f32 0.0, %v1076
        %v1078 = vpop.f32.mrb[0].mxu0
        %1079 = vmatprep.mubr.f32.mxu0 0.0
        %1080 = vmatmul.mubr.f32.gmra.mrb[0].mxu0 %v1002
        %v1081 = vpop.f32.mrb[0].mxu0
        %v1082 = vadd.f32 0.0, %v1081
        %v1083 = vpop.f32.mrb[0].mxu0
        %1084 = vdwg.mxu0
        %v1086 = vsel %vm997, %v682, 0
        %v1089 = vsel %vm997, %v687, 0
        %v1092 = vsel %vm997, %v822, 0
        %v1095 = vsel %vm997, %v827, 0
        %1097 = vmatprep.subr.mxu0 0.0
        %1098 = vmatpush1.xpose.msra.mxu0 %v1092
        %1099 = vmatprep.subr.mxu0 0.0
        %1100 = vmatpush1.xpose.msra.mxu0 %v1095
        %1101 = vmatprep.subr.mxu0 0.0
        %1102 = vmatpush1.xpose.msra.mxu0 0.0
        %1103 = vmatprep.subr.mxu0 0.0
        %1104 = vmatpush1.xpose.msra.mxu0 0.0
        %1105 = vmatprep.subr.mxu0 0.0
        %1106 = vmatpush1.xpose.msra.mxu0 0.0
        %1107 = vmatprep.subr.mxu0 0.0
        %1108 = vmatpush1.xpose.msra.mxu0 0.0
        %1109 = vmatprep.subr.mxu0 0.0
        %1110 = vmatpush1.xpose.msra.mxu0 0.0
        %1111 = vmatprep.subr.mxu0 0.0
        %1112 = vmatpush1.xpose.msra.mxu0 0.0
        %1113 = vmatprep.subr.mxu0 0.0
        %1114 = vmatpush1.xpose.msra.mxu0 0.0
        %1115 = vmatprep.subr.mxu0 0.0
        %1116 = vmatpush1.xpose.msra.mxu0 0.0
        %1117 = vmatprep.subr.mxu0 0.0
        %1118 = vmatpush1.xpose.msra.mxu0 0.0
        %1119 = vmatprep.subr.mxu0 0.0
        %1120 = vmatpush1.xpose.msra.mxu0 0.0
        %1121 = vmatprep.subr.mxu0 0.0
        %1122 = vmatpush1.xpose.msra.mxu0 0.0
        %1123 = vmatprep.subr.mxu0 0.0
        %1124 = vmatpush1.xpose.msra.mxu0 0.0
        %1125 = vmatprep.subr.mxu0 0.0
        %1126 = vmatpush1.xpose.msra.mxu0 0.0
        %1127 = vmatprep.subr.mxu0 0.0
        %1128 = vmatpush1.xpose.msra.mxu0 0.0
        %1129 = vmatprep.subr.mxu0 0.0
        %1130 = vmatpush1.xpose.msra.mxu0 0.0
        %1131 = vmatprep.subr.mxu0 0.0
        %1132 = vmatpush1.xpose.msra.mxu0 0.0
        %1133 = vmatprep.subr.mxu0 0.0
        %1134 = vmatpush1.xpose.msra.mxu0 0.0
        %1135 = vmatprep.subr.mxu0 0.0
        %1136 = vmatpush1.xpose.msra.mxu0 0.0
        %1137 = vmatprep.subr.mxu0 0.0
        %1138 = vmatpush1.xpose.msra.mxu0 0.0
        %1139 = vmatprep.subr.mxu0 0.0
        %1140 = vmatpush1.xpose.msra.mxu0 0.0
        %1141 = vmatprep.subr.mxu0 0.0
        %1142 = vmatpush1.xpose.msra.mxu0 0.0
        %1143 = vmatprep.subr.mxu0 0.0
        %1144 = vmatpush1.xpose.msra.mxu0 0.0
        %1145 = vmatprep.subr.mxu0 0.0
        %1146 = vmatpush1.xpose.msra.mxu0 0.0
        %1147 = vmatprep.subr.mxu0 0.0
        %1148 = vmatpush1.xpose.msra.mxu0 0.0
        %1149 = vmatprep.subr.mxu0 0.0
        %1150 = vmatpush1.xpose.msra.mxu0 0.0
        %1151 = vmatprep.subr.mxu0 0.0
        %1152 = vmatpush1.xpose.msra.mxu0 0.0
        %1153 = vmatprep.subr.mxu0 0.0
        %1154 = vmatpush1.xpose.msra.mxu0 0.0
        %1155 = vmatprep.subr.mxu0 0.0
        %1156 = vmatpush1.xpose.msra.mxu0 0.0
        %1157 = vmatprep.subr.mxu0 0.0
        %1158 = vmatpush1.xpose.msra.mxu0 0.0
        %1159 = vmatprep.subr.mxu0 0.0
        %1160 = vmatpush1.xpose.msra.mxu0 0.0
        %1161 = vmatprep.mubr.f32.mxu0 0.0
        %1162 = vmatmul.mubr.f32.gmra.mrb[0].mxu0 %v1086
        %v1163 = vpop.f32.mrb[0].mxu0
        %v1164 = vadd.f32 0.0, %v1163
        %v1165 = vpop.f32.mrb[0].mxu0
        %1166 = vmatprep.mubr.f32.mxu0 0.0
        %1167 = vmatmul.mubr.f32.gmra.mrb[0].mxu0 %v1089
        %v1168 = vpop.f32.mrb[0].mxu0
        %v1169 = vadd.f32 0.0, %v1168
        %v1170 = vpop.f32.mrb[0].mxu0
        %1171 = vdwg.mxu0
        %v1173 = vsel %vm997, %v692, 0
        %v1176 = vsel %vm997, %v697, 0
        %v1179 = vsel %vm997, %v832, 0
        %v1182 = vsel %vm997, %v837, 0
        %1184 = vmatprep.subr.mxu0 0.0
        %1185 = vmatpush1.xpose.msra.mxu0 %v1179
        %1186 = vmatprep.subr.mxu0 0.0
        %1187 = vmatpush1.xpose.msra.mxu0 %v1182
        %1188 = vmatprep.subr.mxu0 0.0
        %1189 = vmatpush1.xpose.msra.mxu0 0.0
        %1190 = vmatprep.subr.mxu0 0.0
        %1191 = vmatpush1.xpose.msra.mxu0 0.0
        %1192 = vmatprep.subr.mxu0 0.0
        %1193 = vmatpush1.xpose.msra.mxu0 0.0
        %1194 = vmatprep.subr.mxu0 0.0
        %1195 = vmatpush1.xpose.msra.mxu0 0.0
        %1196 = vmatprep.subr.mxu0 0.0
        %1197 = vmatpush1.xpose.msra.mxu0 0.0
        %1198 = vmatprep.subr.mxu0 0.0
        %1199 = vmatpush1.xpose.msra.mxu0 0.0
        %1200 = vmatprep.subr.mxu0 0.0
        %1201 = vmatpush1.xpose.msra.mxu0 0.0
        %1202 = vmatprep.subr.mxu0 0.0
        %1203 = vmatpush1.xpose.msra.mxu0 0.0
        %1204 = vmatprep.subr.mxu0 0.0
        %1205 = vmatpush1.xpose.msra.mxu0 0.0
        %1206 = vmatprep.subr.mxu0 0.0
        %1207 = vmatpush1.xpose.msra.mxu0 0.0
        %1208 = vmatprep.subr.mxu0 0.0
        %1209 = vmatpush1.xpose.msra.mxu0 0.0
        %1210 = vmatprep.subr.mxu0 0.0
        %1211 = vmatpush1.xpose.msra.mxu0 0.0
        %1212 = vmatprep.subr.mxu0 0.0
        %1213 = vmatpush1.xpose.msra.mxu0 0.0
        %1214 = vmatprep.subr.mxu0 0.0
        %1215 = vmatpush1.xpose.msra.mxu0 0.0
        %1216 = vmatprep.subr.mxu0 0.0
        %1217 = vmatpush1.xpose.msra.mxu0 0.0
        %1218 = vmatprep.subr.mxu0 0.0
        %1219 = vmatpush1.xpose.msra.mxu0 0.0
        %1220 = vmatprep.subr.mxu0 0.0
        %1221 = vmatpush1.xpose.msra.mxu0 0.0
        %1222 = vmatprep.subr.mxu0 0.0
        %1223 = vmatpush1.xpose.msra.mxu0 0.0
        %1224 = vmatprep.subr.mxu0 0.0
        %1225 = vmatpush1.xpose.msra.mxu0 0.0
        %1226 = vmatprep.subr.mxu0 0.0
        %1227 = vmatpush1.xpose.msra.mxu0 0.0
        %1228 = vmatprep.subr.mxu0 0.0
        %1229 = vmatpush1.xpose.msra.mxu0 0.0
        %1230 = vmatprep.subr.mxu0 0.0
        %1231 = vmatpush1.xpose.msra.mxu0 0.0
        %1232 = vmatprep.subr.mxu0 0.0
        %1233 = vmatpush1.xpose.msra.mxu0 0.0
        %1234 = vmatprep.subr.mxu0 0.0
        %1235 = vmatpush1.xpose.msra.mxu0 0.0
        %1236 = vmatprep.subr.mxu0 0.0
        %1237 = vmatpush1.xpose.msra.mxu0 0.0
        %1238 = vmatprep.subr.mxu0 0.0
        %1239 = vmatpush1.xpose.msra.mxu0 0.0
        %1240 = vmatprep.subr.mxu0 0.0
        %1241 = vmatpush1.xpose.msra.mxu0 0.0
        %1242 = vmatprep.subr.mxu0 0.0
        %1243 = vmatpush1.xpose.msra.mxu0 0.0
        %1244 = vmatprep.subr.mxu0 0.0
        %1245 = vmatpush1.xpose.msra.mxu0 0.0
        %1246 = vmatprep.subr.mxu0 0.0
        %1247 = vmatpush1.xpose.msra.mxu0 0.0
        %1248 = vmatprep.mubr.f32.mxu0 0.0
        %1249 = vmatmul.mubr.f32.gmra.mrb[0].mxu0 %v1173
        %v1250 = vpop.f32.mrb[0].mxu0
        %v1251 = vadd.f32 0.0, %v1250
        %v1252 = vpop.f32.mrb[0].mxu0
        %1253 = vmatprep.mubr.f32.mxu0 0.0
        %1254 = vmatmul.mubr.f32.gmra.mrb[0].mxu0 %v1176
        %v1255 = vpop.f32.mrb[0].mxu0
        %v1256 = vadd.f32 0.0, %v1255
        %v1257 = vpop.f32.mrb[0].mxu0
        %1258 = vdwg.mxu0
        %v1260 = vsel %vm997, %v702, 0
        %v1263 = vsel %vm997, %v707, 0
        %v1266 = vsel %vm997, %v842, 0
        %v1269 = vsel %vm997, %v847, 0
        %1271 = vmatprep.subr.mxu0 0.0
        %1272 = vmatpush1.xpose.msra.mxu0 %v1266
        %1273 = vmatprep.subr.mxu0 0.0
        %1274 = vmatpush1.xpose.msra.mxu0 %v1269
        %1275 = vmatprep.subr.mxu0 0.0
        %1276 = vmatpush1.xpose.msra.mxu0 0.0
        %1277 = vmatprep.subr.mxu0 0.0
        %1278 = vmatpush1.xpose.msra.mxu0 0.0
        %1279 = vmatprep.subr.mxu0 0.0
        %1280 = vmatpush1.xpose.msra.mxu0 0.0
        %1281 = vmatprep.subr.mxu0 0.0
        %1282 = vmatpush1.xpose.msra.mxu0 0.0
        %1283 = vmatprep.subr.mxu0 0.0
        %1284 = vmatpush1.xpose.msra.mxu0 0.0
        %1285 = vmatprep.subr.mxu0 0.0
        %1286 = vmatpush1.xpose.msra.mxu0 0.0
        %1287 = vmatprep.subr.mxu0 0.0
        %1288 = vmatpush1.xpose.msra.mxu0 0.0
        %1289 = vmatprep.subr.mxu0 0.0
        %1290 = vmatpush1.xpose.msra.mxu0 0.0
        %1291 = vmatprep.subr.mxu0 0.0
        %1292 = vmatpush1.xpose.msra.mxu0 0.0
        %1293 = vmatprep.subr.mxu0 0.0
        %1294 = vmatpush1.xpose.msra.mxu0 0.0
        %1295 = vmatprep.subr.mxu0 0.0
        %1296 = vmatpush1.xpose.msra.mxu0 0.0
        %1297 = vmatprep.subr.mxu0 0.0
        %1298 = vmatpush1.xpose.msra.mxu0 0.0
        %1299 = vmatprep.subr.mxu0 0.0
        %1300 = vmatpush1.xpose.msra.mxu0 0.0
        %1301 = vmatprep.subr.mxu0 0.0
        %1302 = vmatpush1.xpose.msra.mxu0 0.0
        %1303 = vmatprep.subr.mxu0 0.0
        %1304 = vmatpush1.xpose.msra.mxu0 0.0
        %1305 = vmatprep.subr.mxu0 0.0
        %1306 = vmatpush1.xpose.msra.mxu0 0.0
        %1307 = vmatprep.subr.mxu0 0.0
        %1308 = vmatpush1.xpose.msra.mxu0 0.0
        %1309 = vmatprep.subr.mxu0 0.0
        %1310 = vmatpush1.xpose.msra.mxu0 0.0
        %1311 = vmatprep.subr.mxu0 0.0
        %1312 = vmatpush1.xpose.msra.mxu0 0.0
        %1313 = vmatprep.subr.mxu0 0.0
        %1314 = vmatpush1.xpose.msra.mxu0 0.0
        %1315 = vmatprep.subr.mxu0 0.0
        %1316 = vmatpush1.xpose.msra.mxu0 0.0
        %1317 = vmatprep.subr.mxu0 0.0
        %1318 = vmatpush1.xpose.msra.mxu0 0.0
        %1319 = vmatprep.subr.mxu0 0.0
        %1320 = vmatpush1.xpose.msra.mxu0 0.0
        %1321 = vmatprep.subr.mxu0 0.0
        %1322 = vmatpush1.xpose.msra.mxu0 0.0
        %1323 = vmatprep.subr.mxu0 0.0
        %1324 = vmatpush1.xpose.msra.mxu0 0.0
        %1325 = vmatprep.subr.mxu0 0.0
        %1326 = vmatpush1.xpose.msra.mxu0 0.0
        %1327 = vmatprep.subr.mxu0 0.0
        %1328 = vmatpush1.xpose.msra.mxu0 0.0
        %1329 = vmatprep.subr.mxu0 0.0
        %1330 = vmatpush1.xpose.msra.mxu0 0.0
        %1331 = vmatprep.subr.mxu0 0.0
        %1332 = vmatpush1.xpose.msra.mxu0 0.0
        %1333 = vmatprep.subr.mxu0 0.0
        %1334 = vmatpush1.xpose.msra.mxu0 0.0
        %1335 = vmatprep.mubr.f32.mxu0 0.0
        %1336 = vmatmul.mubr.f32.gmra.mrb[0].mxu0 %v1260
        %v1337 = vpop.f32.mrb[0].mxu0
        %v1338 = vadd.f32 0.0, %v1337
        %v1339 = vpop.f32.mrb[0].mxu0
        %1340 = vmatprep.mubr.f32.mxu0 0.0
        %1341 = vmatmul.mubr.f32.gmra.mrb[0].mxu0 %v1263
        %v1342 = vpop.f32.mrb[0].mxu0
        %v1343 = vadd.f32 0.0, %v1342
        %v1344 = vpop.f32.mrb[0].mxu0
        %1345 = vdwg.mxu0
        %vm1346 = vcmask 130048
        %v1347 = vsel %vm1346, %v1077, -inf
        %1348 = vmax.xlane.f32.xlu0 %v1347
        %v1349 = vpop.xlane.xlu0 %1348
        %v1350 = vsel %vm1346, %v1082, -inf
        %1351 = vmax.xlane.f32.xlu0 %v1350
        %v1352 = vpop.xlane.xlu0 %1351
        %v1353 = vsel %vm1346, %v1164, -inf
        %1354 = vmax.xlane.f32.xlu0 %v1353
        %v1355 = vpop.xlane.xlu0 %1354
        %v1356 = vsel %vm1346, %v1169, -inf
        %1357 = vmax.xlane.f32.xlu0 %v1356
        %v1358 = vpop.xlane.xlu0 %1357
        %v1359 = vsel %vm1346, %v1251, -inf
        %1360 = vmax.xlane.f32.xlu0 %v1359
        %v1361 = vpop.xlane.xlu0 %1360
        %v1362 = vsel %vm1346, %v1256, -inf
        %1363 = vmax.xlane.f32.xlu0 %v1362
        %v1364 = vpop.xlane.xlu0 %1363
        %v1365 = vsel %vm1346, %v1338, -inf
        %1366 = vmax.xlane.f32.xlu0 %v1365
        %v1367 = vpop.xlane.xlu0 %1366
        %v1368 = vsel %vm1346, %v1343, -inf
        %1369 = vmax.xlane.f32.xlu0 %v1368
        %v1370 = vpop.xlane.xlu0 %1369
        %v1371 = vsub.f32 %v1077, %v1349
        %v1372 = vsub.f32 %v1082, %v1352
        %v1373 = vsub.f32 %v1164, %v1355
        %v1374 = vsub.f32 %v1169, %v1358
        %v1375 = vsub.f32 %v1251, %v1361
        %v1376 = vsub.f32 %v1256, %v1364
        %v1377 = vsub.f32 %v1338, %v1367
        %v1378 = vsub.f32 %v1343, %v1370
        %v1379 = vmul.f32 %v1371, 1.442695
        %v1380 = vpow.pop %v1379
        %v1381 = vmul.f32 %v1372, 1.442695
        %v1382 = vpow.pop %v1381
        %v1383 = vmul.f32 %v1373, 1.442695
        %v1384 = vpow.pop %v1383
        %v1385 = vmul.f32 %v1374, 1.442695
        %v1386 = vpow.pop %v1385
        %v1387 = vmul.f32 %v1375, 1.442695
        %v1388 = vpow.pop %v1387
        %v1389 = vmul.f32 %v1376, 1.442695
        %v1390 = vpow.pop %v1389
        %v1391 = vmul.f32 %v1377, 1.442695
        %v1392 = vpow.pop %v1391
        %v1393 = vmul.f32 %v1378, 1.442695
        %v1394 = vpow.pop %v1393
        %v1395 = vsel %vm1346, %v1380, 0.0
        %1396 = vadd.xlane.f32.xlu0 %v1395
        %v1397 = vpop.xlane.xlu0 %1396
        %v1398 = vsel %vm1346, %v1382, 0.0
        %1399 = vadd.xlane.f32.xlu0 %v1398
        %v1400 = vpop.xlane.xlu0 %1399
        %v1401 = vsel %vm1346, %v1384, 0.0
        %1402 = vadd.xlane.f32.xlu0 %v1401
        %v1403 = vpop.xlane.xlu0 %1402
        %v1404 = vsel %vm1346, %v1386, 0.0
        %1405 = vadd.xlane.f32.xlu0 %v1404
        %v1406 = vpop.xlane.xlu0 %1405
        %v1407 = vsel %vm1346, %v1388, 0.0
        %1408 = vadd.xlane.f32.xlu0 %v1407
        %v1409 = vpop.xlane.xlu0 %1408
        %v1410 = vsel %vm1346, %v1390, 0.0
        %1411 = vadd.xlane.f32.xlu0 %v1410
        %v1412 = vpop.xlane.xlu0 %1411
        %v1413 = vsel %vm1346, %v1392, 0.0
        %1414 = vadd.xlane.f32.xlu0 %v1413
        %v1415 = vpop.xlane.xlu0 %1414
        %v1416 = vsel %vm1346, %v1394, 0.0
        %1417 = vadd.xlane.f32.xlu0 %v1416
        %v1418 = vpop.xlane.xlu0 %1417
        %v1419 = vrcp.pop %v1397
        %v1420 = vrcp.pop %v1400
        %v1421 = vrcp.pop %v1403
        %v1422 = vrcp.pop %v1406
        %v1423 = vrcp.pop %v1409
        %v1424 = vrcp.pop %v1412
        %v1425 = vrcp.pop %v1415
        %v1426 = vrcp.pop %v1418
        %v1427 = vmul.f32 %v1380, %v1419
        %v1428 = vmul.f32 %v1382, %v1420
        %v1429 = vmul.f32 %v1384, %v1421
        %v1430 = vmul.f32 %v1386, %v1422
        %v1431 = vmul.f32 %v1388, %v1423
        %v1432 = vmul.f32 %v1390, %v1424
        %v1433 = vmul.f32 %v1392, %v1425
        %v1434 = vmul.f32 %v1394, %v1426
        %v1436 = vsel %vm1346, %v1427, 0
        %v1439 = vsel %vm1346, %v1428, 0
        %1441 = vmatprep.subr.mxu0 0.0
        %1442 = vmatpush1.msra.mxu0 %v952
        %1443 = vmatprep.subr.mxu0 0.0
        %1444 = vmatpush1.msra.mxu0 %v957
        %1445 = vmatprep.subr.mxu0 0.0
        %1446 = vmatpush1.msra.mxu0 0.0
        %1447 = vmatprep.subr.mxu0 0.0
        %1448 = vmatpush1.msra.mxu0 0.0
        %1449 = vmatprep.subr.mxu0 0.0
        %1450 = vmatpush1.msra.mxu0 0.0
        %1451 = vmatprep.subr.mxu0 0.0
        %1452 = vmatpush1.msra.mxu0 0.0
        %1453 = vmatprep.subr.mxu0 0.0
        %1454 = vmatpush1.msra.mxu0 0.0
        %1455 = vmatprep.subr.mxu0 0.0
        %1456 = vmatpush1.msra.mxu0 0.0
        %1457 = vmatprep.subr.mxu0 0.0
        %1458 = vmatpush1.msra.mxu0 0.0
        %1459 = vmatprep.subr.mxu0 0.0
        %1460 = vmatpush1.msra.mxu0 0.0
        %1461 = vmatprep.subr.mxu0 0.0
        %1462 = vmatpush1.msra.mxu0 0.0
        %1463 = vmatprep.subr.mxu0 0.0
        %1464 = vmatpush1.msra.mxu0 0.0
        %1465 = vmatprep.subr.mxu0 0.0
        %1466 = vmatpush1.msra.mxu0 0.0
        %1467 = vmatprep.subr.mxu0 0.0
        %1468 = vmatpush1.msra.mxu0 0.0
        %1469 = vmatprep.subr.mxu0 0.0
        %1470 = vmatpush1.msra.mxu0 0.0
        %1471 = vmatprep.subr.mxu0 0.0
        %1472 = vmatpush1.msra.mxu0 0.0
        %1473 = vmatprep.subr.mxu0 0.0
        %1474 = vmatpush1.msra.mxu0 0.0
        %1475 = vmatprep.subr.mxu0 0.0
        %1476 = vmatpush1.msra.mxu0 0.0
        %1477 = vmatprep.subr.mxu0 0.0
        %1478 = vmatpush1.msra.mxu0 0.0
        %1479 = vmatprep.subr.mxu0 0.0
        %1480 = vmatpush1.msra.mxu0 0.0
        %1481 = vmatprep.subr.mxu0 0.0
        %1482 = vmatpush1.msra.mxu0 0.0
        %1483 = vmatprep.subr.mxu0 0.0
        %1484 = vmatpush1.msra.mxu0 0.0
        %1485 = vmatprep.subr.mxu0 0.0
        %1486 = vmatpush1.msra.mxu0 0.0
        %1487 = vmatprep.subr.mxu0 0.0
        %1488 = vmatpush1.msra.mxu0 0.0
        %1489 = vmatprep.subr.mxu0 0.0
        %1490 = vmatpush1.msra.mxu0 0.0
        %1491 = vmatprep.subr.mxu0 0.0
        %1492 = vmatpush1.msra.mxu0 0.0
        %1493 = vmatprep.subr.mxu0 0.0
        %1494 = vmatpush1.msra.mxu0 0.0
        %1495 = vmatprep.subr.mxu0 0.0
        %1496 = vmatpush1.msra.mxu0 0.0
        %1497 = vmatprep.subr.mxu0 0.0
        %1498 = vmatpush1.msra.mxu0 0.0
        %1499 = vmatprep.subr.mxu0 0.0
        %1500 = vmatpush1.msra.mxu0 0.0
        %1501 = vmatprep.subr.mxu0 0.0
        %1502 = vmatpush1.msra.mxu0 0.0
        %1503 = vmatprep.subr.mxu0 0.0
        %1504 = vmatpush1.msra.mxu0 0.0
        %1505 = vmatprep.mubr.f32.mxu0 0.0
        %1506 = vmatmul.mubr.f32.gmra.mrb[0].mxu0 %v1436
        %v1507 = vpop.f32.mrb[0].mxu0
        %v1508 = vadd.f32 0.0, %v1507
        %v1509 = vpop.f32.mrb[0].mxu0
        %1510 = vmatprep.mubr.f32.mxu0 0.0
        %1511 = vmatmul.mubr.f32.gmra.mrb[0].mxu0 %v1439
        %v1512 = vpop.f32.mrb[0].mxu0
        %v1513 = vadd.f32 0.0, %v1512
        %v1514 = vpop.f32.mrb[0].mxu0
        %1515 = vdwg.mxu0
        %v1517 = vsel %vm1346, %v1429, 0
        %v1520 = vsel %vm1346, %v1430, 0
        %1522 = vmatprep.subr.mxu0 0.0
        %1523 = vmatpush1.msra.mxu0 %v962
        %1524 = vmatprep.subr.mxu0 0.0
        %1525 = vmatpush1.msra.mxu0 %v967
        %1526 = vmatprep.subr.mxu0 0.0
        %1527 = vmatpush1.msra.mxu0 0.0
        %1528 = vmatprep.subr.mxu0 0.0
        %1529 = vmatpush1.msra.mxu0 0.0
        %1530 = vmatprep.subr.mxu0 0.0
        %1531 = vmatpush1.msra.mxu0 0.0
        %1532 = vmatprep.subr.mxu0 0.0
        %1533 = vmatpush1.msra.mxu0 0.0
        %1534 = vmatprep.subr.mxu0 0.0
        %1535 = vmatpush1.msra.mxu0 0.0
        %1536 = vmatprep.subr.mxu0 0.0
        %1537 = vmatpush1.msra.mxu0 0.0
        %1538 = vmatprep.subr.mxu0 0.0
        %1539 = vmatpush1.msra.mxu0 0.0
        %1540 = vmatprep.subr.mxu0 0.0
        %1541 = vmatpush1.msra.mxu0 0.0
        %1542 = vmatprep.subr.mxu0 0.0
        %1543 = vmatpush1.msra.mxu0 0.0
        %1544 = vmatprep.subr.mxu0 0.0
        %1545 = vmatpush1.msra.mxu0 0.0
        %1546 = vmatprep.subr.mxu0 0.0
        %1547 = vmatpush1.msra.mxu0 0.0
        %1548 = vmatprep.subr.mxu0 0.0
        %1549 = vmatpush1.msra.mxu0 0.0
        %1550 = vmatprep.subr.mxu0 0.0
        %1551 = vmatpush1.msra.mxu0 0.0
        %1552 = vmatprep.subr.mxu0 0.0
        %1553 = vmatpush1.msra.mxu0 0.0
        %1554 = vmatprep.subr.mxu0 0.0
        %1555 = vmatpush1.msra.mxu0 0.0
        %1556 = vmatprep.subr.mxu0 0.0
        %1557 = vmatpush1.msra.mxu0 0.0
        %1558 = vmatprep.subr.mxu0 0.0
        %1559 = vmatpush1.msra.mxu0 0.0
        %1560 = vmatprep.subr.mxu0 0.0
        %1561 = vmatpush1.msra.mxu0 0.0
        %1562 = vmatprep.subr.mxu0 0.0
        %1563 = vmatpush1.msra.mxu0 0.0
        %1564 = vmatprep.subr.mxu0 0.0
        %1565 = vmatpush1.msra.mxu0 0.0
        %1566 = vmatprep.subr.mxu0 0.0
        %1567 = vmatpush1.msra.mxu0 0.0
        %1568 = vmatprep.subr.mxu0 0.0
        %1569 = vmatpush1.msra.mxu0 0.0
        %1570 = vmatprep.subr.mxu0 0.0
        %1571 = vmatpush1.msra.mxu0 0.0
        %1572 = vmatprep.subr.mxu0 0.0
        %1573 = vmatpush1.msra.mxu0 0.0
        %1574 = vmatprep.subr.mxu0 0.0
        %1575 = vmatpush1.msra.mxu0 0.0
        %1576 = vmatprep.subr.mxu0 0.0
        %1577 = vmatpush1.msra.mxu0 0.0
        %1578 = vmatprep.subr.mxu0 0.0
        %1579 = vmatpush1.msra.mxu0 0.0
        %1580 = vmatprep.subr.mxu0 0.0
        %1581 = vmatpush1.msra.mxu0 0.0
        %1582 = vmatprep.subr.mxu0 0.0
        %1583 = vmatpush1.msra.mxu0 0.0
        %1584 = vmatprep.subr.mxu0 0.0
        %1585 = vmatpush1.msra.mxu0 0.0
        %1586 = vmatprep.mubr.f32.mxu0 0.0
        %1587 = vmatmul.mubr.f32.gmra.mrb[0].mxu0 %v1517
        %v1588 = vpop.f32.mrb[0].mxu0
        %v1589 = vadd.f32 0.0, %v1588
        %v1590 = vpop.f32.mrb[0].mxu0
        %1591 = vmatprep.mubr.f32.mxu0 0.0
        %1592 = vmatmul.mubr.f32.gmra.mrb[0].mxu0 %v1520
        %v1593 = vpop.f32.mrb[0].mxu0
        %v1594 = vadd.f32 0.0, %v1593
        %v1595 = vpop.f32.mrb[0].mxu0
        %1596 = vdwg.mxu0
        %v1598 = vsel %vm1346, %v1431, 0
        %v1601 = vsel %vm1346, %v1432, 0
        %1603 = vmatprep.subr.mxu0 0.0
        %1604 = vmatpush1.msra.mxu0 %v972
        %1605 = vmatprep.subr.mxu0 0.0
        %1606 = vmatpush1.msra.mxu0 %v977
        %1607 = vmatprep.subr.mxu0 0.0
        %1608 = vmatpush1.msra.mxu0 0.0
        %1609 = vmatprep.subr.mxu0 0.0
        %1610 = vmatpush1.msra.mxu0 0.0
        %1611 = vmatprep.subr.mxu0 0.0
        %1612 = vmatpush1.msra.mxu0 0.0
        %1613 = vmatprep.subr.mxu0 0.0
        %1614 = vmatpush1.msra.mxu0 0.0
        %1615 = vmatprep.subr.mxu0 0.0
        %1616 = vmatpush1.msra.mxu0 0.0
        %1617 = vmatprep.subr.mxu0 0.0
        %1618 = vmatpush1.msra.mxu0 0.0
        %1619 = vmatprep.subr.mxu0 0.0
        %1620 = vmatpush1.msra.mxu0 0.0
        %1621 = vmatprep.subr.mxu0 0.0
        %1622 = vmatpush1.msra.mxu0 0.0
        %1623 = vmatprep.subr.mxu0 0.0
        %1624 = vmatpush1.msra.mxu0 0.0
        %1625 = vmatprep.subr.mxu0 0.0
        %1626 = vmatpush1.msra.mxu0 0.0
        %1627 = vmatprep.subr.mxu0 0.0
        %1628 = vmatpush1.msra.mxu0 0.0
        %1629 = vmatprep.subr.mxu0 0.0
        %1630 = vmatpush1.msra.mxu0 0.0
        %1631 = vmatprep.subr.mxu0 0.0
        %1632 = vmatpush1.msra.mxu0 0.0
        %1633 = vmatprep.subr.mxu0 0.0
        %1634 = vmatpush1.msra.mxu0 0.0
        %1635 = vmatprep.subr.mxu0 0.0
        %1636 = vmatpush1.msra.mxu0 0.0
        %1637 = vmatprep.subr.mxu0 0.0
        %1638 = vmatpush1.msra.mxu0 0.0
        %1639 = vmatprep.subr.mxu0 0.0
        %1640 = vmatpush1.msra.mxu0 0.0
        %1641 = vmatprep.subr.mxu0 0.0
        %1642 = vmatpush1.msra.mxu0 0.0
        %1643 = vmatprep.subr.mxu0 0.0
        %1644 = vmatpush1.msra.mxu0 0.0
        %1645 = vmatprep.subr.mxu0 0.0
        %1646 = vmatpush1.msra.mxu0 0.0
        %1647 = vmatprep.subr.mxu0 0.0
        %1648 = vmatpush1.msra.mxu0 0.0
        %1649 = vmatprep.subr.mxu0 0.0
        %1650 = vmatpush1.msra.mxu0 0.0
        %1651 = vmatprep.subr.mxu0 0.0
        %1652 = vmatpush1.msra.mxu0 0.0
        %1653 = vmatprep.subr.mxu0 0.0
        %1654 = vmatpush1.msra.mxu0 0.0
        %1655 = vmatprep.subr.mxu0 0.0
        %1656 = vmatpush1.msra.mxu0 0.0
        %1657 = vmatprep.subr.mxu0 0.0
        %1658 = vmatpush1.msra.mxu0 0.0
        %1659 = vmatprep.subr.mxu0 0.0
        %1660 = vmatpush1.msra.mxu0 0.0
        %1661 = vmatprep.subr.mxu0 0.0
        %1662 = vmatpush1.msra.mxu0 0.0
        %1663 = vmatprep.subr.mxu0 0.0
        %1664 = vmatpush1.msra.mxu0 0.0
        %1665 = vmatprep.subr.mxu0 0.0
        %1666 = vmatpush1.msra.mxu0 0.0
        %1667 = vmatprep.mubr.f32.mxu0 0.0
        %1668 = vmatmul.mubr.f32.gmra.mrb[0].mxu0 %v1598
        %v1669 = vpop.f32.mrb[0].mxu0
        %v1670 = vadd.f32 0.0, %v1669
        %v1671 = vpop.f32.mrb[0].mxu0
        %1672 = vmatprep.mubr.f32.mxu0 0.0
        %1673 = vmatmul.mubr.f32.gmra.mrb[0].mxu0 %v1601
        %v1674 = vpop.f32.mrb[0].mxu0
        %v1675 = vadd.f32 0.0, %v1674
        %v1676 = vpop.f32.mrb[0].mxu0
        %1677 = vdwg.mxu0
        %v1679 = vsel %vm1346, %v1433, 0
        %v1682 = vsel %vm1346, %v1434, 0
        %1684 = vmatprep.subr.mxu0 0.0
        %1685 = vmatpush1.msra.mxu0 %v982
        %1686 = vmatprep.subr.mxu0 0.0
        %1687 = vmatpush1.msra.mxu0 %v987
        %1688 = vmatprep.subr.mxu0 0.0
        %1689 = vmatpush1.msra.mxu0 0.0
        %1690 = vmatprep.subr.mxu0 0.0
        %1691 = vmatpush1.msra.mxu0 0.0
        %1692 = vmatprep.subr.mxu0 0.0
        %1693 = vmatpush1.msra.mxu0 0.0
        %1694 = vmatprep.subr.mxu0 0.0
        %1695 = vmatpush1.msra.mxu0 0.0
        %1696 = vmatprep.subr.mxu0 0.0
        %1697 = vmatpush1.msra.mxu0 0.0
        %1698 = vmatprep.subr.mxu0 0.0
        %1699 = vmatpush1.msra.mxu0 0.0
        %1700 = vmatprep.subr.mxu0 0.0
        %1701 = vmatpush1.msra.mxu0 0.0
        %1702 = vmatprep.subr.mxu0 0.0
        %1703 = vmatpush1.msra.mxu0 0.0
        %1704 = vmatprep.subr.mxu0 0.0
        %1705 = vmatpush1.msra.mxu0 0.0
        %1706 = vmatprep.subr.mxu0 0.0
        %1707 = vmatpush1.msra.mxu0 0.0
        %1708 = vmatprep.subr.mxu0 0.0
        %1709 = vmatpush1.msra.mxu0 0.0
        %1710 = vmatprep.subr.mxu0 0.0
        %1711 = vmatpush1.msra.mxu0 0.0
        %1712 = vmatprep.subr.mxu0 0.0
        %1713 = vmatpush1.msra.mxu0 0.0
        %1714 = vmatprep.subr.mxu0 0.0
        %1715 = vmatpush1.msra.mxu0 0.0
        %1716 = vmatprep.subr.mxu0 0.0
        %1717 = vmatpush1.msra.mxu0 0.0
        %1718 = vmatprep.subr.mxu0 0.0
        %1719 = vmatpush1.msra.mxu0 0.0
        %1720 = vmatprep.subr.mxu0 0.0
        %1721 = vmatpush1.msra.mxu0 0.0
        %1722 = vmatprep.subr.mxu0 0.0
        %1723 = vmatpush1.msra.mxu0 0.0
        %1724 = vmatprep.subr.mxu0 0.0
        %1725 = vmatpush1.msra.mxu0 0.0
        %1726 = vmatprep.subr.mxu0 0.0
        %1727 = vmatpush1.msra.mxu0 0.0
        %1728 = vmatprep.subr.mxu0 0.0
        %1729 = vmatpush1.msra.mxu0 0.0
        %1730 = vmatprep.subr.mxu0 0.0
        %1731 = vmatpush1.msra.mxu0 0.0
        %1732 = vmatprep.subr.mxu0 0.0
        %1733 = vmatpush1.msra.mxu0 0.0
        %1734 = vmatprep.subr.mxu0 0.0
        %1735 = vmatpush1.msra.mxu0 0.0
        %1736 = vmatprep.subr.mxu0 0.0
        %1737 = vmatpush1.msra.mxu0 0.0
        %1738 = vmatprep.subr.mxu0 0.0
        %1739 = vmatpush1.msra.mxu0 0.0
        %1740 = vmatprep.subr.mxu0 0.0
        %1741 = vmatpush1.msra.mxu0 0.0
        %1742 = vmatprep.subr.mxu0 0.0
        %1743 = vmatpush1.msra.mxu0 0.0
        %1744 = vmatprep.subr.mxu0 0.0
        %1745 = vmatpush1.msra.mxu0 0.0
        %1746 = vmatprep.subr.mxu0 0.0
        %1747 = vmatpush1.msra.mxu0 0.0
        %1748 = vmatprep.mubr.f32.mxu0 0.0
        %1749 = vmatmul.mubr.f32.gmra.mrb[0].mxu0 %v1679
        %v1750 = vpop.f32.mrb[0].mxu0
        %v1751 = vadd.f32 0.0, %v1750
        %v1752 = vpop.f32.mrb[0].mxu0
        %1753 = vmatprep.mubr.f32.mxu0 0.0
        %1754 = vmatmul.mubr.f32.gmra.mrb[0].mxu0 %v1682
        %v1755 = vpop.f32.mrb[0].mxu0
        %v1756 = vadd.f32 0.0, %v1755
        %v1757 = vpop.f32.mrb[0].mxu0
        %1758 = vdwg.mxu0
        %v1759 = vld [vmem:[%s9] sm:$0xff]
        %v1761 = vsel %vm997, %v1508, 0
        %v1764 = vsel %vm997, %v1513, 0
        %v1767 = vsel %vm997, %v1589, 0
        %v1770 = vsel %vm997, %v1594, 0
        %v1773 = vsel %vm997, %v1670, 0
        %v1776 = vsel %vm997, %v1675, 0
        %v1779 = vsel %vm997, %v1751, 0
        %v1782 = vsel %vm997, %v1756, 0
        %1784 = vmatprep.subr.mxu0 0.0
        %1785 = vmatpush1.msra.mxu0 %v1759
        %1786 = vmatprep.subr.mxu0 0.0
        %1787 = vmatpush1.msra.mxu0 0.0
        %1788 = vmatprep.subr.mxu0 0.0
        %1789 = vmatpush1.msra.mxu0 0.0
        %1790 = vmatprep.subr.mxu0 0.0
        %1791 = vmatpush1.msra.mxu0 0.0
        %1792 = vmatprep.subr.mxu0 0.0
        %1793 = vmatpush1.msra.mxu0 0.0
        %1794 = vmatprep.subr.mxu0 0.0
        %1795 = vmatpush1.msra.mxu0 0.0
        %1796 = vmatprep.subr.mxu0 0.0
        %1797 = vmatpush1.msra.mxu0 0.0
        %1798 = vmatprep.subr.mxu0 0.0
        %1799 = vmatpush1.msra.mxu0 0.0
        %1800 = vmatprep.subr.mxu0 0.0
        %1801 = vmatpush1.msra.mxu0 0.0
        %1802 = vmatprep.subr.mxu0 0.0
        %1803 = vmatpush1.msra.mxu0 0.0
        %1804 = vmatprep.subr.mxu0 0.0
        %1805 = vmatpush1.msra.mxu0 0.0
        %1806 = vmatprep.subr.mxu0 0.0
        %1807 = vmatpush1.msra.mxu0 0.0
        %1808 = vmatprep.subr.mxu0 0.0
        %1809 = vmatpush1.msra.mxu0 0.0
        %1810 = vmatprep.subr.mxu0 0.0
        %1811 = vmatpush1.msra.mxu0 0.0
        %1812 = vmatprep.subr.mxu0 0.0
        %1813 = vmatpush1.msra.mxu0 0.0
        %1814 = vmatprep.subr.mxu0 0.0
        %1815 = vmatpush1.msra.mxu0 0.0
        %1816 = vmatprep.subr.mxu0 0.0
        %1817 = vmatpush1.msra.mxu0 0.0
        %1818 = vmatprep.subr.mxu0 0.0
        %1819 = vmatpush1.msra.mxu0 0.0
        %1820 = vmatprep.subr.mxu0 0.0
        %1821 = vmatpush1.msra.mxu0 0.0
        %1822 = vmatprep.subr.mxu0 0.0
        %1823 = vmatpush1.msra.mxu0 0.0
        %1824 = vmatprep.subr.mxu0 0.0
        %1825 = vmatpush1.msra.mxu0 0.0
        %1826 = vmatprep.subr.mxu0 0.0
        %1827 = vmatpush1.msra.mxu0 0.0
        %1828 = vmatprep.subr.mxu0 0.0
        %1829 = vmatpush1.msra.mxu0 0.0
        %1830 = vmatprep.subr.mxu0 0.0
        %1831 = vmatpush1.msra.mxu0 0.0
        %1832 = vmatprep.subr.mxu0 0.0
        %1833 = vmatpush1.msra.mxu0 0.0
        %1834 = vmatprep.subr.mxu0 0.0
        %1835 = vmatpush1.msra.mxu0 0.0
        %1836 = vmatprep.subr.mxu0 0.0
        %1837 = vmatpush1.msra.mxu0 0.0
        %1838 = vmatprep.subr.mxu0 0.0
        %1839 = vmatpush1.msra.mxu0 0.0
        %1840 = vmatprep.subr.mxu0 0.0
        %1841 = vmatpush1.msra.mxu0 0.0
        %1842 = vmatprep.subr.mxu0 0.0
        %1843 = vmatpush1.msra.mxu0 0.0
        %1844 = vmatprep.subr.mxu0 0.0
        %1845 = vmatpush1.msra.mxu0 0.0
        %1846 = vmatprep.subr.mxu0 0.0
        %1847 = vmatpush1.msra.mxu0 0.0
        %1848 = vmatprep.mubr.f32.mxu0 0.0
        %1849 = vmatmul.mubr.f32.gmra.mrb[0].mxu0 %v1761
        %v1850 = vpop.f32.mrb[0].mxu0
        %v1851 = vadd.f32 0.0, %v1850
        %v1852 = vpop.f32.mrb[0].mxu0
        %1853 = vmatprep.mubr.f32.mxu0 0.0
        %1854 = vmatmul.mubr.f32.gmra.mrb[0].mxu0 %v1764
        %v1855 = vpop.f32.mrb[0].mxu0
        %v1856 = vadd.f32 0.0, %v1855
        %v1857 = vpop.f32.mrb[0].mxu0
        %1858 = vmatprep.mubr.f32.mxu0 0.0
        %1859 = vmatmul.mubr.f32.gmra.mrb[0].mxu0 %v1767
        %v1860 = vpop.f32.mrb[0].mxu0
        %v1861 = vadd.f32 0.0, %v1860
        %v1862 = vpop.f32.mrb[0].mxu0
        %1863 = vmatprep.mubr.f32.mxu0 0.0
        %1864 = vmatmul.mubr.f32.gmra.mrb[0].mxu0 %v1770
        %v1865 = vpop.f32.mrb[0].mxu0
        %v1866 = vadd.f32 0.0, %v1865
        %v1867 = vpop.f32.mrb[0].mxu0
        %1868 = vmatprep.mubr.f32.mxu0 0.0
        %1869 = vmatmul.mubr.f32.gmra.mrb[0].mxu0 %v1773
        %v1870 = vpop.f32.mrb[0].mxu0
        %v1871 = vadd.f32 0.0, %v1870
        %v1872 = vpop.f32.mrb[0].mxu0
        %1873 = vmatprep.mubr.f32.mxu0 0.0
        %1874 = vmatmul.mubr.f32.gmra.mrb[0].mxu0 %v1776
        %v1875 = vpop.f32.mrb[0].mxu0
        %v1876 = vadd.f32 0.0, %v1875
        %v1877 = vpop.f32.mrb[0].mxu0
        %1878 = vmatprep.mubr.f32.mxu0 0.0
        %1879 = vmatmul.mubr.f32.gmra.mrb[0].mxu0 %v1779
        %v1880 = vpop.f32.mrb[0].mxu0
        %v1881 = vadd.f32 0.0, %v1880
        %v1882 = vpop.f32.mrb[0].mxu0
        %1883 = vmatprep.mubr.f32.mxu0 0.0
        %1884 = vmatmul.mubr.f32.gmra.mrb[0].mxu0 %v1782
        %v1885 = vpop.f32.mrb[0].mxu0
        %v1886 = vadd.f32 0.0, %v1885
        %v1887 = vpop.f32.mrb[0].mxu0
        %1888 = vdwg.mxu0
        %v1889 = vadd.f32 %v995, %v1851
        %v1890 = vadd.f32 %v995, %v1856
        %v1891 = vadd.f32 %v995, %v1861
        %v1892 = vadd.f32 %v995, %v1866
        %v1893 = vadd.f32 %v995, %v1871
        %v1894 = vadd.f32 %v995, %v1876
        %v1895 = vadd.f32 %v995, %v1881
        %v1896 = vadd.f32 %v995, %v1886
        %1897 = vrot.lane.b32.xlu0 %v672, 120
        %v1898 = vpop.permute.xlu0 %1897
        %1899 = vrot.lane.b32.xlu0 %v677, 120
        %v1900 = vpop.permute.xlu0 %1899
        %1901 = vrot.lane.b32.xlu0 %v812, 120
        %v1902 = vpop.permute.xlu0 %1901
        %1903 = vrot.lane.b32.xlu0 %v817, 120
        %v1904 = vpop.permute.xlu0 %1903
        %v1905 = vsel %vm997, %v1898, 0
        %v1907 = vsel %vm997, %v1900, 0
        %v1909 = vsel %vm997, %v1902, 0
        %v1911 = vsel %vm997, %v1904, 0
        %1913 = vmatprep.subr.mxu0 0.0
        %1914 = vmatpush1.xpose.msra.mxu0 %v1909
        %1915 = vmatprep.subr.mxu0 0.0
        %1916 = vmatpush1.xpose.msra.mxu0 %v1911
        %1917 = vmatprep.subr.mxu0 0.0
        %1918 = vmatpush1.xpose.msra.mxu0 0.0
        %1919 = vmatprep.subr.mxu0 0.0
        %1920 = vmatpush1.xpose.msra.mxu0 0.0
        %1921 = vmatprep.subr.mxu0 0.0
        %1922 = vmatpush1.xpose.msra.mxu0 0.0
        %1923 = vmatprep.subr.mxu0 0.0
        %1924 = vmatpush1.xpose.msra.mxu0 0.0
        %1925 = vmatprep.subr.mxu0 0.0
        %1926 = vmatpush1.xpose.msra.mxu0 0.0
        %1927 = vmatprep.subr.mxu0 0.0
        %1928 = vmatpush1.xpose.msra.mxu0 0.0
        %1929 = vmatprep.subr.mxu0 0.0
        %1930 = vmatpush1.xpose.msra.mxu0 0.0
        %1931 = vmatprep.subr.mxu0 0.0
        %1932 = vmatpush1.xpose.msra.mxu0 0.0
        %1933 = vmatprep.subr.mxu0 0.0
        %1934 = vmatpush1.xpose.msra.mxu0 0.0
        %1935 = vmatprep.subr.mxu0 0.0
        %1936 = vmatpush1.xpose.msra.mxu0 0.0
        %1937 = vmatprep.subr.mxu0 0.0
        %1938 = vmatpush1.xpose.msra.mxu0 0.0
        %1939 = vmatprep.subr.mxu0 0.0
        %1940 = vmatpush1.xpose.msra.mxu0 0.0
        %1941 = vmatprep.subr.mxu0 0.0
        %1942 = vmatpush1.xpose.msra.mxu0 0.0
        %1943 = vmatprep.subr.mxu0 0.0
        %1944 = vmatpush1.xpose.msra.mxu0 0.0
        %1945 = vmatprep.subr.mxu0 0.0
        %1946 = vmatpush1.xpose.msra.mxu0 0.0
        %1947 = vmatprep.subr.mxu0 0.0
        %1948 = vmatpush1.xpose.msra.mxu0 0.0
        %1949 = vmatprep.subr.mxu0 0.0
        %1950 = vmatpush1.xpose.msra.mxu0 0.0
        %1951 = vmatprep.subr.mxu0 0.0
        %1952 = vmatpush1.xpose.msra.mxu0 0.0
        %1953 = vmatprep.subr.mxu0 0.0
        %1954 = vmatpush1.xpose.msra.mxu0 0.0
        %1955 = vmatprep.subr.mxu0 0.0
        %1956 = vmatpush1.xpose.msra.mxu0 0.0
        %1957 = vmatprep.subr.mxu0 0.0
        %1958 = vmatpush1.xpose.msra.mxu0 0.0
        %1959 = vmatprep.subr.mxu0 0.0
        %1960 = vmatpush1.xpose.msra.mxu0 0.0
        %1961 = vmatprep.subr.mxu0 0.0
        %1962 = vmatpush1.xpose.msra.mxu0 0.0
        %1963 = vmatprep.subr.mxu0 0.0
        %1964 = vmatpush1.xpose.msra.mxu0 0.0
        %1965 = vmatprep.subr.mxu0 0.0
        %1966 = vmatpush1.xpose.msra.mxu0 0.0
        %1967 = vmatprep.subr.mxu0 0.0
        %1968 = vmatpush1.xpose.msra.mxu0 0.0
        %1969 = vmatprep.subr.mxu0 0.0
        %1970 = vmatpush1.xpose.msra.mxu0 0.0
        %1971 = vmatprep.subr.mxu0 0.0
        %1972 = vmatpush1.xpose.msra.mxu0 0.0
        %1973 = vmatprep.subr.mxu0 0.0
        %1974 = vmatpush1.xpose.msra.mxu0 0.0
        %1975 = vmatprep.subr.mxu0 0.0
        %1976 = vmatpush1.xpose.msra.mxu0 0.0
        %1977 = vmatprep.mubr.f32.mxu0 0.0
        %1978 = vmatmul.mubr.f32.gmra.mrb[0].mxu0 %v1905
        %v1979 = vpop.f32.mrb[0].mxu0
        %v1980 = vadd.f32 0.0, %v1979
        %v1981 = vpop.f32.mrb[0].mxu0
        %1982 = vmatprep.mubr.f32.mxu0 0.0
        %1983 = vmatmul.mubr.f32.gmra.mrb[0].mxu0 %v1907
        %v1984 = vpop.f32.mrb[0].mxu0
        %v1985 = vadd.f32 0.0, %v1984
        %v1986 = vpop.f32.mrb[0].mxu0
        %1987 = vdwg.mxu0
        %1988 = vrot.lane.b32.xlu0 %v682, 120
        %v1989 = vpop.permute.xlu0 %1988
        %1990 = vrot.lane.b32.xlu0 %v687, 120
        %v1991 = vpop.permute.xlu0 %1990
        %1992 = vrot.lane.b32.xlu0 %v822, 120
        %v1993 = vpop.permute.xlu0 %1992
        %1994 = vrot.lane.b32.xlu0 %v827, 120
        %v1995 = vpop.permute.xlu0 %1994
        %v1996 = vsel %vm997, %v1989, 0
        %v1998 = vsel %vm997, %v1991, 0
        %v2000 = vsel %vm997, %v1993, 0
        %v2002 = vsel %vm997, %v1995, 0
        %2004 = vmatprep.subr.mxu0 0.0
        %2005 = vmatpush1.xpose.msra.mxu0 %v2000
        %2006 = vmatprep.subr.mxu0 0.0
        %2007 = vmatpush1.xpose.msra.mxu0 %v2002
        %2008 = vmatprep.subr.mxu0 0.0
        %2009 = vmatpush1.xpose.msra.mxu0 0.0
        %2010 = vmatprep.subr.mxu0 0.0
        %2011 = vmatpush1.xpose.msra.mxu0 0.0
        %2012 = vmatprep.subr.mxu0 0.0
        %2013 = vmatpush1.xpose.msra.mxu0 0.0
        %2014 = vmatprep.subr.mxu0 0.0
        %2015 = vmatpush1.xpose.msra.mxu0 0.0
        %2016 = vmatprep.subr.mxu0 0.0
        %2017 = vmatpush1.xpose.msra.mxu0 0.0
        %2018 = vmatprep.subr.mxu0 0.0
        %2019 = vmatpush1.xpose.msra.mxu0 0.0
        %2020 = vmatprep.subr.mxu0 0.0
        %2021 = vmatpush1.xpose.msra.mxu0 0.0
        %2022 = vmatprep.subr.mxu0 0.0
        %2023 = vmatpush1.xpose.msra.mxu0 0.0
        %2024 = vmatprep.subr.mxu0 0.0
        %2025 = vmatpush1.xpose.msra.mxu0 0.0
        %2026 = vmatprep.subr.mxu0 0.0
        %2027 = vmatpush1.xpose.msra.mxu0 0.0
        %2028 = vmatprep.subr.mxu0 0.0
        %2029 = vmatpush1.xpose.msra.mxu0 0.0
        %2030 = vmatprep.subr.mxu0 0.0
        %2031 = vmatpush1.xpose.msra.mxu0 0.0
        %2032 = vmatprep.subr.mxu0 0.0
        %2033 = vmatpush1.xpose.msra.mxu0 0.0
        %2034 = vmatprep.subr.mxu0 0.0
        %2035 = vmatpush1.xpose.msra.mxu0 0.0
        %2036 = vmatprep.subr.mxu0 0.0
        %2037 = vmatpush1.xpose.msra.mxu0 0.0
        %2038 = vmatprep.subr.mxu0 0.0
        %2039 = vmatpush1.xpose.msra.mxu0 0.0
        %2040 = vmatprep.subr.mxu0 0.0
        %2041 = vmatpush1.xpose.msra.mxu0 0.0
        %2042 = vmatprep.subr.mxu0 0.0
        %2043 = vmatpush1.xpose.msra.mxu0 0.0
        %2044 = vmatprep.subr.mxu0 0.0
        %2045 = vmatpush1.xpose.msra.mxu0 0.0
        %2046 = vmatprep.subr.mxu0 0.0
        %2047 = vmatpush1.xpose.msra.mxu0 0.0
        %2048 = vmatprep.subr.mxu0 0.0
        %2049 = vmatpush1.xpose.msra.mxu0 0.0
        %2050 = vmatprep.subr.mxu0 0.0
        %2051 = vmatpush1.xpose.msra.mxu0 0.0
        %2052 = vmatprep.subr.mxu0 0.0
        %2053 = vmatpush1.xpose.msra.mxu0 0.0
        %2054 = vmatprep.subr.mxu0 0.0
        %2055 = vmatpush1.xpose.msra.mxu0 0.0
        %2056 = vmatprep.subr.mxu0 0.0
        %2057 = vmatpush1.xpose.msra.mxu0 0.0
        %2058 = vmatprep.subr.mxu0 0.0
        %2059 = vmatpush1.xpose.msra.mxu0 0.0
        %2060 = vmatprep.subr.mxu0 0.0
        %2061 = vmatpush1.xpose.msra.mxu0 0.0
        %2062 = vmatprep.subr.mxu0 0.0
        %2063 = vmatpush1.xpose.msra.mxu0 0.0
        %2064 = vmatprep.subr.mxu0 0.0
        %2065 = vmatpush1.xpose.msra.mxu0 0.0
        %2066 = vmatprep.subr.mxu0 0.0
        %2067 = vmatpush1.xpose.msra.mxu0 0.0
        %2068 = vmatprep.mubr.f32.mxu0 0.0
        %2069 = vmatmul.mubr.f32.gmra.mrb[0].mxu0 %v1996
        %v2070 = vpop.f32.mrb[0].mxu0
        %v2071 = vadd.f32 0.0, %v2070
        %v2072 = vpop.f32.mrb[0].mxu0
        %2073 = vmatprep.mubr.f32.mxu0 0.0
        %2074 = vmatmul.mubr.f32.gmra.mrb[0].mxu0 %v1998
        %v2075 = vpop.f32.mrb[0].mxu0
        %v2076 = vadd.f32 0.0, %v2075
        %v2077 = vpop.f32.mrb[0].mxu0
        %2078 = vdwg.mxu0
        %2079 = vrot.lane.b32.xlu0 %v692, 120
        %v2080 = vpop.permute.xlu0 %2079
        %2081 = vrot.lane.b32.xlu0 %v697, 120
        %v2082 = vpop.permute.xlu0 %2081
        %2083 = vrot.lane.b32.xlu0 %v832, 120
        %v2084 = vpop.permute.xlu0 %2083
        %2085 = vrot.lane.b32.xlu0 %v837, 120
        %v2086 = vpop.permute.xlu0 %2085
        %v2087 = vsel %vm997, %v2080, 0
        %v2089 = vsel %vm997, %v2082, 0
        %v2091 = vsel %vm997, %v2084, 0
        %v2093 = vsel %vm997, %v2086, 0
        %2095 = vmatprep.subr.mxu0 0.0
        %2096 = vmatpush1.xpose.msra.mxu0 %v2091
        %2097 = vmatprep.subr.mxu0 0.0
        %2098 = vmatpush1.xpose.msra.mxu0 %v2093
        %2099 = vmatprep.subr.mxu0 0.0
        %2100 = vmatpush1.xpose.msra.mxu0 0.0
        %2101 = vmatprep.subr.mxu0 0.0
        %2102 = vmatpush1.xpose.msra.mxu0 0.0
        %2103 = vmatprep.subr.mxu0 0.0
        %2104 = vmatpush1.xpose.msra.mxu0 0.0
        %2105 = vmatprep.subr.mxu0 0.0
        %2106 = vmatpush1.xpose.msra.mxu0 0.0
        %2107 = vmatprep.subr.mxu0 0.0
        %2108 = vmatpush1.xpose.msra.mxu0 0.0
        %2109 = vmatprep.subr.mxu0 0.0
        %2110 = vmatpush1.xpose.msra.mxu0 0.0
        %2111 = vmatprep.subr.mxu0 0.0
        %2112 = vmatpush1.xpose.msra.mxu0 0.0
        %2113 = vmatprep.subr.mxu0 0.0
        %2114 = vmatpush1.xpose.msra.mxu0 0.0
        %2115 = vmatprep.subr.mxu0 0.0
        %2116 = vmatpush1.xpose.msra.mxu0 0.0
        %2117 = vmatprep.subr.mxu0 0.0
        %2118 = vmatpush1.xpose.msra.mxu0 0.0
        %2119 = vmatprep.subr.mxu0 0.0
        %2120 = vmatpush1.xpose.msra.mxu0 0.0
        %2121 = vmatprep.subr.mxu0 0.0
        %2122 = vmatpush1.xpose.msra.mxu0 0.0
        %2123 = vmatprep.subr.mxu0 0.0
        %2124 = vmatpush1.xpose.msra.mxu0 0.0
        %2125 = vmatprep.subr.mxu0 0.0
        %2126 = vmatpush1.xpose.msra.mxu0 0.0
        %2127 = vmatprep.subr.mxu0 0.0
        %2128 = vmatpush1.xpose.msra.mxu0 0.0
        %2129 = vmatprep.subr.mxu0 0.0
        %2130 = vmatpush1.xpose.msra.mxu0 0.0
        %2131 = vmatprep.subr.mxu0 0.0
        %2132 = vmatpush1.xpose.msra.mxu0 0.0
        %2133 = vmatprep.subr.mxu0 0.0
        %2134 = vmatpush1.xpose.msra.mxu0 0.0
        %2135 = vmatprep.subr.mxu0 0.0
        %2136 = vmatpush1.xpose.msra.mxu0 0.0
        %2137 = vmatprep.subr.mxu0 0.0
        %2138 = vmatpush1.xpose.msra.mxu0 0.0
        %2139 = vmatprep.subr.mxu0 0.0
        %2140 = vmatpush1.xpose.msra.mxu0 0.0
        %2141 = vmatprep.subr.mxu0 0.0
        %2142 = vmatpush1.xpose.msra.mxu0 0.0
        %2143 = vmatprep.subr.mxu0 0.0
        %2144 = vmatpush1.xpose.msra.mxu0 0.0
        %2145 = vmatprep.subr.mxu0 0.0
        %2146 = vmatpush1.xpose.msra.mxu0 0.0
        %2147 = vmatprep.subr.mxu0 0.0
        %2148 = vmatpush1.xpose.msra.mxu0 0.0
        %2149 = vmatprep.subr.mxu0 0.0
        %2150 = vmatpush1.xpose.msra.mxu0 0.0
        %2151 = vmatprep.subr.mxu0 0.0
        %2152 = vmatpush1.xpose.msra.mxu0 0.0
        %2153 = vmatprep.subr.mxu0 0.0
        %2154 = vmatpush1.xpose.msra.mxu0 0.0
        %2155 = vmatprep.subr.mxu0 0.0
        %2156 = vmatpush1.xpose.msra.mxu0 0.0
        %2157 = vmatprep.subr.mxu0 0.0
        %2158 = vmatpush1.xpose.msra.mxu0 0.0
        %2159 = vmatprep.mubr.f32.mxu0 0.0
        %2160 = vmatmul.mubr.f32.gmra.mrb[0].mxu0 %v2087
        %v2161 = vpop.f32.mrb[0].mxu0
        %v2162 = vadd.f32 0.0, %v2161
        %v2163 = vpop.f32.mrb[0].mxu0
        %2164 = vmatprep.mubr.f32.mxu0 0.0
        %2165 = vmatmul.mubr.f32.gmra.mrb[0].mxu0 %v2089
        %v2166 = vpop.f32.mrb[0].mxu0
        %v2167 = vadd.f32 0.0, %v2166
        %v2168 = vpop.f32.mrb[0].mxu0
        %2169 = vdwg.mxu0
        %2170 = vrot.lane.b32.xlu0 %v702, 120
        %v2171 = vpop.permute.xlu0 %2170
        %2172 = vrot.lane.b32.xlu0 %v707, 120
        %v2173 = vpop.permute.xlu0 %2172
        %2174 = vrot.lane.b32.xlu0 %v842, 120
        %v2175 = vpop.permute.xlu0 %2174
        %2176 = vrot.lane.b32.xlu0 %v847, 120
        %v2177 = vpop.permute.xlu0 %2176
        %v2178 = vsel %vm997, %v2171, 0
        %v2180 = vsel %vm997, %v2173, 0
        %v2182 = vsel %vm997, %v2175, 0
        %v2184 = vsel %vm997, %v2177, 0
        %2186 = vmatprep.subr.mxu0 0.0
        %2187 = vmatpush1.xpose.msra.mxu0 %v2182
        %2188 = vmatprep.subr.mxu0 0.0
        %2189 = vmatpush1.xpose.msra.mxu0 %v2184
        %2190 = vmatprep.subr.mxu0 0.0
        %2191 = vmatpush1.xpose.msra.mxu0 0.0
        %2192 = vmatprep.subr.mxu0 0.0
        %2193 = vmatpush1.xpose.msra.mxu0 0.0
        %2194 = vmatprep.subr.mxu0 0.0
        %2195 = vmatpush1.xpose.msra.mxu0 0.0
        %2196 = vmatprep.subr.mxu0 0.0
        %2197 = vmatpush1.xpose.msra.mxu0 0.0
        %2198 = vmatprep.subr.mxu0 0.0
        %2199 = vmatpush1.xpose.msra.mxu0 0.0
        %2200 = vmatprep.subr.mxu0 0.0
        %2201 = vmatpush1.xpose.msra.mxu0 0.0
        %2202 = vmatprep.subr.mxu0 0.0
        %2203 = vmatpush1.xpose.msra.mxu0 0.0
        %2204 = vmatprep.subr.mxu0 0.0
        %2205 = vmatpush1.xpose.msra.mxu0 0.0
        %2206 = vmatprep.subr.mxu0 0.0
        %2207 = vmatpush1.xpose.msra.mxu0 0.0
        %2208 = vmatprep.subr.mxu0 0.0
        %2209 = vmatpush1.xpose.msra.mxu0 0.0
        %2210 = vmatprep.subr.mxu0 0.0
        %2211 = vmatpush1.xpose.msra.mxu0 0.0
        %2212 = vmatprep.subr.mxu0 0.0
        %2213 = vmatpush1.xpose.msra.mxu0 0.0
        %2214 = vmatprep.subr.mxu0 0.0
        %2215 = vmatpush1.xpose.msra.mxu0 0.0
        %2216 = vmatprep.subr.mxu0 0.0
        %2217 = vmatpush1.xpose.msra.mxu0 0.0
        %2218 = vmatprep.subr.mxu0 0.0
        %2219 = vmatpush1.xpose.msra.mxu0 0.0
        %2220 = vmatprep.subr.mxu0 0.0
        %2221 = vmatpush1.xpose.msra.mxu0 0.0
        %2222 = vmatprep.subr.mxu0 0.0
        %2223 = vmatpush1.xpose.msra.mxu0 0.0
        %2224 = vmatprep.subr.mxu0 0.0
        %2225 = vmatpush1.xpose.msra.mxu0 0.0
        %2226 = vmatprep.subr.mxu0 0.0
        %2227 = vmatpush1.xpose.msra.mxu0 0.0
        %2228 = vmatprep.subr.mxu0 0.0
        %2229 = vmatpush1.xpose.msra.mxu0 0.0
        %2230 = vmatprep.subr.mxu0 0.0
        %2231 = vmatpush1.xpose.msra.mxu0 0.0
        %2232 = vmatprep.subr.mxu0 0.0
        %2233 = vmatpush1.xpose.msra.mxu0 0.0
        %2234 = vmatprep.subr.mxu0 0.0
        %2235 = vmatpush1.xpose.msra.mxu0 0.0
        %2236 = vmatprep.subr.mxu0 0.0
        %2237 = vmatpush1.xpose.msra.mxu0 0.0
        %2238 = vmatprep.subr.mxu0 0.0
        %2239 = vmatpush1.xpose.msra.mxu0 0.0
        %2240 = vmatprep.subr.mxu0 0.0
        %2241 = vmatpush1.xpose.msra.mxu0 0.0
        %2242 = vmatprep.subr.mxu0 0.0
        %2243 = vmatpush1.xpose.msra.mxu0 0.0
        %2244 = vmatprep.subr.mxu0 0.0
        %2245 = vmatpush1.xpose.msra.mxu0 0.0
        %2246 = vmatprep.subr.mxu0 0.0
        %2247 = vmatpush1.xpose.msra.mxu0 0.0
        %2248 = vmatprep.subr.mxu0 0.0
        %2249 = vmatpush1.xpose.msra.mxu0 0.0
        %2250 = vmatprep.mubr.f32.mxu0 0.0
        %2251 = vmatmul.mubr.f32.gmra.mrb[0].mxu0 %v2178
        %v2252 = vpop.f32.mrb[0].mxu0
        %v2253 = vadd.f32 0.0, %v2252
        %v2254 = vpop.f32.mrb[0].mxu0
        %2255 = vmatprep.mubr.f32.mxu0 0.0
        %2256 = vmatmul.mubr.f32.gmra.mrb[0].mxu0 %v2180
        %v2257 = vpop.f32.mrb[0].mxu0
        %v2258 = vadd.f32 0.0, %v2257
        %v2259 = vpop.f32.mrb[0].mxu0
        %2260 = vdwg.mxu0
        %v2261 = vsel %vm1346, %v1980, -inf
        %2262 = vmax.xlane.f32.xlu0 %v2261
        %v2263 = vpop.xlane.xlu0 %2262
        %v2264 = vsel %vm1346, %v1985, -inf
        %2265 = vmax.xlane.f32.xlu0 %v2264
        %v2266 = vpop.xlane.xlu0 %2265
        %v2267 = vsel %vm1346, %v2071, -inf
        %2268 = vmax.xlane.f32.xlu0 %v2267
        %v2269 = vpop.xlane.xlu0 %2268
        %v2270 = vsel %vm1346, %v2076, -inf
        %2271 = vmax.xlane.f32.xlu0 %v2270
        %v2272 = vpop.xlane.xlu0 %2271
        %v2273 = vsel %vm1346, %v2162, -inf
        %2274 = vmax.xlane.f32.xlu0 %v2273
        %v2275 = vpop.xlane.xlu0 %2274
        %v2276 = vsel %vm1346, %v2167, -inf
        %2277 = vmax.xlane.f32.xlu0 %v2276
        %v2278 = vpop.xlane.xlu0 %2277
        %v2279 = vsel %vm1346, %v2253, -inf
        %2280 = vmax.xlane.f32.xlu0 %v2279
        %v2281 = vpop.xlane.xlu0 %2280
        %v2282 = vsel %vm1346, %v2258, -inf
        %2283 = vmax.xlane.f32.xlu0 %v2282
        %v2284 = vpop.xlane.xlu0 %2283
        %v2285 = vsub.f32 %v1980, %v2263
        %v2286 = vsub.f32 %v1985, %v2266
        %v2287 = vsub.f32 %v2071, %v2269
        %v2288 = vsub.f32 %v2076, %v2272
        %v2289 = vsub.f32 %v2162, %v2275
        %v2290 = vsub.f32 %v2167, %v2278
        %v2291 = vsub.f32 %v2253, %v2281
        %v2292 = vsub.f32 %v2258, %v2284
        %v2293 = vmul.f32 %v2285, 1.442695
        %v2294 = vpow.pop %v2293
        %v2295 = vmul.f32 %v2286, 1.442695
        %v2296 = vpow.pop %v2295
        %v2297 = vmul.f32 %v2287, 1.442695
        %v2298 = vpow.pop %v2297
        %v2299 = vmul.f32 %v2288, 1.442695
        %v2300 = vpow.pop %v2299
        %v2301 = vmul.f32 %v2289, 1.442695
        %v2302 = vpow.pop %v2301
        %v2303 = vmul.f32 %v2290, 1.442695
        %v2304 = vpow.pop %v2303
        %v2305 = vmul.f32 %v2291, 1.442695
        %v2306 = vpow.pop %v2305
        %v2307 = vmul.f32 %v2292, 1.442695
        %v2308 = vpow.pop %v2307
        %v2309 = vsel %vm1346, %v2294, 0.0
        %2310 = vadd.xlane.f32.xlu0 %v2309
        %v2311 = vpop.xlane.xlu0 %2310
        %v2312 = vsel %vm1346, %v2296, 0.0
        %2313 = vadd.xlane.f32.xlu0 %v2312
        %v2314 = vpop.xlane.xlu0 %2313
        %v2315 = vsel %vm1346, %v2298, 0.0
        %2316 = vadd.xlane.f32.xlu0 %v2315
        %v2317 = vpop.xlane.xlu0 %2316
        %v2318 = vsel %vm1346, %v2300, 0.0
        %2319 = vadd.xlane.f32.xlu0 %v2318
        %v2320 = vpop.xlane.xlu0 %2319
        %v2321 = vsel %vm1346, %v2302, 0.0
        %2322 = vadd.xlane.f32.xlu0 %v2321
        %v2323 = vpop.xlane.xlu0 %2322
        %v2324 = vsel %vm1346, %v2304, 0.0
        %2325 = vadd.xlane.f32.xlu0 %v2324
        %v2326 = vpop.xlane.xlu0 %2325
        %v2327 = vsel %vm1346, %v2306, 0.0
        %2328 = vadd.xlane.f32.xlu0 %v2327
        %v2329 = vpop.xlane.xlu0 %2328
        %v2330 = vsel %vm1346, %v2308, 0.0
        %2331 = vadd.xlane.f32.xlu0 %v2330
        %v2332 = vpop.xlane.xlu0 %2331
        %v2333 = vrcp.pop %v2311
        %v2334 = vrcp.pop %v2314
        %v2335 = vrcp.pop %v2317
        %v2336 = vrcp.pop %v2320
        %v2337 = vrcp.pop %v2323
        %v2338 = vrcp.pop %v2326
        %v2339 = vrcp.pop %v2329
        %v2340 = vrcp.pop %v2332
        %v2341 = vmul.f32 %v2294, %v2333
        %v2342 = vmul.f32 %v2296, %v2334
        %v2343 = vmul.f32 %v2298, %v2335
        %v2344 = vmul.f32 %v2300, %v2336
        %v2345 = vmul.f32 %v2302, %v2337
        %v2346 = vmul.f32 %v2304, %v2338
        %v2347 = vmul.f32 %v2306, %v2339
        %v2348 = vmul.f32 %v2308, %v2340
        %2351 = vrot.lane.b32.xlu0 %v952, 120
        %v2352 = vpop.permute.xlu0 %2351
        %2353 = vrot.lane.b32.xlu0 %v957, 120
        %v2354 = vpop.permute.xlu0 %2353
        %v2358 = vsel %vm1346, %v2341, 0
        %v2361 = vsel %vm1346, %v2342, 0
        %2363 = vmatprep.subr.mxu0 0.0
        %2364 = vmatpush1.msra.mxu0 %v2352
        %2365 = vmatprep.subr.mxu0 0.0
        %2366 = vmatpush1.msra.mxu0 %v2354
        %2367 = vmatprep.subr.mxu0 0.0
        %2368 = vmatpush1.msra.mxu0 0.0
        %2369 = vmatprep.subr.mxu0 0.0
        %2370 = vmatpush1.msra.mxu0 0.0
        %2371 = vmatprep.subr.mxu0 0.0
        %2372 = vmatpush1.msra.mxu0 0.0
        %2373 = vmatprep.subr.mxu0 0.0
        %2374 = vmatpush1.msra.mxu0 0.0
        %2375 = vmatprep.subr.mxu0 0.0
        %2376 = vmatpush1.msra.mxu0 0.0
        %2377 = vmatprep.subr.mxu0 0.0
        %2378 = vmatpush1.msra.mxu0 0.0
        %2379 = vmatprep.subr.mxu0 0.0
        %2380 = vmatpush1.msra.mxu0 0.0
        %2381 = vmatprep.subr.mxu0 0.0
        %2382 = vmatpush1.msra.mxu0 0.0
        %2383 = vmatprep.subr.mxu0 0.0
        %2384 = vmatpush1.msra.mxu0 0.0
        %2385 = vmatprep.subr.mxu0 0.0
        %2386 = vmatpush1.msra.mxu0 0.0
        %2387 = vmatprep.subr.mxu0 0.0
        %2388 = vmatpush1.msra.mxu0 0.0
        %2389 = vmatprep.subr.mxu0 0.0
        %2390 = vmatpush1.msra.mxu0 0.0
        %2391 = vmatprep.subr.mxu0 0.0
        %2392 = vmatpush1.msra.mxu0 0.0
        %2393 = vmatprep.subr.mxu0 0.0
        %2394 = vmatpush1.msra.mxu0 0.0
        %2395 = vmatprep.subr.mxu0 0.0
        %2396 = vmatpush1.msra.mxu0 0.0
        %2397 = vmatprep.subr.mxu0 0.0
        %2398 = vmatpush1.msra.mxu0 0.0
        %2399 = vmatprep.subr.mxu0 0.0
        %2400 = vmatpush1.msra.mxu0 0.0
        %2401 = vmatprep.subr.mxu0 0.0
        %2402 = vmatpush1.msra.mxu0 0.0
        %2403 = vmatprep.subr.mxu0 0.0
        %2404 = vmatpush1.msra.mxu0 0.0
        %2405 = vmatprep.subr.mxu0 0.0
        %2406 = vmatpush1.msra.mxu0 0.0
        %2407 = vmatprep.subr.mxu0 0.0
        %2408 = vmatpush1.msra.mxu0 0.0
        %2409 = vmatprep.subr.mxu0 0.0
        %2410 = vmatpush1.msra.mxu0 0.0
        %2411 = vmatprep.subr.mxu0 0.0
        %2412 = vmatpush1.msra.mxu0 0.0
        %2413 = vmatprep.subr.mxu0 0.0
        %2414 = vmatpush1.msra.mxu0 0.0
        %2415 = vmatprep.subr.mxu0 0.0
        %2416 = vmatpush1.msra.mxu0 0.0
        %2417 = vmatprep.subr.mxu0 0.0
        %2418 = vmatpush1.msra.mxu0 0.0
        %2419 = vmatprep.subr.mxu0 0.0
        %2420 = vmatpush1.msra.mxu0 0.0
        %2421 = vmatprep.subr.mxu0 0.0
        %2422 = vmatpush1.msra.mxu0 0.0
        %2423 = vmatprep.subr.mxu0 0.0
        %2424 = vmatpush1.msra.mxu0 0.0
        %2425 = vmatprep.subr.mxu0 0.0
        %2426 = vmatpush1.msra.mxu0 0.0
        %2427 = vmatprep.mubr.f32.mxu0 0.0
        %2428 = vmatmul.mubr.f32.gmra.mrb[0].mxu0 %v2358
        %v2429 = vpop.f32.mrb[0].mxu0
        %v2430 = vadd.f32 0.0, %v2429
        %v2431 = vpop.f32.mrb[0].mxu0
        %2432 = vmatprep.mubr.f32.mxu0 0.0
        %2433 = vmatmul.mubr.f32.gmra.mrb[0].mxu0 %v2361
        %v2434 = vpop.f32.mrb[0].mxu0
        %v2435 = vadd.f32 0.0, %v2434
        %v2436 = vpop.f32.mrb[0].mxu0
        %2437 = vdwg.mxu0
        %2440 = vrot.lane.b32.xlu0 %v962, 120
        %v2441 = vpop.permute.xlu0 %2440
        %2442 = vrot.lane.b32.xlu0 %v967, 120
        %v2443 = vpop.permute.xlu0 %2442
        %v2447 = vsel %vm1346, %v2343, 0
        %v2450 = vsel %vm1346, %v2344, 0
        %2452 = vmatprep.subr.mxu0 0.0
        %2453 = vmatpush1.msra.mxu0 %v2441
        %2454 = vmatprep.subr.mxu0 0.0
        %2455 = vmatpush1.msra.mxu0 %v2443
        %2456 = vmatprep.subr.mxu0 0.0
        %2457 = vmatpush1.msra.mxu0 0.0
        %2458 = vmatprep.subr.mxu0 0.0
        %2459 = vmatpush1.msra.mxu0 0.0
        %2460 = vmatprep.subr.mxu0 0.0
        %2461 = vmatpush1.msra.mxu0 0.0
        %2462 = vmatprep.subr.mxu0 0.0
        %2463 = vmatpush1.msra.mxu0 0.0
        %2464 = vmatprep.subr.mxu0 0.0
        %2465 = vmatpush1.msra.mxu0 0.0
        %2466 = vmatprep.subr.mxu0 0.0
        %2467 = vmatpush1.msra.mxu0 0.0
        %2468 = vmatprep.subr.mxu0 0.0
        %2469 = vmatpush1.msra.mxu0 0.0
        %2470 = vmatprep.subr.mxu0 0.0
        %2471 = vmatpush1.msra.mxu0 0.0
        %2472 = vmatprep.subr.mxu0 0.0
        %2473 = vmatpush1.msra.mxu0 0.0
        %2474 = vmatprep.subr.mxu0 0.0
        %2475 = vmatpush1.msra.mxu0 0.0
        %2476 = vmatprep.subr.mxu0 0.0
        %2477 = vmatpush1.msra.mxu0 0.0
        %2478 = vmatprep.subr.mxu0 0.0
        %2479 = vmatpush1.msra.mxu0 0.0
        %2480 = vmatprep.subr.mxu0 0.0
        %2481 = vmatpush1.msra.mxu0 0.0
        %2482 = vmatprep.subr.mxu0 0.0
        %2483 = vmatpush1.msra.mxu0 0.0
        %2484 = vmatprep.subr.mxu0 0.0
        %2485 = vmatpush1.msra.mxu0 0.0
        %2486 = vmatprep.subr.mxu0 0.0
        %2487 = vmatpush1.msra.mxu0 0.0
        %2488 = vmatprep.subr.mxu0 0.0
        %2489 = vmatpush1.msra.mxu0 0.0
        %2490 = vmatprep.subr.mxu0 0.0
        %2491 = vmatpush1.msra.mxu0 0.0
        %2492 = vmatprep.subr.mxu0 0.0
        %2493 = vmatpush1.msra.mxu0 0.0
        %2494 = vmatprep.subr.mxu0 0.0
        %2495 = vmatpush1.msra.mxu0 0.0
        %2496 = vmatprep.subr.mxu0 0.0
        %2497 = vmatpush1.msra.mxu0 0.0
        %2498 = vmatprep.subr.mxu0 0.0
        %2499 = vmatpush1.msra.mxu0 0.0
        %2500 = vmatprep.subr.mxu0 0.0
        %2501 = vmatpush1.msra.mxu0 0.0
        %2502 = vmatprep.subr.mxu0 0.0
        %2503 = vmatpush1.msra.mxu0 0.0
        %2504 = vmatprep.subr.mxu0 0.0
        %2505 = vmatpush1.msra.mxu0 0.0
        %2506 = vmatprep.subr.mxu0 0.0
        %2507 = vmatpush1.msra.mxu0 0.0
        %2508 = vmatprep.subr.mxu0 0.0
        %2509 = vmatpush1.msra.mxu0 0.0
        %2510 = vmatprep.subr.mxu0 0.0
        %2511 = vmatpush1.msra.mxu0 0.0
        %2512 = vmatprep.subr.mxu0 0.0
        %2513 = vmatpush1.msra.mxu0 0.0
        %2514 = vmatprep.subr.mxu0 0.0
        %2515 = vmatpush1.msra.mxu0 0.0
        %2516 = vmatprep.mubr.f32.mxu0 0.0
        %2517 = vmatmul.mubr.f32.gmra.mrb[0].mxu0 %v2447
        %v2518 = vpop.f32.mrb[0].mxu0
        %v2519 = vadd.f32 0.0, %v2518
        %v2520 = vpop.f32.mrb[0].mxu0
        %2521 = vmatprep.mubr.f32.mxu0 0.0
        %2522 = vmatmul.mubr.f32.gmra.mrb[0].mxu0 %v2450
        %v2523 = vpop.f32.mrb[0].mxu0
        %v2524 = vadd.f32 0.0, %v2523
        %v2525 = vpop.f32.mrb[0].mxu0
        %2526 = vdwg.mxu0
        %2529 = vrot.lane.b32.xlu0 %v972, 120
        %v2530 = vpop.permute.xlu0 %2529
        %2531 = vrot.lane.b32.xlu0 %v977, 120
        %v2532 = vpop.permute.xlu0 %2531
        %v2536 = vsel %vm1346, %v2345, 0
        %v2539 = vsel %vm1346, %v2346, 0
        %2541 = vmatprep.subr.mxu0 0.0
        %2542 = vmatpush1.msra.mxu0 %v2530
        %2543 = vmatprep.subr.mxu0 0.0
        %2544 = vmatpush1.msra.mxu0 %v2532
        %2545 = vmatprep.subr.mxu0 0.0
        %2546 = vmatpush1.msra.mxu0 0.0
        %2547 = vmatprep.subr.mxu0 0.0
        %2548 = vmatpush1.msra.mxu0 0.0
        %2549 = vmatprep.subr.mxu0 0.0
        %2550 = vmatpush1.msra.mxu0 0.0
        %2551 = vmatprep.subr.mxu0 0.0
        %2552 = vmatpush1.msra.mxu0 0.0
        %2553 = vmatprep.subr.mxu0 0.0
        %2554 = vmatpush1.msra.mxu0 0.0
        %2555 = vmatprep.subr.mxu0 0.0
        %2556 = vmatpush1.msra.mxu0 0.0
        %2557 = vmatprep.subr.mxu0 0.0
        %2558 = vmatpush1.msra.mxu0 0.0
        %2559 = vmatprep.subr.mxu0 0.0
        %2560 = vmatpush1.msra.mxu0 0.0
        %2561 = vmatprep.subr.mxu0 0.0
        %2562 = vmatpush1.msra.mxu0 0.0
        %2563 = vmatprep.subr.mxu0 0.0
        %2564 = vmatpush1.msra.mxu0 0.0
        %2565 = vmatprep.subr.mxu0 0.0
        %2566 = vmatpush1.msra.mxu0 0.0
        %2567 = vmatprep.subr.mxu0 0.0
        %2568 = vmatpush1.msra.mxu0 0.0
        %2569 = vmatprep.subr.mxu0 0.0
        %2570 = vmatpush1.msra.mxu0 0.0
        %2571 = vmatprep.subr.mxu0 0.0
        %2572 = vmatpush1.msra.mxu0 0.0
        %2573 = vmatprep.subr.mxu0 0.0
        %2574 = vmatpush1.msra.mxu0 0.0
        %2575 = vmatprep.subr.mxu0 0.0
        %2576 = vmatpush1.msra.mxu0 0.0
        %2577 = vmatprep.subr.mxu0 0.0
        %2578 = vmatpush1.msra.mxu0 0.0
        %2579 = vmatprep.subr.mxu0 0.0
        %2580 = vmatpush1.msra.mxu0 0.0
        %2581 = vmatprep.subr.mxu0 0.0
        %2582 = vmatpush1.msra.mxu0 0.0
        %2583 = vmatprep.subr.mxu0 0.0
        %2584 = vmatpush1.msra.mxu0 0.0
        %2585 = vmatprep.subr.mxu0 0.0
        %2586 = vmatpush1.msra.mxu0 0.0
        %2587 = vmatprep.subr.mxu0 0.0
        %2588 = vmatpush1.msra.mxu0 0.0
        %2589 = vmatprep.subr.mxu0 0.0
        %2590 = vmatpush1.msra.mxu0 0.0
        %2591 = vmatprep.subr.mxu0 0.0
        %2592 = vmatpush1.msra.mxu0 0.0
        %2593 = vmatprep.subr.mxu0 0.0
        %2594 = vmatpush1.msra.mxu0 0.0
        %2595 = vmatprep.subr.mxu0 0.0
        %2596 = vmatpush1.msra.mxu0 0.0
        %2597 = vmatprep.subr.mxu0 0.0
        %2598 = vmatpush1.msra.mxu0 0.0
        %2599 = vmatprep.subr.mxu0 0.0
        %2600 = vmatpush1.msra.mxu0 0.0
        %2601 = vmatprep.subr.mxu0 0.0
        %2602 = vmatpush1.msra.mxu0 0.0
        %2603 = vmatprep.subr.mxu0 0.0
        %2604 = vmatpush1.msra.mxu0 0.0
        %2605 = vmatprep.mubr.f32.mxu0 0.0
        %2606 = vmatmul.mubr.f32.gmra.mrb[0].mxu0 %v2536
        %v2607 = vpop.f32.mrb[0].mxu0
        %v2608 = vadd.f32 0.0, %v2607
        %v2609 = vpop.f32.mrb[0].mxu0
        %2610 = vmatprep.mubr.f32.mxu0 0.0
        %2611 = vmatmul.mubr.f32.gmra.mrb[0].mxu0 %v2539
        %v2612 = vpop.f32.mrb[0].mxu0
        %v2613 = vadd.f32 0.0, %v2612
        %v2614 = vpop.f32.mrb[0].mxu0
        %2615 = vdwg.mxu0
        %2618 = vrot.lane.b32.xlu0 %v982, 120
        %v2619 = vpop.permute.xlu0 %2618
        %2620 = vrot.lane.b32.xlu0 %v987, 120
        %v2621 = vpop.permute.xlu0 %2620
        %v2625 = vsel %vm1346, %v2347, 0
        %v2628 = vsel %vm1346, %v2348, 0
        %2630 = vmatprep.subr.mxu0 0.0
        %2631 = vmatpush1.msra.mxu0 %v2619
        %2632 = vmatprep.subr.mxu0 0.0
        %2633 = vmatpush1.msra.mxu0 %v2621
        %2634 = vmatprep.subr.mxu0 0.0
        %2635 = vmatpush1.msra.mxu0 0.0
        %2636 = vmatprep.subr.mxu0 0.0
        %2637 = vmatpush1.msra.mxu0 0.0
        %2638 = vmatprep.subr.mxu0 0.0
        %2639 = vmatpush1.msra.mxu0 0.0
        %2640 = vmatprep.subr.mxu0 0.0
        %2641 = vmatpush1.msra.mxu0 0.0
        %2642 = vmatprep.subr.mxu0 0.0
        %2643 = vmatpush1.msra.mxu0 0.0
        %2644 = vmatprep.subr.mxu0 0.0
        %2645 = vmatpush1.msra.mxu0 0.0
        %2646 = vmatprep.subr.mxu0 0.0
        %2647 = vmatpush1.msra.mxu0 0.0
        %2648 = vmatprep.subr.mxu0 0.0
        %2649 = vmatpush1.msra.mxu0 0.0
        %2650 = vmatprep.subr.mxu0 0.0
        %2651 = vmatpush1.msra.mxu0 0.0
        %2652 = vmatprep.subr.mxu0 0.0
        %2653 = vmatpush1.msra.mxu0 0.0
        %2654 = vmatprep.subr.mxu0 0.0
        %2655 = vmatpush1.msra.mxu0 0.0
        %2656 = vmatprep.subr.mxu0 0.0
        %2657 = vmatpush1.msra.mxu0 0.0
        %2658 = vmatprep.subr.mxu0 0.0
        %2659 = vmatpush1.msra.mxu0 0.0
        %2660 = vmatprep.subr.mxu0 0.0
        %2661 = vmatpush1.msra.mxu0 0.0
        %2662 = vmatprep.subr.mxu0 0.0
        %2663 = vmatpush1.msra.mxu0 0.0
        %2664 = vmatprep.subr.mxu0 0.0
        %2665 = vmatpush1.msra.mxu0 0.0
        %2666 = vmatprep.subr.mxu0 0.0
        %2667 = vmatpush1.msra.mxu0 0.0
        %2668 = vmatprep.subr.mxu0 0.0
        %2669 = vmatpush1.msra.mxu0 0.0
        %2670 = vmatprep.subr.mxu0 0.0
        %2671 = vmatpush1.msra.mxu0 0.0
        %2672 = vmatprep.subr.mxu0 0.0
        %2673 = vmatpush1.msra.mxu0 0.0
        %2674 = vmatprep.subr.mxu0 0.0
        %2675 = vmatpush1.msra.mxu0 0.0
        %2676 = vmatprep.subr.mxu0 0.0
        %2677 = vmatpush1.msra.mxu0 0.0
        %2678 = vmatprep.subr.mxu0 0.0
        %2679 = vmatpush1.msra.mxu0 0.0
        %2680 = vmatprep.subr.mxu0 0.0
        %2681 = vmatpush1.msra.mxu0 0.0
        %2682 = vmatprep.subr.mxu0 0.0
        %2683 = vmatpush1.msra.mxu0 0.0
        %2684 = vmatprep.subr.mxu0 0.0
        %2685 = vmatpush1.msra.mxu0 0.0
        %2686 = vmatprep.subr.mxu0 0.0
        %2687 = vmatpush1.msra.mxu0 0.0
        %2688 = vmatprep.subr.mxu0 0.0
        %2689 = vmatpush1.msra.mxu0 0.0
        %2690 = vmatprep.subr.mxu0 0.0
        %2691 = vmatpush1.msra.mxu0 0.0
        %2692 = vmatprep.subr.mxu0 0.0
        %2693 = vmatpush1.msra.mxu0 0.0
        %2694 = vmatprep.mubr.f32.mxu0 0.0
        %2695 = vmatmul.mubr.f32.gmra.mrb[0].mxu0 %v2625
        %v2696 = vpop.f32.mrb[0].mxu0
        %v2697 = vadd.f32 0.0, %v2696
        %v2698 = vpop.f32.mrb[0].mxu0
        %2699 = vmatprep.mubr.f32.mxu0 0.0
        %2700 = vmatmul.mubr.f32.gmra.mrb[0].mxu0 %v2628
        %v2701 = vpop.f32.mrb[0].mxu0
        %v2702 = vadd.f32 0.0, %v2701
        %v2703 = vpop.f32.mrb[0].mxu0
        %2704 = vdwg.mxu0
        %v2705 = vld [vmem:[%s9 + $0x8] sm:$0xff]
        %v2707 = vsel %vm997, %v2430, 0
        %v2710 = vsel %vm997, %v2435, 0
        %v2713 = vsel %vm997, %v2519, 0
        %v2716 = vsel %vm997, %v2524, 0
        %v2719 = vsel %vm997, %v2608, 0
        %v2722 = vsel %vm997, %v2613, 0
        %v2725 = vsel %vm997, %v2697, 0
        %v2728 = vsel %vm997, %v2702, 0
        %2730 = vmatprep.subr.mxu0 0.0
        %2731 = vmatpush1.msra.mxu0 %v2705
        %2732 = vmatprep.subr.mxu0 0.0
        %2733 = vmatpush1.msra.mxu0 0.0
        %2734 = vmatprep.subr.mxu0 0.0
        %2735 = vmatpush1.msra.mxu0 0.0
        %2736 = vmatprep.subr.mxu0 0.0
        %2737 = vmatpush1.msra.mxu0 0.0
        %2738 = vmatprep.subr.mxu0 0.0
        %2739 = vmatpush1.msra.mxu0 0.0
        %2740 = vmatprep.subr.mxu0 0.0
        %2741 = vmatpush1.msra.mxu0 0.0
        %2742 = vmatprep.subr.mxu0 0.0
        %2743 = vmatpush1.msra.mxu0 0.0
        %2744 = vmatprep.subr.mxu0 0.0
        %2745 = vmatpush1.msra.mxu0 0.0
        %2746 = vmatprep.subr.mxu0 0.0
        %2747 = vmatpush1.msra.mxu0 0.0
        %2748 = vmatprep.subr.mxu0 0.0
        %2749 = vmatpush1.msra.mxu0 0.0
        %2750 = vmatprep.subr.mxu0 0.0
        %2751 = vmatpush1.msra.mxu0 0.0
        %2752 = vmatprep.subr.mxu0 0.0
        %2753 = vmatpush1.msra.mxu0 0.0
        %2754 = vmatprep.subr.mxu0 0.0
        %2755 = vmatpush1.msra.mxu0 0.0
        %2756 = vmatprep.subr.mxu0 0.0
        %2757 = vmatpush1.msra.mxu0 0.0
        %2758 = vmatprep.subr.mxu0 0.0
        %2759 = vmatpush1.msra.mxu0 0.0
        %2760 = vmatprep.subr.mxu0 0.0
        %2761 = vmatpush1.msra.mxu0 0.0
        %2762 = vmatprep.subr.mxu0 0.0
        %2763 = vmatpush1.msra.mxu0 0.0
        %2764 = vmatprep.subr.mxu0 0.0
        %2765 = vmatpush1.msra.mxu0 0.0
        %2766 = vmatprep.subr.mxu0 0.0
        %2767 = vmatpush1.msra.mxu0 0.0
        %2768 = vmatprep.subr.mxu0 0.0
        %2769 = vmatpush1.msra.mxu0 0.0
        %2770 = vmatprep.subr.mxu0 0.0
        %2771 = vmatpush1.msra.mxu0 0.0
        %2772 = vmatprep.subr.mxu0 0.0
        %2773 = vmatpush1.msra.mxu0 0.0
        %2774 = vmatprep.subr.mxu0 0.0
        %2775 = vmatpush1.msra.mxu0 0.0
        %2776 = vmatprep.subr.mxu0 0.0
        %2777 = vmatpush1.msra.mxu0 0.0
        %2778 = vmatprep.subr.mxu0 0.0
        %2779 = vmatpush1.msra.mxu0 0.0
        %2780 = vmatprep.subr.mxu0 0.0
        %2781 = vmatpush1.msra.mxu0 0.0
        %2782 = vmatprep.subr.mxu0 0.0
        %2783 = vmatpush1.msra.mxu0 0.0
        %2784 = vmatprep.subr.mxu0 0.0
        %2785 = vmatpush1.msra.mxu0 0.0
        %2786 = vmatprep.subr.mxu0 0.0
        %2787 = vmatpush1.msra.mxu0 0.0
        %2788 = vmatprep.subr.mxu0 0.0
        %2789 = vmatpush1.msra.mxu0 0.0
        %2790 = vmatprep.subr.mxu0 0.0
        %2791 = vmatpush1.msra.mxu0 0.0
        %2792 = vmatprep.subr.mxu0 0.0
        %2793 = vmatpush1.msra.mxu0 0.0
        %2794 = vmatprep.mubr.f32.mxu0 0.0
        %2795 = vmatmul.mubr.f32.gmra.mrb[0].mxu0 %v2707
        %v2796 = vpop.f32.mrb[0].mxu0
        %v2797 = vadd.f32 0.0, %v2796
        %v2798 = vpop.f32.mrb[0].mxu0
        %2799 = vmatprep.mubr.f32.mxu0 0.0
        %2800 = vmatmul.mubr.f32.gmra.mrb[0].mxu0 %v2710
        %v2801 = vpop.f32.mrb[0].mxu0
        %v2802 = vadd.f32 0.0, %v2801
        %v2803 = vpop.f32.mrb[0].mxu0
        %2804 = vmatprep.mubr.f32.mxu0 0.0
        %2805 = vmatmul.mubr.f32.gmra.mrb[0].mxu0 %v2713
        %v2806 = vpop.f32.mrb[0].mxu0
        %v2807 = vadd.f32 0.0, %v2806
        %v2808 = vpop.f32.mrb[0].mxu0
        %2809 = vmatprep.mubr.f32.mxu0 0.0
        %2810 = vmatmul.mubr.f32.gmra.mrb[0].mxu0 %v2716
        %v2811 = vpop.f32.mrb[0].mxu0
        %v2812 = vadd.f32 0.0, %v2811
        %v2813 = vpop.f32.mrb[0].mxu0
        %2814 = vmatprep.mubr.f32.mxu0 0.0
        %2815 = vmatmul.mubr.f32.gmra.mrb[0].mxu0 %v2719
        %v2816 = vpop.f32.mrb[0].mxu0
        %v2817 = vadd.f32 0.0, %v2816
        %v2818 = vpop.f32.mrb[0].mxu0
        %2819 = vmatprep.mubr.f32.mxu0 0.0
        %2820 = vmatmul.mubr.f32.gmra.mrb[0].mxu0 %v2722
        %v2821 = vpop.f32.mrb[0].mxu0
        %v2822 = vadd.f32 0.0, %v2821
        %v2823 = vpop.f32.mrb[0].mxu0
        %2824 = vmatprep.mubr.f32.mxu0 0.0
        %2825 = vmatmul.mubr.f32.gmra.mrb[0].mxu0 %v2725
        %v2826 = vpop.f32.mrb[0].mxu0
        %v2827 = vadd.f32 0.0, %v2826
        %v2828 = vpop.f32.mrb[0].mxu0
        %2829 = vmatprep.mubr.f32.mxu0 0.0
        %2830 = vmatmul.mubr.f32.gmra.mrb[0].mxu0 %v2728
        %v2831 = vpop.f32.mrb[0].mxu0
        %v2832 = vadd.f32 0.0, %v2831
        %v2833 = vpop.f32.mrb[0].mxu0
        %2834 = vdwg.mxu0
        %v2835 = vadd.f32 %v1889, %v2797
        %v2836 = vadd.f32 %v1890, %v2802
        %v2837 = vadd.f32 %v1891, %v2807
        %v2838 = vadd.f32 %v1892, %v2812
        %v2839 = vadd.f32 %v1893, %v2817
        %v2840 = vadd.f32 %v1894, %v2822
        %v2841 = vadd.f32 %v1895, %v2827
        %v2842 = vadd.f32 %v1896, %v2832
        %2843 = vrot.lane.b32.xlu0 %v672, 112
        %v2844 = vpop.permute.xlu0 %2843
        %2845 = vrot.lane.b32.xlu0 %v677, 112
        %v2846 = vpop.permute.xlu0 %2845
        %2847 = vrot.lane.b32.xlu0 %v812, 112
        %v2848 = vpop.permute.xlu0 %2847
        %2849 = vrot.lane.b32.xlu0 %v817, 112
        %v2850 = vpop.permute.xlu0 %2849
        %v2851 = vsel %vm997, %v2844, 0
        %v2853 = vsel %vm997, %v2846, 0
        %v2855 = vsel %vm997, %v2848, 0
        %v2857 = vsel %vm997, %v2850, 0
        %2859 = vmatprep.subr.mxu0 0.0
        %2860 = vmatpush1.xpose.msra.mxu0 %v2855
        %2861 = vmatprep.subr.mxu0 0.0
        %2862 = vmatpush1.xpose.msra.mxu0 %v2857
        %2863 = vmatprep.subr.mxu0 0.0
        %2864 = vmatpush1.xpose.msra.mxu0 0.0
        %2865 = vmatprep.subr.mxu0 0.0
        %2866 = vmatpush1.xpose.msra.mxu0 0.0
        %2867 = vmatprep.subr.mxu0 0.0
        %2868 = vmatpush1.xpose.msra.mxu0 0.0
        %2869 = vmatprep.subr.mxu0 0.0
        %2870 = vmatpush1.xpose.msra.mxu0 0.0
        %2871 = vmatprep.subr.mxu0 0.0
        %2872 = vmatpush1.xpose.msra.mxu0 0.0
        %2873 = vmatprep.subr.mxu0 0.0
        %2874 = vmatpush1.xpose.msra.mxu0 0.0
        %2875 = vmatprep.subr.mxu0 0.0
        %2876 = vmatpush1.xpose.msra.mxu0 0.0
        %2877 = vmatprep.subr.mxu0 0.0
        %2878 = vmatpush1.xpose.msra.mxu0 0.0
        %2879 = vmatprep.subr.mxu0 0.0
        %2880 = vmatpush1.xpose.msra.mxu0 0.0
        %2881 = vmatprep.subr.mxu0 0.0
        %2882 = vmatpush1.xpose.msra.mxu0 0.0
        %2883 = vmatprep.subr.mxu0 0.0
        %2884 = vmatpush1.xpose.msra.mxu0 0.0
        %2885 = vmatprep.subr.mxu0 0.0
        %2886 = vmatpush1.xpose.msra.mxu0 0.0
        %2887 = vmatprep.subr.mxu0 0.0
        %2888 = vmatpush1.xpose.msra.mxu0 0.0
        %2889 = vmatprep.subr.mxu0 0.0
        %2890 = vmatpush1.xpose.msra.mxu0 0.0
        %2891 = vmatprep.subr.mxu0 0.0
        %2892 = vmatpush1.xpose.msra.mxu0 0.0
        %2893 = vmatprep.subr.mxu0 0.0
        %2894 = vmatpush1.xpose.msra.mxu0 0.0
        %2895 = vmatprep.subr.mxu0 0.0
        %2896 = vmatpush1.xpose.msra.mxu0 0.0
        %2897 = vmatprep.subr.mxu0 0.0
        %2898 = vmatpush1.xpose.msra.mxu0 0.0
        %2899 = vmatprep.subr.mxu0 0.0
        %2900 = vmatpush1.xpose.msra.mxu0 0.0
        %2901 = vmatprep.subr.mxu0 0.0
        %2902 = vmatpush1.xpose.msra.mxu0 0.0
        %2903 = vmatprep.subr.mxu0 0.0
        %2904 = vmatpush1.xpose.msra.mxu0 0.0
        %2905 = vmatprep.subr.mxu0 0.0
        %2906 = vmatpush1.xpose.msra.mxu0 0.0
        %2907 = vmatprep.subr.mxu0 0.0
        %2908 = vmatpush1.xpose.msra.mxu0 0.0
        %2909 = vmatprep.subr.mxu0 0.0
        %2910 = vmatpush1.xpose.msra.mxu0 0.0
        %2911 = vmatprep.subr.mxu0 0.0
        %2912 = vmatpush1.xpose.msra.mxu0 0.0
        %2913 = vmatprep.subr.mxu0 0.0
        %2914 = vmatpush1.xpose.msra.mxu0 0.0
        %2915 = vmatprep.subr.mxu0 0.0
        %2916 = vmatpush1.xpose.msra.mxu0 0.0
        %2917 = vmatprep.subr.mxu0 0.0
        %2918 = vmatpush1.xpose.msra.mxu0 0.0
        %2919 = vmatprep.subr.mxu0 0.0
        %2920 = vmatpush1.xpose.msra.mxu0 0.0
        %2921 = vmatprep.subr.mxu0 0.0
        %2922 = vmatpush1.xpose.msra.mxu0 0.0
        %2923 = vmatprep.mubr.f32.mxu0 0.0
        %2924 = vmatmul.mubr.f32.gmra.mrb[0].mxu0 %v2851
        %v2925 = vpop.f32.mrb[0].mxu0
        %v2926 = vadd.f32 0.0, %v2925
        %v2927 = vpop.f32.mrb[0].mxu0
        %2928 = vmatprep.mubr.f32.mxu0 0.0
        %2929 = vmatmul.mubr.f32.gmra.mrb[0].mxu0 %v2853
        %v2930 = vpop.f32.mrb[0].mxu0
        %v2931 = vadd.f32 0.0, %v2930
        %v2932 = vpop.f32.mrb[0].mxu0
        %2933 = vdwg.mxu0
        %2934 = vrot.lane.b32.xlu0 %v682, 112
        %v2935 = vpop.permute.xlu0 %2934
        %2936 = vrot.lane.b32.xlu0 %v687, 112
        %v2937 = vpop.permute.xlu0 %2936
        %2938 = vrot.lane.b32.xlu0 %v822, 112
        %v2939 = vpop.permute.xlu0 %2938
        %2940 = vrot.lane.b32.xlu0 %v827, 112
        %v2941 = vpop.permute.xlu0 %2940
        %v2942 = vsel %vm997, %v2935, 0
        %v2944 = vsel %vm997, %v2937, 0
        %v2946 = vsel %vm997, %v2939, 0
        %v2948 = vsel %vm997, %v2941, 0
        %2950 = vmatprep.subr.mxu0 0.0
        %2951 = vmatpush1.xpose.msra.mxu0 %v2946
        %2952 = vmatprep.subr.mxu0 0.0
        %2953 = vmatpush1.xpose.msra.mxu0 %v2948
        %2954 = vmatprep.subr.mxu0 0.0
        %2955 = vmatpush1.xpose.msra.mxu0 0.0
        %2956 = vmatprep.subr.mxu0 0.0
        %2957 = vmatpush1.xpose.msra.mxu0 0.0
        %2958 = vmatprep.subr.mxu0 0.0
        %2959 = vmatpush1.xpose.msra.mxu0 0.0
        %2960 = vmatprep.subr.mxu0 0.0
        %2961 = vmatpush1.xpose.msra.mxu0 0.0
        %2962 = vmatprep.subr.mxu0 0.0
        %2963 = vmatpush1.xpose.msra.mxu0 0.0
        %2964 = vmatprep.subr.mxu0 0.0
        %2965 = vmatpush1.xpose.msra.mxu0 0.0
        %2966 = vmatprep.subr.mxu0 0.0
        %2967 = vmatpush1.xpose.msra.mxu0 0.0
        %2968 = vmatprep.subr.mxu0 0.0
        %2969 = vmatpush1.xpose.msra.mxu0 0.0
        %2970 = vmatprep.subr.mxu0 0.0
        %2971 = vmatpush1.xpose.msra.mxu0 0.0
        %2972 = vmatprep.subr.mxu0 0.0
        %2973 = vmatpush1.xpose.msra.mxu0 0.0
        %2974 = vmatprep.subr.mxu0 0.0
        %2975 = vmatpush1.xpose.msra.mxu0 0.0
        %2976 = vmatprep.subr.mxu0 0.0
        %2977 = vmatpush1.xpose.msra.mxu0 0.0
        %2978 = vmatprep.subr.mxu0 0.0
        %2979 = vmatpush1.xpose.msra.mxu0 0.0
        %2980 = vmatprep.subr.mxu0 0.0
        %2981 = vmatpush1.xpose.msra.mxu0 0.0
        %2982 = vmatprep.subr.mxu0 0.0
        %2983 = vmatpush1.xpose.msra.mxu0 0.0
        %2984 = vmatprep.subr.mxu0 0.0
        %2985 = vmatpush1.xpose.msra.mxu0 0.0
        %2986 = vmatprep.subr.mxu0 0.0
        %2987 = vmatpush1.xpose.msra.mxu0 0.0
        %2988 = vmatprep.subr.mxu0 0.0
        %2989 = vmatpush1.xpose.msra.mxu0 0.0
        %2990 = vmatprep.subr.mxu0 0.0
        %2991 = vmatpush1.xpose.msra.mxu0 0.0
        %2992 = vmatprep.subr.mxu0 0.0
        %2993 = vmatpush1.xpose.msra.mxu0 0.0
        %2994 = vmatprep.subr.mxu0 0.0
        %2995 = vmatpush1.xpose.msra.mxu0 0.0
        %2996 = vmatprep.subr.mxu0 0.0
        %2997 = vmatpush1.xpose.msra.mxu0 0.0
        %2998 = vmatprep.subr.mxu0 0.0
        %2999 = vmatpush1.xpose.msra.mxu0 0.0
        %3000 = vmatprep.subr.mxu0 0.0
        %3001 = vmatpush1.xpose.msra.mxu0 0.0
        %3002 = vmatprep.subr.mxu0 0.0
        %3003 = vmatpush1.xpose.msra.mxu0 0.0
        %3004 = vmatprep.subr.mxu0 0.0
        %3005 = vmatpush1.xpose.msra.mxu0 0.0
        %3006 = vmatprep.subr.mxu0 0.0
        %3007 = vmatpush1.xpose.msra.mxu0 0.0
        %3008 = vmatprep.subr.mxu0 0.0
        %3009 = vmatpush1.xpose.msra.mxu0 0.0
        %3010 = vmatprep.subr.mxu0 0.0
        %3011 = vmatpush1.xpose.msra.mxu0 0.0
        %3012 = vmatprep.subr.mxu0 0.0
        %3013 = vmatpush1.xpose.msra.mxu0 0.0
        %3014 = vmatprep.mubr.f32.mxu0 0.0
        %3015 = vmatmul.mubr.f32.gmra.mrb[0].mxu0 %v2942
        %v3016 = vpop.f32.mrb[0].mxu0
        %v3017 = vadd.f32 0.0, %v3016
        %v3018 = vpop.f32.mrb[0].mxu0
        %3019 = vmatprep.mubr.f32.mxu0 0.0
        %3020 = vmatmul.mubr.f32.gmra.mrb[0].mxu0 %v2944
        %v3021 = vpop.f32.mrb[0].mxu0
        %v3022 = vadd.f32 0.0, %v3021
        %v3023 = vpop.f32.mrb[0].mxu0
        %3024 = vdwg.mxu0
        %3025 = vrot.lane.b32.xlu0 %v692, 112
        %v3026 = vpop.permute.xlu0 %3025
        %3027 = vrot.lane.b32.xlu0 %v697, 112
        %v3028 = vpop.permute.xlu0 %3027
        %3029 = vrot.lane.b32.xlu0 %v832, 112
        %v3030 = vpop.permute.xlu0 %3029
        %3031 = vrot.lane.b32.xlu0 %v837, 112
        %v3032 = vpop.permute.xlu0 %3031
        %v3033 = vsel %vm997, %v3026, 0
        %v3035 = vsel %vm997, %v3028, 0
        %v3037 = vsel %vm997, %v3030, 0
        %v3039 = vsel %vm997, %v3032, 0
        %3041 = vmatprep.subr.mxu0 0.0
        %3042 = vmatpush1.xpose.msra.mxu0 %v3037
        %3043 = vmatprep.subr.mxu0 0.0
        %3044 = vmatpush1.xpose.msra.mxu0 %v3039
        %3045 = vmatprep.subr.mxu0 0.0
        %3046 = vmatpush1.xpose.msra.mxu0 0.0
        %3047 = vmatprep.subr.mxu0 0.0
        %3048 = vmatpush1.xpose.msra.mxu0 0.0
        %3049 = vmatprep.subr.mxu0 0.0
        %3050 = vmatpush1.xpose.msra.mxu0 0.0
        %3051 = vmatprep.subr.mxu0 0.0
        %3052 = vmatpush1.xpose.msra.mxu0 0.0
        %3053 = vmatprep.subr.mxu0 0.0
        %3054 = vmatpush1.xpose.msra.mxu0 0.0
        %3055 = vmatprep.subr.mxu0 0.0
        %3056 = vmatpush1.xpose.msra.mxu0 0.0
        %3057 = vmatprep.subr.mxu0 0.0
        %3058 = vmatpush1.xpose.msra.mxu0 0.0
        %3059 = vmatprep.subr.mxu0 0.0
        %3060 = vmatpush1.xpose.msra.mxu0 0.0
        %3061 = vmatprep.subr.mxu0 0.0
        %3062 = vmatpush1.xpose.msra.mxu0 0.0
        %3063 = vmatprep.subr.mxu0 0.0
        %3064 = vmatpush1.xpose.msra.mxu0 0.0
        %3065 = vmatprep.subr.mxu0 0.0
        %3066 = vmatpush1.xpose.msra.mxu0 0.0
        %3067 = vmatprep.subr.mxu0 0.0
        %3068 = vmatpush1.xpose.msra.mxu0 0.0
        %3069 = vmatprep.subr.mxu0 0.0
        %3070 = vmatpush1.xpose.msra.mxu0 0.0
        %3071 = vmatprep.subr.mxu0 0.0
        %3072 = vmatpush1.xpose.msra.mxu0 0.0
        %3073 = vmatprep.subr.mxu0 0.0
        %3074 = vmatpush1.xpose.msra.mxu0 0.0
        %3075 = vmatprep.subr.mxu0 0.0
        %3076 = vmatpush1.xpose.msra.mxu0 0.0
        %3077 = vmatprep.subr.mxu0 0.0
        %3078 = vmatpush1.xpose.msra.mxu0 0.0
        %3079 = vmatprep.subr.mxu0 0.0
        %3080 = vmatpush1.xpose.msra.mxu0 0.0
        %3081 = vmatprep.subr.mxu0 0.0
        %3082 = vmatpush1.xpose.msra.mxu0 0.0
        %3083 = vmatprep.subr.mxu0 0.0
        %3084 = vmatpush1.xpose.msra.mxu0 0.0
        %3085 = vmatprep.subr.mxu0 0.0
        %3086 = vmatpush1.xpose.msra.mxu0 0.0
        %3087 = vmatprep.subr.mxu0 0.0
        %3088 = vmatpush1.xpose.msra.mxu0 0.0
        %3089 = vmatprep.subr.mxu0 0.0
        %3090 = vmatpush1.xpose.msra.mxu0 0.0
        %3091 = vmatprep.subr.mxu0 0.0
        %3092 = vmatpush1.xpose.msra.mxu0 0.0
        %3093 = vmatprep.subr.mxu0 0.0
        %3094 = vmatpush1.xpose.msra.mxu0 0.0
        %3095 = vmatprep.subr.mxu0 0.0
        %3096 = vmatpush1.xpose.msra.mxu0 0.0
        %3097 = vmatprep.subr.mxu0 0.0
        %3098 = vmatpush1.xpose.msra.mxu0 0.0
        %3099 = vmatprep.subr.mxu0 0.0
        %3100 = vmatpush1.xpose.msra.mxu0 0.0
        %3101 = vmatprep.subr.mxu0 0.0
        %3102 = vmatpush1.xpose.msra.mxu0 0.0
        %3103 = vmatprep.subr.mxu0 0.0
        %3104 = vmatpush1.xpose.msra.mxu0 0.0
        %3105 = vmatprep.mubr.f32.mxu0 0.0
        %3106 = vmatmul.mubr.f32.gmra.mrb[0].mxu0 %v3033
        %v3107 = vpop.f32.mrb[0].mxu0
        %v3108 = vadd.f32 0.0, %v3107
        %v3109 = vpop.f32.mrb[0].mxu0
        %3110 = vmatprep.mubr.f32.mxu0 0.0
        %3111 = vmatmul.mubr.f32.gmra.mrb[0].mxu0 %v3035
        %v3112 = vpop.f32.mrb[0].mxu0
        %v3113 = vadd.f32 0.0, %v3112
        %v3114 = vpop.f32.mrb[0].mxu0
        %3115 = vdwg.mxu0
        %3116 = vrot.lane.b32.xlu0 %v702, 112
        %v3117 = vpop.permute.xlu0 %3116
        %3118 = vrot.lane.b32.xlu0 %v707, 112
        %v3119 = vpop.permute.xlu0 %3118
        %3120 = vrot.lane.b32.xlu0 %v842, 112
        %v3121 = vpop.permute.xlu0 %3120
        %3122 = vrot.lane.b32.xlu0 %v847, 112
        %v3123 = vpop.permute.xlu0 %3122
        %v3124 = vsel %vm997, %v3117, 0
        %v3126 = vsel %vm997, %v3119, 0
        %v3128 = vsel %vm997, %v3121, 0
        %v3130 = vsel %vm997, %v3123, 0
        %3132 = vmatprep.subr.mxu0 0.0
        %3133 = vmatpush1.xpose.msra.mxu0 %v3128
        %3134 = vmatprep.subr.mxu0 0.0
        %3135 = vmatpush1.xpose.msra.mxu0 %v3130
        %3136 = vmatprep.subr.mxu0 0.0
        %3137 = vmatpush1.xpose.msra.mxu0 0.0
        %3138 = vmatprep.subr.mxu0 0.0
        %3139 = vmatpush1.xpose.msra.mxu0 0.0
        %3140 = vmatprep.subr.mxu0 0.0
        %3141 = vmatpush1.xpose.msra.mxu0 0.0
        %3142 = vmatprep.subr.mxu0 0.0
        %3143 = vmatpush1.xpose.msra.mxu0 0.0
        %3144 = vmatprep.subr.mxu0 0.0
        %3145 = vmatpush1.xpose.msra.mxu0 0.0
        %3146 = vmatprep.subr.mxu0 0.0
        %3147 = vmatpush1.xpose.msra.mxu0 0.0
        %3148 = vmatprep.subr.mxu0 0.0
        %3149 = vmatpush1.xpose.msra.mxu0 0.0
        %3150 = vmatprep.subr.mxu0 0.0
        %3151 = vmatpush1.xpose.msra.mxu0 0.0
        %3152 = vmatprep.subr.mxu0 0.0
        %3153 = vmatpush1.xpose.msra.mxu0 0.0
        %3154 = vmatprep.subr.mxu0 0.0
        %3155 = vmatpush1.xpose.msra.mxu0 0.0
        %3156 = vmatprep.subr.mxu0 0.0
        %3157 = vmatpush1.xpose.msra.mxu0 0.0
        %3158 = vmatprep.subr.mxu0 0.0
        %3159 = vmatpush1.xpose.msra.mxu0 0.0
        %3160 = vmatprep.subr.mxu0 0.0
        %3161 = vmatpush1.xpose.msra.mxu0 0.0
        %3162 = vmatprep.subr.mxu0 0.0
        %3163 = vmatpush1.xpose.msra.mxu0 0.0
        %3164 = vmatprep.subr.mxu0 0.0
        %3165 = vmatpush1.xpose.msra.mxu0 0.0
        %3166 = vmatprep.subr.mxu0 0.0
        %3167 = vmatpush1.xpose.msra.mxu0 0.0
        %3168 = vmatprep.subr.mxu0 0.0
        %3169 = vmatpush1.xpose.msra.mxu0 0.0
        %3170 = vmatprep.subr.mxu0 0.0
        %3171 = vmatpush1.xpose.msra.mxu0 0.0
        %3172 = vmatprep.subr.mxu0 0.0
        %3173 = vmatpush1.xpose.msra.mxu0 0.0
        %3174 = vmatprep.subr.mxu0 0.0
        %3175 = vmatpush1.xpose.msra.mxu0 0.0
        %3176 = vmatprep.subr.mxu0 0.0
        %3177 = vmatpush1.xpose.msra.mxu0 0.0
        %3178 = vmatprep.subr.mxu0 0.0
        %3179 = vmatpush1.xpose.msra.mxu0 0.0
        %3180 = vmatprep.subr.mxu0 0.0
        %3181 = vmatpush1.xpose.msra.mxu0 0.0
        %3182 = vmatprep.subr.mxu0 0.0
        %3183 = vmatpush1.xpose.msra.mxu0 0.0
        %3184 = vmatprep.subr.mxu0 0.0
        %3185 = vmatpush1.xpose.msra.mxu0 0.0
        %3186 = vmatprep.subr.mxu0 0.0
        %3187 = vmatpush1.xpose.msra.mxu0 0.0
        %3188 = vmatprep.subr.mxu0 0.0
        %3189 = vmatpush1.xpose.msra.mxu0 0.0
        %3190 = vmatprep.subr.mxu0 0.0
        %3191 = vmatpush1.xpose.msra.mxu0 0.0
        %3192 = vmatprep.subr.mxu0 0.0
        %3193 = vmatpush1.xpose.msra.mxu0 0.0
        %3194 = vmatprep.subr.mxu0 0.0
        %3195 = vmatpush1.xpose.msra.mxu0 0.0
        %3196 = vmatprep.mubr.f32.mxu0 0.0
        %3197 = vmatmul.mubr.f32.gmra.mrb[0].mxu0 %v3124
        %v3198 = vpop.f32.mrb[0].mxu0
        %v3199 = vadd.f32 0.0, %v3198
        %v3200 = vpop.f32.mrb[0].mxu0
        %3201 = vmatprep.mubr.f32.mxu0 0.0
        %3202 = vmatmul.mubr.f32.gmra.mrb[0].mxu0 %v3126
        %v3203 = vpop.f32.mrb[0].mxu0
        %v3204 = vadd.f32 0.0, %v3203
        %v3205 = vpop.f32.mrb[0].mxu0
        %3206 = vdwg.mxu0
        %v3207 = vsel %vm1346, %v2926, -inf
        %3208 = vmax.xlane.f32.xlu0 %v3207
        %v3209 = vpop.xlane.xlu0 %3208
        %v3210 = vsel %vm1346, %v2931, -inf
        %3211 = vmax.xlane.f32.xlu0 %v3210
        %v3212 = vpop.xlane.xlu0 %3211
        %v3213 = vsel %vm1346, %v3017, -inf
        %3214 = vmax.xlane.f32.xlu0 %v3213
        %v3215 = vpop.xlane.xlu0 %3214
        %v3216 = vsel %vm1346, %v3022, -inf
        %3217 = vmax.xlane.f32.xlu0 %v3216
        %v3218 = vpop.xlane.xlu0 %3217
        %v3219 = vsel %vm1346, %v3108, -inf
        %3220 = vmax.xlane.f32.xlu0 %v3219
        %v3221 = vpop.xlane.xlu0 %3220
        %v3222 = vsel %vm1346, %v3113, -inf
        %3223 = vmax.xlane.f32.xlu0 %v3222
        %v3224 = vpop.xlane.xlu0 %3223
        %v3225 = vsel %vm1346, %v3199, -inf
        %3226 = vmax.xlane.f32.xlu0 %v3225
        %v3227 = vpop.xlane.xlu0 %3226
        %v3228 = vsel %vm1346, %v3204, -inf
        %3229 = vmax.xlane.f32.xlu0 %v3228
        %v3230 = vpop.xlane.xlu0 %3229
        %v3231 = vsub.f32 %v2926, %v3209
        %v3232 = vsub.f32 %v2931, %v3212
        %v3233 = vsub.f32 %v3017, %v3215
        %v3234 = vsub.f32 %v3022, %v3218
        %v3235 = vsub.f32 %v3108, %v3221
        %v3236 = vsub.f32 %v3113, %v3224
        %v3237 = vsub.f32 %v3199, %v3227
        %v3238 = vsub.f32 %v3204, %v3230
        %v3239 = vmul.f32 %v3231, 1.442695
        %v3240 = vpow.pop %v3239
        %v3241 = vmul.f32 %v3232, 1.442695
        %v3242 = vpow.pop %v3241
        %v3243 = vmul.f32 %v3233, 1.442695
        %v3244 = vpow.pop %v3243
        %v3245 = vmul.f32 %v3234, 1.442695
        %v3246 = vpow.pop %v3245
        %v3247 = vmul.f32 %v3235, 1.442695
        %v3248 = vpow.pop %v3247
        %v3249 = vmul.f32 %v3236, 1.442695
        %v3250 = vpow.pop %v3249
        %v3251 = vmul.f32 %v3237, 1.442695
        %v3252 = vpow.pop %v3251
        %v3253 = vmul.f32 %v3238, 1.442695
        %v3254 = vpow.pop %v3253
        %v3255 = vsel %vm1346, %v3240, 0.0
        %3256 = vadd.xlane.f32.xlu0 %v3255
        %v3257 = vpop.xlane.xlu0 %3256
        %v3258 = vsel %vm1346, %v3242, 0.0
        %3259 = vadd.xlane.f32.xlu0 %v3258
        %v3260 = vpop.xlane.xlu0 %3259
        %v3261 = vsel %vm1346, %v3244, 0.0
        %3262 = vadd.xlane.f32.xlu0 %v3261
        %v3263 = vpop.xlane.xlu0 %3262
        %v3264 = vsel %vm1346, %v3246, 0.0
        %3265 = vadd.xlane.f32.xlu0 %v3264
        %v3266 = vpop.xlane.xlu0 %3265
        %v3267 = vsel %vm1346, %v3248, 0.0
        %3268 = vadd.xlane.f32.xlu0 %v3267
        %v3269 = vpop.xlane.xlu0 %3268
        %v3270 = vsel %vm1346, %v3250, 0.0
        %3271 = vadd.xlane.f32.xlu0 %v3270
        %v3272 = vpop.xlane.xlu0 %3271
        %v3273 = vsel %vm1346, %v3252, 0.0
        %3274 = vadd.xlane.f32.xlu0 %v3273
        %v3275 = vpop.xlane.xlu0 %3274
        %v3276 = vsel %vm1346, %v3254, 0.0
        %3277 = vadd.xlane.f32.xlu0 %v3276
        %v3278 = vpop.xlane.xlu0 %3277
        %v3279 = vrcp.pop %v3257
        %v3280 = vrcp.pop %v3260
        %v3281 = vrcp.pop %v3263
        %v3282 = vrcp.pop %v3266
        %v3283 = vrcp.pop %v3269
        %v3284 = vrcp.pop %v3272
        %v3285 = vrcp.pop %v3275
        %v3286 = vrcp.pop %v3278
        %v3287 = vmul.f32 %v3240, %v3279
        %v3288 = vmul.f32 %v3242, %v3280
        %v3289 = vmul.f32 %v3244, %v3281
        %v3290 = vmul.f32 %v3246, %v3282
        %v3291 = vmul.f32 %v3248, %v3283
        %v3292 = vmul.f32 %v3250, %v3284
        %v3293 = vmul.f32 %v3252, %v3285
        %v3294 = vmul.f32 %v3254, %v3286
        %3295 = vrot.lane.b32.xlu0 %v952, 112
        %v3296 = vpop.permute.xlu0 %3295
        %3297 = vrot.lane.b32.xlu0 %v957, 112
        %v3298 = vpop.permute.xlu0 %3297
        %v3302 = vsel %vm1346, %v3287, 0
        %v3305 = vsel %vm1346, %v3288, 0
        %3307 = vmatprep.subr.mxu0 0.0
        %3308 = vmatpush1.msra.mxu0 %v3296
        %3309 = vmatprep.subr.mxu0 0.0
        %3310 = vmatpush1.msra.mxu0 %v3298
        %3311 = vmatprep.subr.mxu0 0.0
        %3312 = vmatpush1.msra.mxu0 0.0
        %3313 = vmatprep.subr.mxu0 0.0
        %3314 = vmatpush1.msra.mxu0 0.0
        %3315 = vmatprep.subr.mxu0 0.0
        %3316 = vmatpush1.msra.mxu0 0.0
        %3317 = vmatprep.subr.mxu0 0.0
        %3318 = vmatpush1.msra.mxu0 0.0
        %3319 = vmatprep.subr.mxu0 0.0
        %3320 = vmatpush1.msra.mxu0 0.0
        %3321 = vmatprep.subr.mxu0 0.0
        %3322 = vmatpush1.msra.mxu0 0.0
        %3323 = vmatprep.subr.mxu0 0.0
        %3324 = vmatpush1.msra.mxu0 0.0
        %3325 = vmatprep.subr.mxu0 0.0
        %3326 = vmatpush1.msra.mxu0 0.0
        %3327 = vmatprep.subr.mxu0 0.0
        %3328 = vmatpush1.msra.mxu0 0.0
        %3329 = vmatprep.subr.mxu0 0.0
        %3330 = vmatpush1.msra.mxu0 0.0
        %3331 = vmatprep.subr.mxu0 0.0
        %3332 = vmatpush1.msra.mxu0 0.0
        %3333 = vmatprep.subr.mxu0 0.0
        %3334 = vmatpush1.msra.mxu0 0.0
        %3335 = vmatprep.subr.mxu0 0.0
        %3336 = vmatpush1.msra.mxu0 0.0
        %3337 = vmatprep.subr.mxu0 0.0
        %3338 = vmatpush1.msra.mxu0 0.0
        %3339 = vmatprep.subr.mxu0 0.0
        %3340 = vmatpush1.msra.mxu0 0.0
        %3341 = vmatprep.subr.mxu0 0.0
        %3342 = vmatpush1.msra.mxu0 0.0
        %3343 = vmatprep.subr.mxu0 0.0
        %3344 = vmatpush1.msra.mxu0 0.0
        %3345 = vmatprep.subr.mxu0 0.0
        %3346 = vmatpush1.msra.mxu0 0.0
        %3347 = vmatprep.subr.mxu0 0.0
        %3348 = vmatpush1.msra.mxu0 0.0
        %3349 = vmatprep.subr.mxu0 0.0
        %3350 = vmatpush1.msra.mxu0 0.0
        %3351 = vmatprep.subr.mxu0 0.0
        %3352 = vmatpush1.msra.mxu0 0.0
        %3353 = vmatprep.subr.mxu0 0.0
        %3354 = vmatpush1.msra.mxu0 0.0
        %3355 = vmatprep.subr.mxu0 0.0
        %3356 = vmatpush1.msra.mxu0 0.0
        %3357 = vmatprep.subr.mxu0 0.0
        %3358 = vmatpush1.msra.mxu0 0.0
        %3359 = vmatprep.subr.mxu0 0.0
        %3360 = vmatpush1.msra.mxu0 0.0
        %3361 = vmatprep.subr.mxu0 0.0
        %3362 = vmatpush1.msra.mxu0 0.0
        %3363 = vmatprep.subr.mxu0 0.0
        %3364 = vmatpush1.msra.mxu0 0.0
        %3365 = vmatprep.subr.mxu0 0.0
        %3366 = vmatpush1.msra.mxu0 0.0
        %3367 = vmatprep.subr.mxu0 0.0
        %3368 = vmatpush1.msra.mxu0 0.0
        %3369 = vmatprep.subr.mxu0 0.0
        %3370 = vmatpush1.msra.mxu0 0.0
        %3371 = vmatprep.mubr.f32.mxu0 0.0
        %3372 = vmatmul.mubr.f32.gmra.mrb[0].mxu0 %v3302
        %v3373 = vpop.f32.mrb[0].mxu0
        %v3374 = vadd.f32 0.0, %v3373
        %v3375 = vpop.f32.mrb[0].mxu0
        %3376 = vmatprep.mubr.f32.mxu0 0.0
        %3377 = vmatmul.mubr.f32.gmra.mrb[0].mxu0 %v3305
        %v3378 = vpop.f32.mrb[0].mxu0
        %v3379 = vadd.f32 0.0, %v3378
        %v3380 = vpop.f32.mrb[0].mxu0
        %3381 = vdwg.mxu0
        %3382 = vrot.lane.b32.xlu0 %v962, 112
        %v3383 = vpop.permute.xlu0 %3382
        %3384 = vrot.lane.b32.xlu0 %v967, 112
        %v3385 = vpop.permute.xlu0 %3384
        %v3389 = vsel %vm1346, %v3289, 0
        %v3392 = vsel %vm1346, %v3290, 0
        %3394 = vmatprep.subr.mxu0 0.0
        %3395 = vmatpush1.msra.mxu0 %v3383
        %3396 = vmatprep.subr.mxu0 0.0
        %3397 = vmatpush1.msra.mxu0 %v3385
        %3398 = vmatprep.subr.mxu0 0.0
        %3399 = vmatpush1.msra.mxu0 0.0
        %3400 = vmatprep.subr.mxu0 0.0
        %3401 = vmatpush1.msra.mxu0 0.0
        %3402 = vmatprep.subr.mxu0 0.0
        %3403 = vmatpush1.msra.mxu0 0.0
        %3404 = vmatprep.subr.mxu0 0.0
        %3405 = vmatpush1.msra.mxu0 0.0
        %3406 = vmatprep.subr.mxu0 0.0
        %3407 = vmatpush1.msra.mxu0 0.0
        %3408 = vmatprep.subr.mxu0 0.0
        %3409 = vmatpush1.msra.mxu0 0.0
        %3410 = vmatprep.subr.mxu0 0.0
        %3411 = vmatpush1.msra.mxu0 0.0
        %3412 = vmatprep.subr.mxu0 0.0
        %3413 = vmatpush1.msra.mxu0 0.0
        %3414 = vmatprep.subr.mxu0 0.0
        %3415 = vmatpush1.msra.mxu0 0.0
        %3416 = vmatprep.subr.mxu0 0.0
        %3417 = vmatpush1.msra.mxu0 0.0
        %3418 = vmatprep.subr.mxu0 0.0
        %3419 = vmatpush1.msra.mxu0 0.0
        %3420 = vmatprep.subr.mxu0 0.0
        %3421 = vmatpush1.msra.mxu0 0.0
        %3422 = vmatprep.subr.mxu0 0.0
        %3423 = vmatpush1.msra.mxu0 0.0
        %3424 = vmatprep.subr.mxu0 0.0
        %3425 = vmatpush1.msra.mxu0 0.0
        %3426 = vmatprep.subr.mxu0 0.0
        %3427 = vmatpush1.msra.mxu0 0.0
        %3428 = vmatprep.subr.mxu0 0.0
        %3429 = vmatpush1.msra.mxu0 0.0
        %3430 = vmatprep.subr.mxu0 0.0
        %3431 = vmatpush1.msra.mxu0 0.0
        %3432 = vmatprep.subr.mxu0 0.0
        %3433 = vmatpush1.msra.mxu0 0.0
        %3434 = vmatprep.subr.mxu0 0.0
        %3435 = vmatpush1.msra.mxu0 0.0
        %3436 = vmatprep.subr.mxu0 0.0
        %3437 = vmatpush1.msra.mxu0 0.0
        %3438 = vmatprep.subr.mxu0 0.0
        %3439 = vmatpush1.msra.mxu0 0.0
        %3440 = vmatprep.subr.mxu0 0.0
        %3441 = vmatpush1.msra.mxu0 0.0
        %3442 = vmatprep.subr.mxu0 0.0
        %3443 = vmatpush1.msra.mxu0 0.0
        %3444 = vmatprep.subr.mxu0 0.0
        %3445 = vmatpush1.msra.mxu0 0.0
        %3446 = vmatprep.subr.mxu0 0.0
        %3447 = vmatpush1.msra.mxu0 0.0
        %3448 = vmatprep.subr.mxu0 0.0
        %3449 = vmatpush1.msra.mxu0 0.0
        %3450 = vmatprep.subr.mxu0 0.0
        %3451 = vmatpush1.msra.mxu0 0.0
        %3452 = vmatprep.subr.mxu0 0.0
        %3453 = vmatpush1.msra.mxu0 0.0
        %3454 = vmatprep.subr.mxu0 0.0
        %3455 = vmatpush1.msra.mxu0 0.0
        %3456 = vmatprep.subr.mxu0 0.0
        %3457 = vmatpush1.msra.mxu0 0.0
        %3458 = vmatprep.mubr.f32.mxu0 0.0
        %3459 = vmatmul.mubr.f32.gmra.mrb[0].mxu0 %v3389
        %v3460 = vpop.f32.mrb[0].mxu0
        %v3461 = vadd.f32 0.0, %v3460
        %v3462 = vpop.f32.mrb[0].mxu0
        %3463 = vmatprep.mubr.f32.mxu0 0.0
        %3464 = vmatmul.mubr.f32.gmra.mrb[0].mxu0 %v3392
        %v3465 = vpop.f32.mrb[0].mxu0
        %v3466 = vadd.f32 0.0, %v3465
        %v3467 = vpop.f32.mrb[0].mxu0
        %3468 = vdwg.mxu0
        %3469 = vrot.lane.b32.xlu0 %v972, 112
        %v3470 = vpop.permute.xlu0 %3469
        %3471 = vrot.lane.b32.xlu0 %v977, 112
        %v3472 = vpop.permute.xlu0 %3471
        %v3476 = vsel %vm1346, %v3291, 0
        %v3479 = vsel %vm1346, %v3292, 0
        %3481 = vmatprep.subr.mxu0 0.0
        %3482 = vmatpush1.msra.mxu0 %v3470
        %3483 = vmatprep.subr.mxu0 0.0
        %3484 = vmatpush1.msra.mxu0 %v3472
        %3485 = vmatprep.subr.mxu0 0.0
        %3486 = vmatpush1.msra.mxu0 0.0
        %3487 = vmatprep.subr.mxu0 0.0
        %3488 = vmatpush1.msra.mxu0 0.0
        %3489 = vmatprep.subr.mxu0 0.0
        %3490 = vmatpush1.msra.mxu0 0.0
        %3491 = vmatprep.subr.mxu0 0.0
        %3492 = vmatpush1.msra.mxu0 0.0
        %3493 = vmatprep.subr.mxu0 0.0
        %3494 = vmatpush1.msra.mxu0 0.0
        %3495 = vmatprep.subr.mxu0 0.0
        %3496 = vmatpush1.msra.mxu0 0.0
        %3497 = vmatprep.subr.mxu0 0.0
        %3498 = vmatpush1.msra.mxu0 0.0
        %3499 = vmatprep.subr.mxu0 0.0
        %3500 = vmatpush1.msra.mxu0 0.0
        %3501 = vmatprep.subr.mxu0 0.0
        %3502 = vmatpush1.msra.mxu0 0.0
        %3503 = vmatprep.subr.mxu0 0.0
        %3504 = vmatpush1.msra.mxu0 0.0
        %3505 = vmatprep.subr.mxu0 0.0
        %3506 = vmatpush1.msra.mxu0 0.0
        %3507 = vmatprep.subr.mxu0 0.0
        %3508 = vmatpush1.msra.mxu0 0.0
        %3509 = vmatprep.subr.mxu0 0.0
        %3510 = vmatpush1.msra.mxu0 0.0
        %3511 = vmatprep.subr.mxu0 0.0
        %3512 = vmatpush1.msra.mxu0 0.0
        %3513 = vmatprep.subr.mxu0 0.0
        %3514 = vmatpush1.msra.mxu0 0.0
        %3515 = vmatprep.subr.mxu0 0.0
        %3516 = vmatpush1.msra.mxu0 0.0
        %3517 = vmatprep.subr.mxu0 0.0
        %3518 = vmatpush1.msra.mxu0 0.0
        %3519 = vmatprep.subr.mxu0 0.0
        %3520 = vmatpush1.msra.mxu0 0.0
        %3521 = vmatprep.subr.mxu0 0.0
        %3522 = vmatpush1.msra.mxu0 0.0
        %3523 = vmatprep.subr.mxu0 0.0
        %3524 = vmatpush1.msra.mxu0 0.0
        %3525 = vmatprep.subr.mxu0 0.0
        %3526 = vmatpush1.msra.mxu0 0.0
        %3527 = vmatprep.subr.mxu0 0.0
        %3528 = vmatpush1.msra.mxu0 0.0
        %3529 = vmatprep.subr.mxu0 0.0
        %3530 = vmatpush1.msra.mxu0 0.0
        %3531 = vmatprep.subr.mxu0 0.0
        %3532 = vmatpush1.msra.mxu0 0.0
        %3533 = vmatprep.subr.mxu0 0.0
        %3534 = vmatpush1.msra.mxu0 0.0
        %3535 = vmatprep.subr.mxu0 0.0
        %3536 = vmatpush1.msra.mxu0 0.0
        %3537 = vmatprep.subr.mxu0 0.0
        %3538 = vmatpush1.msra.mxu0 0.0
        %3539 = vmatprep.subr.mxu0 0.0
        %3540 = vmatpush1.msra.mxu0 0.0
        %3541 = vmatprep.subr.mxu0 0.0
        %3542 = vmatpush1.msra.mxu0 0.0
        %3543 = vmatprep.subr.mxu0 0.0
        %3544 = vmatpush1.msra.mxu0 0.0
        %3545 = vmatprep.mubr.f32.mxu0 0.0
        %3546 = vmatmul.mubr.f32.gmra.mrb[0].mxu0 %v3476
        %v3547 = vpop.f32.mrb[0].mxu0
        %v3548 = vadd.f32 0.0, %v3547
        %v3549 = vpop.f32.mrb[0].mxu0
        %3550 = vmatprep.mubr.f32.mxu0 0.0
        %3551 = vmatmul.mubr.f32.gmra.mrb[0].mxu0 %v3479
        %v3552 = vpop.f32.mrb[0].mxu0
        %v3553 = vadd.f32 0.0, %v3552
        %v3554 = vpop.f32.mrb[0].mxu0
        %3555 = vdwg.mxu0
        %3556 = vrot.lane.b32.xlu0 %v982, 112
        %v3557 = vpop.permute.xlu0 %3556
        %3558 = vrot.lane.b32.xlu0 %v987, 112
        %v3559 = vpop.permute.xlu0 %3558
        %v3563 = vsel %vm1346, %v3293, 0
        %v3566 = vsel %vm1346, %v3294, 0
        %3568 = vmatprep.subr.mxu0 0.0
        %3569 = vmatpush1.msra.mxu0 %v3557
        %3570 = vmatprep.subr.mxu0 0.0
        %3571 = vmatpush1.msra.mxu0 %v3559
        %3572 = vmatprep.subr.mxu0 0.0
        %3573 = vmatpush1.msra.mxu0 0.0
        %3574 = vmatprep.subr.mxu0 0.0
        %3575 = vmatpush1.msra.mxu0 0.0
        %3576 = vmatprep.subr.mxu0 0.0
        %3577 = vmatpush1.msra.mxu0 0.0
        %3578 = vmatprep.subr.mxu0 0.0
        %3579 = vmatpush1.msra.mxu0 0.0
        %3580 = vmatprep.subr.mxu0 0.0
        %3581 = vmatpush1.msra.mxu0 0.0
        %3582 = vmatprep.subr.mxu0 0.0
        %3583 = vmatpush1.msra.mxu0 0.0
        %3584 = vmatprep.subr.mxu0 0.0
        %3585 = vmatpush1.msra.mxu0 0.0
        %3586 = vmatprep.subr.mxu0 0.0
        %3587 = vmatpush1.msra.mxu0 0.0
        %3588 = vmatprep.subr.mxu0 0.0
        %3589 = vmatpush1.msra.mxu0 0.0
        %3590 = vmatprep.subr.mxu0 0.0
        %3591 = vmatpush1.msra.mxu0 0.0
        %3592 = vmatprep.subr.mxu0 0.0
        %3593 = vmatpush1.msra.mxu0 0.0
        %3594 = vmatprep.subr.mxu0 0.0
        %3595 = vmatpush1.msra.mxu0 0.0
        %3596 = vmatprep.subr.mxu0 0.0
        %3597 = vmatpush1.msra.mxu0 0.0
        %3598 = vmatprep.subr.mxu0 0.0
        %3599 = vmatpush1.msra.mxu0 0.0
        %3600 = vmatprep.subr.mxu0 0.0
        %3601 = vmatpush1.msra.mxu0 0.0
        %3602 = vmatprep.subr.mxu0 0.0
        %3603 = vmatpush1.msra.mxu0 0.0
        %3604 = vmatprep.subr.mxu0 0.0
        %3605 = vmatpush1.msra.mxu0 0.0
        %3606 = vmatprep.subr.mxu0 0.0
        %3607 = vmatpush1.msra.mxu0 0.0
        %3608 = vmatprep.subr.mxu0 0.0
        %3609 = vmatpush1.msra.mxu0 0.0
        %3610 = vmatprep.subr.mxu0 0.0
        %3611 = vmatpush1.msra.mxu0 0.0
        %3612 = vmatprep.subr.mxu0 0.0
        %3613 = vmatpush1.msra.mxu0 0.0
        %3614 = vmatprep.subr.mxu0 0.0
        %3615 = vmatpush1.msra.mxu0 0.0
        %3616 = vmatprep.subr.mxu0 0.0
        %3617 = vmatpush1.msra.mxu0 0.0
        %3618 = vmatprep.subr.mxu0 0.0
        %3619 = vmatpush1.msra.mxu0 0.0
        %3620 = vmatprep.subr.mxu0 0.0
        %3621 = vmatpush1.msra.mxu0 0.0
        %3622 = vmatprep.subr.mxu0 0.0
        %3623 = vmatpush1.msra.mxu0 0.0
        %3624 = vmatprep.subr.mxu0 0.0
        %3625 = vmatpush1.msra.mxu0 0.0
        %3626 = vmatprep.subr.mxu0 0.0
        %3627 = vmatpush1.msra.mxu0 0.0
        %3628 = vmatprep.subr.mxu0 0.0
        %3629 = vmatpush1.msra.mxu0 0.0
        %3630 = vmatprep.subr.mxu0 0.0
        %3631 = vmatpush1.msra.mxu0 0.0
        %3632 = vmatprep.mubr.f32.mxu0 0.0
        %3633 = vmatmul.mubr.f32.gmra.mrb[0].mxu0 %v3563
        %v3634 = vpop.f32.mrb[0].mxu0
        %v3635 = vadd.f32 0.0, %v3634
        %v3636 = vpop.f32.mrb[0].mxu0
        %3637 = vmatprep.mubr.f32.mxu0 0.0
        %3638 = vmatmul.mubr.f32.gmra.mrb[0].mxu0 %v3566
        %v3639 = vpop.f32.mrb[0].mxu0
        %v3640 = vadd.f32 0.0, %v3639
        %v3641 = vpop.f32.mrb[0].mxu0
        %3642 = vdwg.mxu0
        %v3643 = vld [vmem:[%s9 + $0x10] sm:$0xff]
        %v3645 = vsel %vm997, %v3374, 0
        %v3648 = vsel %vm997, %v3379, 0
        %v3651 = vsel %vm997, %v3461, 0
        %v3654 = vsel %vm997, %v3466, 0
        %v3657 = vsel %vm997, %v3548, 0
        %v3660 = vsel %vm997, %v3553, 0
        %v3663 = vsel %vm997, %v3635, 0
        %v3666 = vsel %vm997, %v3640, 0
        %3668 = vmatprep.subr.mxu0 0.0
        %3669 = vmatpush1.msra.mxu0 %v3643
        %3670 = vmatprep.subr.mxu0 0.0
        %3671 = vmatpush1.msra.mxu0 0.0
        %3672 = vmatprep.subr.mxu0 0.0
        %3673 = vmatpush1.msra.mxu0 0.0
        %3674 = vmatprep.subr.mxu0 0.0
        %3675 = vmatpush1.msra.mxu0 0.0
        %3676 = vmatprep.subr.mxu0 0.0
        %3677 = vmatpush1.msra.mxu0 0.0
        %3678 = vmatprep.subr.mxu0 0.0
        %3679 = vmatpush1.msra.mxu0 0.0
        %3680 = vmatprep.subr.mxu0 0.0
        %3681 = vmatpush1.msra.mxu0 0.0
        %3682 = vmatprep.subr.mxu0 0.0
        %3683 = vmatpush1.msra.mxu0 0.0
        %3684 = vmatprep.subr.mxu0 0.0
        %3685 = vmatpush1.msra.mxu0 0.0
        %3686 = vmatprep.subr.mxu0 0.0
        %3687 = vmatpush1.msra.mxu0 0.0
        %3688 = vmatprep.subr.mxu0 0.0
        %3689 = vmatpush1.msra.mxu0 0.0
        %3690 = vmatprep.subr.mxu0 0.0
        %3691 = vmatpush1.msra.mxu0 0.0
        %3692 = vmatprep.subr.mxu0 0.0
        %3693 = vmatpush1.msra.mxu0 0.0
        %3694 = vmatprep.subr.mxu0 0.0
        %3695 = vmatpush1.msra.mxu0 0.0
        %3696 = vmatprep.subr.mxu0 0.0
        %3697 = vmatpush1.msra.mxu0 0.0
        %3698 = vmatprep.subr.mxu0 0.0
        %3699 = vmatpush1.msra.mxu0 0.0
        %3700 = vmatprep.subr.mxu0 0.0
        %3701 = vmatpush1.msra.mxu0 0.0
        %3702 = vmatprep.subr.mxu0 0.0
        %3703 = vmatpush1.msra.mxu0 0.0
        %3704 = vmatprep.subr.mxu0 0.0
        %3705 = vmatpush1.msra.mxu0 0.0
        %3706 = vmatprep.subr.mxu0 0.0
        %3707 = vmatpush1.msra.mxu0 0.0
        %3708 = vmatprep.subr.mxu0 0.0
        %3709 = vmatpush1.msra.mxu0 0.0
        %3710 = vmatprep.subr.mxu0 0.0
        %3711 = vmatpush1.msra.mxu0 0.0
        %3712 = vmatprep.subr.mxu0 0.0
        %3713 = vmatpush1.msra.mxu0 0.0
        %3714 = vmatprep.subr.mxu0 0.0
        %3715 = vmatpush1.msra.mxu0 0.0
        %3716 = vmatprep.subr.mxu0 0.0
        %3717 = vmatpush1.msra.mxu0 0.0
        %3718 = vmatprep.subr.mxu0 0.0
        %3719 = vmatpush1.msra.mxu0 0.0
        %3720 = vmatprep.subr.mxu0 0.0
        %3721 = vmatpush1.msra.mxu0 0.0
        %3722 = vmatprep.subr.mxu0 0.0
        %3723 = vmatpush1.msra.mxu0 0.0
        %3724 = vmatprep.subr.mxu0 0.0
        %3725 = vmatpush1.msra.mxu0 0.0
        %3726 = vmatprep.subr.mxu0 0.0
        %3727 = vmatpush1.msra.mxu0 0.0
        %3728 = vmatprep.subr.mxu0 0.0
        %3729 = vmatpush1.msra.mxu0 0.0
        %3730 = vmatprep.subr.mxu0 0.0
        %3731 = vmatpush1.msra.mxu0 0.0
        %3732 = vmatprep.mubr.f32.mxu0 0.0
        %3733 = vmatmul.mubr.f32.gmra.mrb[0].mxu0 %v3645
        %v3734 = vpop.f32.mrb[0].mxu0
        %v3735 = vadd.f32 0.0, %v3734
        %v3736 = vpop.f32.mrb[0].mxu0
        %3737 = vmatprep.mubr.f32.mxu0 0.0
        %3738 = vmatmul.mubr.f32.gmra.mrb[0].mxu0 %v3648
        %v3739 = vpop.f32.mrb[0].mxu0
        %v3740 = vadd.f32 0.0, %v3739
        %v3741 = vpop.f32.mrb[0].mxu0
        %3742 = vmatprep.mubr.f32.mxu0 0.0
        %3743 = vmatmul.mubr.f32.gmra.mrb[0].mxu0 %v3651
        %v3744 = vpop.f32.mrb[0].mxu0
        %v3745 = vadd.f32 0.0, %v3744
        %v3746 = vpop.f32.mrb[0].mxu0
        %3747 = vmatprep.mubr.f32.mxu0 0.0
        %3748 = vmatmul.mubr.f32.gmra.mrb[0].mxu0 %v3654
        %v3749 = vpop.f32.mrb[0].mxu0
        %v3750 = vadd.f32 0.0, %v3749
        %v3751 = vpop.f32.mrb[0].mxu0
        %3752 = vmatprep.mubr.f32.mxu0 0.0
        %3753 = vmatmul.mubr.f32.gmra.mrb[0].mxu0 %v3657
        %v3754 = vpop.f32.mrb[0].mxu0
        %v3755 = vadd.f32 0.0, %v3754
        %v3756 = vpop.f32.mrb[0].mxu0
        %3757 = vmatprep.mubr.f32.mxu0 0.0
        %3758 = vmatmul.mubr.f32.gmra.mrb[0].mxu0 %v3660
        %v3759 = vpop.f32.mrb[0].mxu0
        %v3760 = vadd.f32 0.0, %v3759
        %v3761 = vpop.f32.mrb[0].mxu0
        %3762 = vmatprep.mubr.f32.mxu0 0.0
        %3763 = vmatmul.mubr.f32.gmra.mrb[0].mxu0 %v3663
        %v3764 = vpop.f32.mrb[0].mxu0
        %v3765 = vadd.f32 0.0, %v3764
        %v3766 = vpop.f32.mrb[0].mxu0
        %3767 = vmatprep.mubr.f32.mxu0 0.0
        %3768 = vmatmul.mubr.f32.gmra.mrb[0].mxu0 %v3666
        %v3769 = vpop.f32.mrb[0].mxu0
        %v3770 = vadd.f32 0.0, %v3769
        %v3771 = vpop.f32.mrb[0].mxu0
        %3772 = vdwg.mxu0
        %v3773 = vadd.f32 %v2835, %v3735
        %v3774 = vadd.f32 %v2836, %v3740
        %v3775 = vadd.f32 %v2837, %v3745
        %v3776 = vadd.f32 %v2838, %v3750
        %v3777 = vadd.f32 %v2839, %v3755
        %v3778 = vadd.f32 %v2840, %v3760
        %v3779 = vadd.f32 %v2841, %v3765
        %v3780 = vadd.f32 %v2842, %v3770
        %3781 = vrot.lane.b32.xlu0 %v672, 104
        %v3782 = vpop.permute.xlu0 %3781
        %3783 = vrot.lane.b32.xlu0 %v677, 104
        %v3784 = vpop.permute.xlu0 %3783
        %3785 = vrot.lane.b32.xlu0 %v812, 104
        %v3786 = vpop.permute.xlu0 %3785
        %3787 = vrot.lane.b32.xlu0 %v817, 104
        %v3788 = vpop.permute.xlu0 %3787
        %v3789 = vsel %vm997, %v3782, 0
        %v3791 = vsel %vm997, %v3784, 0
        %v3793 = vsel %vm997, %v3786, 0
        %v3795 = vsel %vm997, %v3788, 0
        %3797 = vmatprep.subr.mxu0 0.0
        %3798 = vmatpush1.xpose.msra.mxu0 %v3793
        %3799 = vmatprep.subr.mxu0 0.0
        %3800 = vmatpush1.xpose.msra.mxu0 %v3795
        %3801 = vmatprep.subr.mxu0 0.0
        %3802 = vmatpush1.xpose.msra.mxu0 0.0
        %3803 = vmatprep.subr.mxu0 0.0
        %3804 = vmatpush1.xpose.msra.mxu0 0.0
        %3805 = vmatprep.subr.mxu0 0.0
        %3806 = vmatpush1.xpose.msra.mxu0 0.0
        %3807 = vmatprep.subr.mxu0 0.0
        %3808 = vmatpush1.xpose.msra.mxu0 0.0
        %3809 = vmatprep.subr.mxu0 0.0
        %3810 = vmatpush1.xpose.msra.mxu0 0.0
        %3811 = vmatprep.subr.mxu0 0.0
        %3812 = vmatpush1.xpose.msra.mxu0 0.0
        %3813 = vmatprep.subr.mxu0 0.0
        %3814 = vmatpush1.xpose.msra.mxu0 0.0
        %3815 = vmatprep.subr.mxu0 0.0
        %3816 = vmatpush1.xpose.msra.mxu0 0.0
        %3817 = vmatprep.subr.mxu0 0.0
        %3818 = vmatpush1.xpose.msra.mxu0 0.0
        %3819 = vmatprep.subr.mxu0 0.0
        %3820 = vmatpush1.xpose.msra.mxu0 0.0
        %3821 = vmatprep.subr.mxu0 0.0
        %3822 = vmatpush1.xpose.msra.mxu0 0.0
        %3823 = vmatprep.subr.mxu0 0.0
        %3824 = vmatpush1.xpose.msra.mxu0 0.0
        %3825 = vmatprep.subr.mxu0 0.0
        %3826 = vmatpush1.xpose.msra.mxu0 0.0
        %3827 = vmatprep.subr.mxu0 0.0
        %3828 = vmatpush1.xpose.msra.mxu0 0.0
        %3829 = vmatprep.subr.mxu0 0.0
        %3830 = vmatpush1.xpose.msra.mxu0 0.0
        %3831 = vmatprep.subr.mxu0 0.0
        %3832 = vmatpush1.xpose.msra.mxu0 0.0
        %3833 = vmatprep.subr.mxu0 0.0
        %3834 = vmatpush1.xpose.msra.mxu0 0.0
        %3835 = vmatprep.subr.mxu0 0.0
        %3836 = vmatpush1.xpose.msra.mxu0 0.0
        %3837 = vmatprep.subr.mxu0 0.0
        %3838 = vmatpush1.xpose.msra.mxu0 0.0
        %3839 = vmatprep.subr.mxu0 0.0
        %3840 = vmatpush1.xpose.msra.mxu0 0.0
        %3841 = vmatprep.subr.mxu0 0.0
        %3842 = vmatpush1.xpose.msra.mxu0 0.0
        %3843 = vmatprep.subr.mxu0 0.0
        %3844 = vmatpush1.xpose.msra.mxu0 0.0
        %3845 = vmatprep.subr.mxu0 0.0
        %3846 = vmatpush1.xpose.msra.mxu0 0.0
        %3847 = vmatprep.subr.mxu0 0.0
        %3848 = vmatpush1.xpose.msra.mxu0 0.0
        %3849 = vmatprep.subr.mxu0 0.0
        %3850 = vmatpush1.xpose.msra.mxu0 0.0
        %3851 = vmatprep.subr.mxu0 0.0
        %3852 = vmatpush1.xpose.msra.mxu0 0.0
        %3853 = vmatprep.subr.mxu0 0.0
        %3854 = vmatpush1.xpose.msra.mxu0 0.0
        %3855 = vmatprep.subr.mxu0 0.0
        %3856 = vmatpush1.xpose.msra.mxu0 0.0
        %3857 = vmatprep.subr.mxu0 0.0
        %3858 = vmatpush1.xpose.msra.mxu0 0.0
        %3859 = vmatprep.subr.mxu0 0.0
        %3860 = vmatpush1.xpose.msra.mxu0 0.0
        %3861 = vmatprep.mubr.f32.mxu0 0.0
        %3862 = vmatmul.mubr.f32.gmra.mrb[0].mxu0 %v3789
        %v3863 = vpop.f32.mrb[0].mxu0
        %v3864 = vadd.f32 0.0, %v3863
        %v3865 = vpop.f32.mrb[0].mxu0
        %3866 = vmatprep.mubr.f32.mxu0 0.0
        %3867 = vmatmul.mubr.f32.gmra.mrb[0].mxu0 %v3791
        %v3868 = vpop.f32.mrb[0].mxu0
        %v3869 = vadd.f32 0.0, %v3868
        %v3870 = vpop.f32.mrb[0].mxu0
        %3871 = vdwg.mxu0
        %3872 = vrot.lane.b32.xlu0 %v682, 104
        %v3873 = vpop.permute.xlu0 %3872
        %3874 = vrot.lane.b32.xlu0 %v687, 104
        %v3875 = vpop.permute.xlu0 %3874
        %3876 = vrot.lane.b32.xlu0 %v822, 104
        %v3877 = vpop.permute.xlu0 %3876
        %3878 = vrot.lane.b32.xlu0 %v827, 104
        %v3879 = vpop.permute.xlu0 %3878
        %v3880 = vsel %vm997, %v3873, 0
        %v3882 = vsel %vm997, %v3875, 0
        %v3884 = vsel %vm997, %v3877, 0
        %v3886 = vsel %vm997, %v3879, 0
        %3888 = vmatprep.subr.mxu0 0.0
        %3889 = vmatpush1.xpose.msra.mxu0 %v3884
        %3890 = vmatprep.subr.mxu0 0.0
        %3891 = vmatpush1.xpose.msra.mxu0 %v3886
        %3892 = vmatprep.subr.mxu0 0.0
        %3893 = vmatpush1.xpose.msra.mxu0 0.0
        %3894 = vmatprep.subr.mxu0 0.0
        %3895 = vmatpush1.xpose.msra.mxu0 0.0
        %3896 = vmatprep.subr.mxu0 0.0
        %3897 = vmatpush1.xpose.msra.mxu0 0.0
        %3898 = vmatprep.subr.mxu0 0.0
        %3899 = vmatpush1.xpose.msra.mxu0 0.0
        %3900 = vmatprep.subr.mxu0 0.0
        %3901 = vmatpush1.xpose.msra.mxu0 0.0
        %3902 = vmatprep.subr.mxu0 0.0
        %3903 = vmatpush1.xpose.msra.mxu0 0.0
        %3904 = vmatprep.subr.mxu0 0.0
        %3905 = vmatpush1.xpose.msra.mxu0 0.0
        %3906 = vmatprep.subr.mxu0 0.0
        %3907 = vmatpush1.xpose.msra.mxu0 0.0
        %3908 = vmatprep.subr.mxu0 0.0
        %3909 = vmatpush1.xpose.msra.mxu0 0.0
        %3910 = vmatprep.subr.mxu0 0.0
        %3911 = vmatpush1.xpose.msra.mxu0 0.0
        %3912 = vmatprep.subr.mxu0 0.0
        %3913 = vmatpush1.xpose.msra.mxu0 0.0
        %3914 = vmatprep.subr.mxu0 0.0
        %3915 = vmatpush1.xpose.msra.mxu0 0.0
        %3916 = vmatprep.subr.mxu0 0.0
        %3917 = vmatpush1.xpose.msra.mxu0 0.0
        %3918 = vmatprep.subr.mxu0 0.0
        %3919 = vmatpush1.xpose.msra.mxu0 0.0
        %3920 = vmatprep.subr.mxu0 0.0
        %3921 = vmatpush1.xpose.msra.mxu0 0.0
        %3922 = vmatprep.subr.mxu0 0.0
        %3923 = vmatpush1.xpose.msra.mxu0 0.0
        %3924 = vmatprep.subr.mxu0 0.0
        %3925 = vmatpush1.xpose.msra.mxu0 0.0
        %3926 = vmatprep.subr.mxu0 0.0
        %3927 = vmatpush1.xpose.msra.mxu0 0.0
        %3928 = vmatprep.subr.mxu0 0.0
        %3929 = vmatpush1.xpose.msra.mxu0 0.0
        %3930 = vmatprep.subr.mxu0 0.0
        %3931 = vmatpush1.xpose.msra.mxu0 0.0
        %3932 = vmatprep.subr.mxu0 0.0
        %3933 = vmatpush1.xpose.msra.mxu0 0.0
        %3934 = vmatprep.subr.mxu0 0.0
        %3935 = vmatpush1.xpose.msra.mxu0 0.0
        %3936 = vmatprep.subr.mxu0 0.0
        %3937 = vmatpush1.xpose.msra.mxu0 0.0
        %3938 = vmatprep.subr.mxu0 0.0
        %3939 = vmatpush1.xpose.msra.mxu0 0.0
        %3940 = vmatprep.subr.mxu0 0.0
        %3941 = vmatpush1.xpose.msra.mxu0 0.0
        %3942 = vmatprep.subr.mxu0 0.0
        %3943 = vmatpush1.xpose.msra.mxu0 0.0
        %3944 = vmatprep.subr.mxu0 0.0
        %3945 = vmatpush1.xpose.msra.mxu0 0.0
        %3946 = vmatprep.subr.mxu0 0.0
        %3947 = vmatpush1.xpose.msra.mxu0 0.0
        %3948 = vmatprep.subr.mxu0 0.0
        %3949 = vmatpush1.xpose.msra.mxu0 0.0
        %3950 = vmatprep.subr.mxu0 0.0
        %3951 = vmatpush1.xpose.msra.mxu0 0.0
        %3952 = vmatprep.mubr.f32.mxu0 0.0
        %3953 = vmatmul.mubr.f32.gmra.mrb[0].mxu0 %v3880
        %v3954 = vpop.f32.mrb[0].mxu0
        %v3955 = vadd.f32 0.0, %v3954
        %v3956 = vpop.f32.mrb[0].mxu0
        %3957 = vmatprep.mubr.f32.mxu0 0.0
        %3958 = vmatmul.mubr.f32.gmra.mrb[0].mxu0 %v3882
        %v3959 = vpop.f32.mrb[0].mxu0
        %v3960 = vadd.f32 0.0, %v3959
        %v3961 = vpop.f32.mrb[0].mxu0
        %3962 = vdwg.mxu0
        %3963 = vrot.lane.b32.xlu0 %v692, 104
        %v3964 = vpop.permute.xlu0 %3963
        %3965 = vrot.lane.b32.xlu0 %v697, 104
        %v3966 = vpop.permute.xlu0 %3965
        %3967 = vrot.lane.b32.xlu0 %v832, 104
        %v3968 = vpop.permute.xlu0 %3967
        %3969 = vrot.lane.b32.xlu0 %v837, 104
        %v3970 = vpop.permute.xlu0 %3969
        %v3971 = vsel %vm997, %v3964, 0
        %v3973 = vsel %vm997, %v3966, 0
        %v3975 = vsel %vm997, %v3968, 0
        %v3977 = vsel %vm997, %v3970, 0
        %3979 = vmatprep.subr.mxu0 0.0
        %3980 = vmatpush1.xpose.msra.mxu0 %v3975
        %3981 = vmatprep.subr.mxu0 0.0
        %3982 = vmatpush1.xpose.msra.mxu0 %v3977
        %3983 = vmatprep.subr.mxu0 0.0
        %3984 = vmatpush1.xpose.msra.mxu0 0.0
        %3985 = vmatprep.subr.mxu0 0.0
        %3986 = vmatpush1.xpose.msra.mxu0 0.0
        %3987 = vmatprep.subr.mxu0 0.0
        %3988 = vmatpush1.xpose.msra.mxu0 0.0
        %3989 = vmatprep.subr.mxu0 0.0
        %3990 = vmatpush1.xpose.msra.mxu0 0.0
        %3991 = vmatprep.subr.mxu0 0.0
        %3992 = vmatpush1.xpose.msra.mxu0 0.0
        %3993 = vmatprep.subr.mxu0 0.0
        %3994 = vmatpush1.xpose.msra.mxu0 0.0
        %3995 = vmatprep.subr.mxu0 0.0
        %3996 = vmatpush1.xpose.msra.mxu0 0.0
        %3997 = vmatprep.subr.mxu0 0.0
        %3998 = vmatpush1.xpose.msra.mxu0 0.0
        %3999 = vmatprep.subr.mxu0 0.0
        %4000 = vmatpush1.xpose.msra.mxu0 0.0
        %4001 = vmatprep.subr.mxu0 0.0
        %4002 = vmatpush1.xpose.msra.mxu0 0.0
        %4003 = vmatprep.subr.mxu0 0.0
        %4004 = vmatpush1.xpose.msra.mxu0 0.0
        %4005 = vmatprep.subr.mxu0 0.0
        %4006 = vmatpush1.xpose.msra.mxu0 0.0
        %4007 = vmatprep.subr.mxu0 0.0
        %4008 = vmatpush1.xpose.msra.mxu0 0.0
        %4009 = vmatprep.subr.mxu0 0.0
        %4010 = vmatpush1.xpose.msra.mxu0 0.0
        %4011 = vmatprep.subr.mxu0 0.0
        %4012 = vmatpush1.xpose.msra.mxu0 0.0
        %4013 = vmatprep.subr.mxu0 0.0
        %4014 = vmatpush1.xpose.msra.mxu0 0.0
        %4015 = vmatprep.subr.mxu0 0.0
        %4016 = vmatpush1.xpose.msra.mxu0 0.0
        %4017 = vmatprep.subr.mxu0 0.0
        %4018 = vmatpush1.xpose.msra.mxu0 0.0
        %4019 = vmatprep.subr.mxu0 0.0
        %4020 = vmatpush1.xpose.msra.mxu0 0.0
        %4021 = vmatprep.subr.mxu0 0.0
        %4022 = vmatpush1.xpose.msra.mxu0 0.0
        %4023 = vmatprep.subr.mxu0 0.0
        %4024 = vmatpush1.xpose.msra.mxu0 0.0
        %4025 = vmatprep.subr.mxu0 0.0
        %4026 = vmatpush1.xpose.msra.mxu0 0.0
        %4027 = vmatprep.subr.mxu0 0.0
        %4028 = vmatpush1.xpose.msra.mxu0 0.0
        %4029 = vmatprep.subr.mxu0 0.0
        %4030 = vmatpush1.xpose.msra.mxu0 0.0
        %4031 = vmatprep.subr.mxu0 0.0
        %4032 = vmatpush1.xpose.msra.mxu0 0.0
        %4033 = vmatprep.subr.mxu0 0.0
        %4034 = vmatpush1.xpose.msra.mxu0 0.0
        %4035 = vmatprep.subr.mxu0 0.0
        %4036 = vmatpush1.xpose.msra.mxu0 0.0
        %4037 = vmatprep.subr.mxu0 0.0
        %4038 = vmatpush1.xpose.msra.mxu0 0.0
        %4039 = vmatprep.subr.mxu0 0.0
        %4040 = vmatpush1.xpose.msra.mxu0 0.0
        %4041 = vmatprep.subr.mxu0 0.0
        %4042 = vmatpush1.xpose.msra.mxu0 0.0
        %4043 = vmatprep.mubr.f32.mxu0 0.0
        %4044 = vmatmul.mubr.f32.gmra.mrb[0].mxu0 %v3971
        %v4045 = vpop.f32.mrb[0].mxu0
        %v4046 = vadd.f32 0.0, %v4045
        %v4047 = vpop.f32.mrb[0].mxu0
        %4048 = vmatprep.mubr.f32.mxu0 0.0
        %4049 = vmatmul.mubr.f32.gmra.mrb[0].mxu0 %v3973
        %v4050 = vpop.f32.mrb[0].mxu0
        %v4051 = vadd.f32 0.0, %v4050
        %v4052 = vpop.f32.mrb[0].mxu0
        %4053 = vdwg.mxu0
        %4054 = vrot.lane.b32.xlu0 %v702, 104
        %v4055 = vpop.permute.xlu0 %4054
        %4056 = vrot.lane.b32.xlu0 %v707, 104
        %v4057 = vpop.permute.xlu0 %4056
        %4058 = vrot.lane.b32.xlu0 %v842, 104
        %v4059 = vpop.permute.xlu0 %4058
        %4060 = vrot.lane.b32.xlu0 %v847, 104
        %v4061 = vpop.permute.xlu0 %4060
        %v4062 = vsel %vm997, %v4055, 0
        %v4064 = vsel %vm997, %v4057, 0
        %v4066 = vsel %vm997, %v4059, 0
        %v4068 = vsel %vm997, %v4061, 0
        %4070 = vmatprep.subr.mxu0 0.0
        %4071 = vmatpush1.xpose.msra.mxu0 %v4066
        %4072 = vmatprep.subr.mxu0 0.0
        %4073 = vmatpush1.xpose.msra.mxu0 %v4068
        %4074 = vmatprep.subr.mxu0 0.0
        %4075 = vmatpush1.xpose.msra.mxu0 0.0
        %4076 = vmatprep.subr.mxu0 0.0
        %4077 = vmatpush1.xpose.msra.mxu0 0.0
        %4078 = vmatprep.subr.mxu0 0.0
        %4079 = vmatpush1.xpose.msra.mxu0 0.0
        %4080 = vmatprep.subr.mxu0 0.0
        %4081 = vmatpush1.xpose.msra.mxu0 0.0
        %4082 = vmatprep.subr.mxu0 0.0
        %4083 = vmatpush1.xpose.msra.mxu0 0.0
        %4084 = vmatprep.subr.mxu0 0.0
        %4085 = vmatpush1.xpose.msra.mxu0 0.0
        %4086 = vmatprep.subr.mxu0 0.0
        %4087 = vmatpush1.xpose.msra.mxu0 0.0
        %4088 = vmatprep.subr.mxu0 0.0
        %4089 = vmatpush1.xpose.msra.mxu0 0.0
        %4090 = vmatprep.subr.mxu0 0.0
        %4091 = vmatpush1.xpose.msra.mxu0 0.0
        %4092 = vmatprep.subr.mxu0 0.0
        %4093 = vmatpush1.xpose.msra.mxu0 0.0
        %4094 = vmatprep.subr.mxu0 0.0
        %4095 = vmatpush1.xpose.msra.mxu0 0.0
        %4096 = vmatprep.subr.mxu0 0.0
        %4097 = vmatpush1.xpose.msra.mxu0 0.0
        %4098 = vmatprep.subr.mxu0 0.0
        %4099 = vmatpush1.xpose.msra.mxu0 0.0
        %4100 = vmatprep.subr.mxu0 0.0
        %4101 = vmatpush1.xpose.msra.mxu0 0.0
        %4102 = vmatprep.subr.mxu0 0.0
        %4103 = vmatpush1.xpose.msra.mxu0 0.0
        %4104 = vmatprep.subr.mxu0 0.0
        %4105 = vmatpush1.xpose.msra.mxu0 0.0
        %4106 = vmatprep.subr.mxu0 0.0
        %4107 = vmatpush1.xpose.msra.mxu0 0.0
        %4108 = vmatprep.subr.mxu0 0.0
        %4109 = vmatpush1.xpose.msra.mxu0 0.0
        %4110 = vmatprep.subr.mxu0 0.0
        %4111 = vmatpush1.xpose.msra.mxu0 0.0
        %4112 = vmatprep.subr.mxu0 0.0
        %4113 = vmatpush1.xpose.msra.mxu0 0.0
        %4114 = vmatprep.subr.mxu0 0.0
        %4115 = vmatpush1.xpose.msra.mxu0 0.0
        %4116 = vmatprep.subr.mxu0 0.0
        %4117 = vmatpush1.xpose.msra.mxu0 0.0
        %4118 = vmatprep.subr.mxu0 0.0
        %4119 = vmatpush1.xpose.msra.mxu0 0.0
        %4120 = vmatprep.subr.mxu0 0.0
        %4121 = vmatpush1.xpose.msra.mxu0 0.0
        %4122 = vmatprep.subr.mxu0 0.0
        %4123 = vmatpush1.xpose.msra.mxu0 0.0
        %4124 = vmatprep.subr.mxu0 0.0
        %4125 = vmatpush1.xpose.msra.mxu0 0.0
        %4126 = vmatprep.subr.mxu0 0.0
        %4127 = vmatpush1.xpose.msra.mxu0 0.0
        %4128 = vmatprep.subr.mxu0 0.0
        %4129 = vmatpush1.xpose.msra.mxu0 0.0
        %4130 = vmatprep.subr.mxu0 0.0
        %4131 = vmatpush1.xpose.msra.mxu0 0.0
        %4132 = vmatprep.subr.mxu0 0.0
        %4133 = vmatpush1.xpose.msra.mxu0 0.0
        %4134 = vmatprep.mubr.f32.mxu0 0.0
        %4135 = vmatmul.mubr.f32.gmra.mrb[0].mxu0 %v4062
        %v4136 = vpop.f32.mrb[0].mxu0
        %v4137 = vadd.f32 0.0, %v4136
        %v4138 = vpop.f32.mrb[0].mxu0
        %4139 = vmatprep.mubr.f32.mxu0 0.0
        %4140 = vmatmul.mubr.f32.gmra.mrb[0].mxu0 %v4064
        %v4141 = vpop.f32.mrb[0].mxu0
        %v4142 = vadd.f32 0.0, %v4141
        %v4143 = vpop.f32.mrb[0].mxu0
        %4144 = vdwg.mxu0
        %v4145 = vsel %vm1346, %v3864, -inf
        %4146 = vmax.xlane.f32.xlu0 %v4145
        %v4147 = vpop.xlane.xlu0 %4146
        %v4148 = vsel %vm1346, %v3869, -inf
        %4149 = vmax.xlane.f32.xlu0 %v4148
        %v4150 = vpop.xlane.xlu0 %4149
        %v4151 = vsel %vm1346, %v3955, -inf
        %4152 = vmax.xlane.f32.xlu0 %v4151
        %v4153 = vpop.xlane.xlu0 %4152
        %v4154 = vsel %vm1346, %v3960, -inf
        %4155 = vmax.xlane.f32.xlu0 %v4154
        %v4156 = vpop.xlane.xlu0 %4155
        %v4157 = vsel %vm1346, %v4046, -inf
        %4158 = vmax.xlane.f32.xlu0 %v4157
        %v4159 = vpop.xlane.xlu0 %4158
        %v4160 = vsel %vm1346, %v4051, -inf
        %4161 = vmax.xlane.f32.xlu0 %v4160
        %v4162 = vpop.xlane.xlu0 %4161
        %v4163 = vsel %vm1346, %v4137, -inf
        %4164 = vmax.xlane.f32.xlu0 %v4163
        %v4165 = vpop.xlane.xlu0 %4164
        %v4166 = vsel %vm1346, %v4142, -inf
        %4167 = vmax.xlane.f32.xlu0 %v4166
        %v4168 = vpop.xlane.xlu0 %4167
        %v4169 = vsub.f32 %v3864, %v4147
        %v4170 = vsub.f32 %v3869, %v4150
        %v4171 = vsub.f32 %v3955, %v4153
        %v4172 = vsub.f32 %v3960, %v4156
        %v4173 = vsub.f32 %v4046, %v4159
        %v4174 = vsub.f32 %v4051, %v4162
        %v4175 = vsub.f32 %v4137, %v4165
        %v4176 = vsub.f32 %v4142, %v4168
        %v4177 = vmul.f32 %v4169, 1.442695
        %v4178 = vpow.pop %v4177
        %v4179 = vmul.f32 %v4170, 1.442695
        %v4180 = vpow.pop %v4179
        %v4181 = vmul.f32 %v4171, 1.442695
        %v4182 = vpow.pop %v4181
        %v4183 = vmul.f32 %v4172, 1.442695
        %v4184 = vpow.pop %v4183
        %v4185 = vmul.f32 %v4173, 1.442695
        %v4186 = vpow.pop %v4185
        %v4187 = vmul.f32 %v4174, 1.442695
        %v4188 = vpow.pop %v4187
        %v4189 = vmul.f32 %v4175, 1.442695
        %v4190 = vpow.pop %v4189
        %v4191 = vmul.f32 %v4176, 1.442695
        %v4192 = vpow.pop %v4191
        %v4193 = vsel %vm1346, %v4178, 0.0
        %4194 = vadd.xlane.f32.xlu0 %v4193
        %v4195 = vpop.xlane.xlu0 %4194
        %v4196 = vsel %vm1346, %v4180, 0.0
        %4197 = vadd.xlane.f32.xlu0 %v4196
        %v4198 = vpop.xlane.xlu0 %4197
        %v4199 = vsel %vm1346, %v4182, 0.0
        %4200 = vadd.xlane.f32.xlu0 %v4199
        %v4201 = vpop.xlane.xlu0 %4200
        %v4202 = vsel %vm1346, %v4184, 0.0
        %4203 = vadd.xlane.f32.xlu0 %v4202
        %v4204 = vpop.xlane.xlu0 %4203
        %v4205 = vsel %vm1346, %v4186, 0.0
        %4206 = vadd.xlane.f32.xlu0 %v4205
        %v4207 = vpop.xlane.xlu0 %4206
        %v4208 = vsel %vm1346, %v4188, 0.0
        %4209 = vadd.xlane.f32.xlu0 %v4208
        %v4210 = vpop.xlane.xlu0 %4209
        %v4211 = vsel %vm1346, %v4190, 0.0
        %4212 = vadd.xlane.f32.xlu0 %v4211
        %v4213 = vpop.xlane.xlu0 %4212
        %v4214 = vsel %vm1346, %v4192, 0.0
        %4215 = vadd.xlane.f32.xlu0 %v4214
        %v4216 = vpop.xlane.xlu0 %4215
        %v4217 = vrcp.pop %v4195
        %v4218 = vrcp.pop %v4198
        %v4219 = vrcp.pop %v4201
        %v4220 = vrcp.pop %v4204
        %v4221 = vrcp.pop %v4207
        %v4222 = vrcp.pop %v4210
        %v4223 = vrcp.pop %v4213
        %v4224 = vrcp.pop %v4216
        %v4225 = vmul.f32 %v4178, %v4217
        %v4226 = vmul.f32 %v4180, %v4218
        %v4227 = vmul.f32 %v4182, %v4219
        %v4228 = vmul.f32 %v4184, %v4220
        %v4229 = vmul.f32 %v4186, %v4221
        %v4230 = vmul.f32 %v4188, %v4222
        %v4231 = vmul.f32 %v4190, %v4223
        %v4232 = vmul.f32 %v4192, %v4224
        %4233 = vrot.lane.b32.xlu0 %v952, 104
        %v4234 = vpop.permute.xlu0 %4233
        %4235 = vrot.lane.b32.xlu0 %v957, 104
        %v4236 = vpop.permute.xlu0 %4235
        %v4240 = vsel %vm1346, %v4225, 0
        %v4243 = vsel %vm1346, %v4226, 0
        %4245 = vmatprep.subr.mxu0 0.0
        %4246 = vmatpush1.msra.mxu0 %v4234
        %4247 = vmatprep.subr.mxu0 0.0
        %4248 = vmatpush1.msra.mxu0 %v4236
        %4249 = vmatprep.subr.mxu0 0.0
        %4250 = vmatpush1.msra.mxu0 0.0
        %4251 = vmatprep.subr.mxu0 0.0
        %4252 = vmatpush1.msra.mxu0 0.0
        %4253 = vmatprep.subr.mxu0 0.0
        %4254 = vmatpush1.msra.mxu0 0.0
        %4255 = vmatprep.subr.mxu0 0.0
        %4256 = vmatpush1.msra.mxu0 0.0
        %4257 = vmatprep.subr.mxu0 0.0
        %4258 = vmatpush1.msra.mxu0 0.0
        %4259 = vmatprep.subr.mxu0 0.0
        %4260 = vmatpush1.msra.mxu0 0.0
        %4261 = vmatprep.subr.mxu0 0.0
        %4262 = vmatpush1.msra.mxu0 0.0
        %4263 = vmatprep.subr.mxu0 0.0
        %4264 = vmatpush1.msra.mxu0 0.0
        %4265 = vmatprep.subr.mxu0 0.0
        %4266 = vmatpush1.msra.mxu0 0.0
        %4267 = vmatprep.subr.mxu0 0.0
        %4268 = vmatpush1.msra.mxu0 0.0
        %4269 = vmatprep.subr.mxu0 0.0
        %4270 = vmatpush1.msra.mxu0 0.0
        %4271 = vmatprep.subr.mxu0 0.0
        %4272 = vmatpush1.msra.mxu0 0.0
        %4273 = vmatprep.subr.mxu0 0.0
        %4274 = vmatpush1.msra.mxu0 0.0
        %4275 = vmatprep.subr.mxu0 0.0
        %4276 = vmatpush1.msra.mxu0 0.0
        %4277 = vmatprep.subr.mxu0 0.0
        %4278 = vmatpush1.msra.mxu0 0.0
        %4279 = vmatprep.subr.mxu0 0.0
        %4280 = vmatpush1.msra.mxu0 0.0
        %4281 = vmatprep.subr.mxu0 0.0
        %4282 = vmatpush1.msra.mxu0 0.0
        %4283 = vmatprep.subr.mxu0 0.0
        %4284 = vmatpush1.msra.mxu0 0.0
        %4285 = vmatprep.subr.mxu0 0.0
        %4286 = vmatpush1.msra.mxu0 0.0
        %4287 = vmatprep.subr.mxu0 0.0
        %4288 = vmatpush1.msra.mxu0 0.0
        %4289 = vmatprep.subr.mxu0 0.0
        %4290 = vmatpush1.msra.mxu0 0.0
        %4291 = vmatprep.subr.mxu0 0.0
        %4292 = vmatpush1.msra.mxu0 0.0
        %4293 = vmatprep.subr.mxu0 0.0
        %4294 = vmatpush1.msra.mxu0 0.0
        %4295 = vmatprep.subr.mxu0 0.0
        %4296 = vmatpush1.msra.mxu0 0.0
        %4297 = vmatprep.subr.mxu0 0.0
        %4298 = vmatpush1.msra.mxu0 0.0
        %4299 = vmatprep.subr.mxu0 0.0
        %4300 = vmatpush1.msra.mxu0 0.0
        %4301 = vmatprep.subr.mxu0 0.0
        %4302 = vmatpush1.msra.mxu0 0.0
        %4303 = vmatprep.subr.mxu0 0.0
        %4304 = vmatpush1.msra.mxu0 0.0
        %4305 = vmatprep.subr.mxu0 0.0
        %4306 = vmatpush1.msra.mxu0 0.0
        %4307 = vmatprep.subr.mxu0 0.0
        %4308 = vmatpush1.msra.mxu0 0.0
        %4309 = vmatprep.mubr.f32.mxu0 0.0
        %4310 = vmatmul.mubr.f32.gmra.mrb[0].mxu0 %v4240
        %v4311 = vpop.f32.mrb[0].mxu0
        %v4312 = vadd.f32 0.0, %v4311
        %v4313 = vpop.f32.mrb[0].mxu0
        %4314 = vmatprep.mubr.f32.mxu0 0.0
        %4315 = vmatmul.mubr.f32.gmra.mrb[0].mxu0 %v4243
        %v4316 = vpop.f32.mrb[0].mxu0
        %v4317 = vadd.f32 0.0, %v4316
        %v4318 = vpop.f32.mrb[0].mxu0
        %4319 = vdwg.mxu0
        %4320 = vrot.lane.b32.xlu0 %v962, 104
        %v4321 = vpop.permute.xlu0 %4320
        %4322 = vrot.lane.b32.xlu0 %v967, 104
        %v4323 = vpop.permute.xlu0 %4322
        %v4327 = vsel %vm1346, %v4227, 0
        %v4330 = vsel %vm1346, %v4228, 0
        %4332 = vmatprep.subr.mxu0 0.0
        %4333 = vmatpush1.msra.mxu0 %v4321
        %4334 = vmatprep.subr.mxu0 0.0
        %4335 = vmatpush1.msra.mxu0 %v4323
        %4336 = vmatprep.subr.mxu0 0.0
        %4337 = vmatpush1.msra.mxu0 0.0
        %4338 = vmatprep.subr.mxu0 0.0
        %4339 = vmatpush1.msra.mxu0 0.0
        %4340 = vmatprep.subr.mxu0 0.0
        %4341 = vmatpush1.msra.mxu0 0.0
        %4342 = vmatprep.subr.mxu0 0.0
        %4343 = vmatpush1.msra.mxu0 0.0
        %4344 = vmatprep.subr.mxu0 0.0
        %4345 = vmatpush1.msra.mxu0 0.0
        %4346 = vmatprep.subr.mxu0 0.0
        %4347 = vmatpush1.msra.mxu0 0.0
        %4348 = vmatprep.subr.mxu0 0.0
        %4349 = vmatpush1.msra.mxu0 0.0
        %4350 = vmatprep.subr.mxu0 0.0
        %4351 = vmatpush1.msra.mxu0 0.0
        %4352 = vmatprep.subr.mxu0 0.0
        %4353 = vmatpush1.msra.mxu0 0.0
        %4354 = vmatprep.subr.mxu0 0.0
        %4355 = vmatpush1.msra.mxu0 0.0
        %4356 = vmatprep.subr.mxu0 0.0
        %4357 = vmatpush1.msra.mxu0 0.0
        %4358 = vmatprep.subr.mxu0 0.0
        %4359 = vmatpush1.msra.mxu0 0.0
        %4360 = vmatprep.subr.mxu0 0.0
        %4361 = vmatpush1.msra.mxu0 0.0
        %4362 = vmatprep.subr.mxu0 0.0
        %4363 = vmatpush1.msra.mxu0 0.0
        %4364 = vmatprep.subr.mxu0 0.0
        %4365 = vmatpush1.msra.mxu0 0.0
        %4366 = vmatprep.subr.mxu0 0.0
        %4367 = vmatpush1.msra.mxu0 0.0
        %4368 = vmatprep.subr.mxu0 0.0
        %4369 = vmatpush1.msra.mxu0 0.0
        %4370 = vmatprep.subr.mxu0 0.0
        %4371 = vmatpush1.msra.mxu0 0.0
        %4372 = vmatprep.subr.mxu0 0.0
        %4373 = vmatpush1.msra.mxu0 0.0
        %4374 = vmatprep.subr.mxu0 0.0
        %4375 = vmatpush1.msra.mxu0 0.0
        %4376 = vmatprep.subr.mxu0 0.0
        %4377 = vmatpush1.msra.mxu0 0.0
        %4378 = vmatprep.subr.mxu0 0.0
        %4379 = vmatpush1.msra.mxu0 0.0
        %4380 = vmatprep.subr.mxu0 0.0
        %4381 = vmatpush1.msra.mxu0 0.0
        %4382 = vmatprep.subr.mxu0 0.0
        %4383 = vmatpush1.msra.mxu0 0.0
        %4384 = vmatprep.subr.mxu0 0.0
        %4385 = vmatpush1.msra.mxu0 0.0
        %4386 = vmatprep.subr.mxu0 0.0
        %4387 = vmatpush1.msra.mxu0 0.0
        %4388 = vmatprep.subr.mxu0 0.0
        %4389 = vmatpush1.msra.mxu0 0.0
        %4390 = vmatprep.subr.mxu0 0.0
        %4391 = vmatpush1.msra.mxu0 0.0
        %4392 = vmatprep.subr.mxu0 0.0
        %4393 = vmatpush1.msra.mxu0 0.0
        %4394 = vmatprep.subr.mxu0 0.0
        %4395 = vmatpush1.msra.mxu0 0.0
        %4396 = vmatprep.mubr.f32.mxu0 0.0
        %4397 = vmatmul.mubr.f32.gmra.mrb[0].mxu0 %v4327
        %v4398 = vpop.f32.mrb[0].mxu0
        %v4399 = vadd.f32 0.0, %v4398
        %v4400 = vpop.f32.mrb[0].mxu0
        %4401 = vmatprep.mubr.f32.mxu0 0.0
        %4402 = vmatmul.mubr.f32.gmra.mrb[0].mxu0 %v4330
        %v4403 = vpop.f32.mrb[0].mxu0
        %v4404 = vadd.f32 0.0, %v4403
        %v4405 = vpop.f32.mrb[0].mxu0
        %4406 = vdwg.mxu0
        %4407 = vrot.lane.b32.xlu0 %v972, 104
        %v4408 = vpop.permute.xlu0 %4407
        %4409 = vrot.lane.b32.xlu0 %v977, 104
        %v4410 = vpop.permute.xlu0 %4409
        %v4414 = vsel %vm1346, %v4229, 0
        %v4417 = vsel %vm1346, %v4230, 0
        %4419 = vmatprep.subr.mxu0 0.0
        %4420 = vmatpush1.msra.mxu0 %v4408
        %4421 = vmatprep.subr.mxu0 0.0
        %4422 = vmatpush1.msra.mxu0 %v4410
        %4423 = vmatprep.subr.mxu0 0.0
        %4424 = vmatpush1.msra.mxu0 0.0
        %4425 = vmatprep.subr.mxu0 0.0
        %4426 = vmatpush1.msra.mxu0 0.0
        %4427 = vmatprep.subr.mxu0 0.0
        %4428 = vmatpush1.msra.mxu0 0.0
        %4429 = vmatprep.subr.mxu0 0.0
        %4430 = vmatpush1.msra.mxu0 0.0
        %4431 = vmatprep.subr.mxu0 0.0
        %4432 = vmatpush1.msra.mxu0 0.0
        %4433 = vmatprep.subr.mxu0 0.0
        %4434 = vmatpush1.msra.mxu0 0.0
        %4435 = vmatprep.subr.mxu0 0.0
        %4436 = vmatpush1.msra.mxu0 0.0
        %4437 = vmatprep.subr.mxu0 0.0
        %4438 = vmatpush1.msra.mxu0 0.0
        %4439 = vmatprep.subr.mxu0 0.0
        %4440 = vmatpush1.msra.mxu0 0.0
        %4441 = vmatprep.subr.mxu0 0.0
        %4442 = vmatpush1.msra.mxu0 0.0
        %4443 = vmatprep.subr.mxu0 0.0
        %4444 = vmatpush1.msra.mxu0 0.0
        %4445 = vmatprep.subr.mxu0 0.0
        %4446 = vmatpush1.msra.mxu0 0.0
        %4447 = vmatprep.subr.mxu0 0.0
        %4448 = vmatpush1.msra.mxu0 0.0
        %4449 = vmatprep.subr.mxu0 0.0
        %4450 = vmatpush1.msra.mxu0 0.0
        %4451 = vmatprep.subr.mxu0 0.0
        %4452 = vmatpush1.msra.mxu0 0.0
        %4453 = vmatprep.subr.mxu0 0.0
        %4454 = vmatpush1.msra.mxu0 0.0
        %4455 = vmatprep.subr.mxu0 0.0
        %4456 = vmatpush1.msra.mxu0 0.0
        %4457 = vmatprep.subr.mxu0 0.0
        %4458 = vmatpush1.msra.mxu0 0.0
        %4459 = vmatprep.subr.mxu0 0.0
        %4460 = vmatpush1.msra.mxu0 0.0
        %4461 = vmatprep.subr.mxu0 0.0
        %4462 = vmatpush1.msra.mxu0 0.0
        %4463 = vmatprep.subr.mxu0 0.0
        %4464 = vmatpush1.msra.mxu0 0.0
        %4465 = vmatprep.subr.mxu0 0.0
        %4466 = vmatpush1.msra.mxu0 0.0
        %4467 = vmatprep.subr.mxu0 0.0
        %4468 = vmatpush1.msra.mxu0 0.0
        %4469 = vmatprep.subr.mxu0 0.0
        %4470 = vmatpush1.msra.mxu0 0.0
        %4471 = vmatprep.subr.mxu0 0.0
        %4472 = vmatpush1.msra.mxu0 0.0
        %4473 = vmatprep.subr.mxu0 0.0
        %4474 = vmatpush1.msra.mxu0 0.0
        %4475 = vmatprep.subr.mxu0 0.0
        %4476 = vmatpush1.msra.mxu0 0.0
        %4477 = vmatprep.subr.mxu0 0.0
        %4478 = vmatpush1.msra.mxu0 0.0
        %4479 = vmatprep.subr.mxu0 0.0
        %4480 = vmatpush1.msra.mxu0 0.0
        %4481 = vmatprep.subr.mxu0 0.0
        %4482 = vmatpush1.msra.mxu0 0.0
        %4483 = vmatprep.mubr.f32.mxu0 0.0
        %4484 = vmatmul.mubr.f32.gmra.mrb[0].mxu0 %v4414
        %v4485 = vpop.f32.mrb[0].mxu0
        %v4486 = vadd.f32 0.0, %v4485
        %v4487 = vpop.f32.mrb[0].mxu0
        %4488 = vmatprep.mubr.f32.mxu0 0.0
        %4489 = vmatmul.mubr.f32.gmra.mrb[0].mxu0 %v4417
        %v4490 = vpop.f32.mrb[0].mxu0
        %v4491 = vadd.f32 0.0, %v4490
        %v4492 = vpop.f32.mrb[0].mxu0
        %4493 = vdwg.mxu0
        %4494 = vrot.lane.b32.xlu0 %v982, 104
        %v4495 = vpop.permute.xlu0 %4494
        %4496 = vrot.lane.b32.xlu0 %v987, 104
        %v4497 = vpop.permute.xlu0 %4496
        %v4501 = vsel %vm1346, %v4231, 0
        %v4504 = vsel %vm1346, %v4232, 0
        %4506 = vmatprep.subr.mxu0 0.0
        %4507 = vmatpush1.msra.mxu0 %v4495
        %4508 = vmatprep.subr.mxu0 0.0
        %4509 = vmatpush1.msra.mxu0 %v4497
        %4510 = vmatprep.subr.mxu0 0.0
        %4511 = vmatpush1.msra.mxu0 0.0
        %4512 = vmatprep.subr.mxu0 0.0
        %4513 = vmatpush1.msra.mxu0 0.0
        %4514 = vmatprep.subr.mxu0 0.0
        %4515 = vmatpush1.msra.mxu0 0.0
        %4516 = vmatprep.subr.mxu0 0.0
        %4517 = vmatpush1.msra.mxu0 0.0
        %4518 = vmatprep.subr.mxu0 0.0
        %4519 = vmatpush1.msra.mxu0 0.0
        %4520 = vmatprep.subr.mxu0 0.0
        %4521 = vmatpush1.msra.mxu0 0.0
        %4522 = vmatprep.subr.mxu0 0.0
        %4523 = vmatpush1.msra.mxu0 0.0
        %4524 = vmatprep.subr.mxu0 0.0
        %4525 = vmatpush1.msra.mxu0 0.0
        %4526 = vmatprep.subr.mxu0 0.0
        %4527 = vmatpush1.msra.mxu0 0.0
        %4528 = vmatprep.subr.mxu0 0.0
        %4529 = vmatpush1.msra.mxu0 0.0
        %4530 = vmatprep.subr.mxu0 0.0
        %4531 = vmatpush1.msra.mxu0 0.0
        %4532 = vmatprep.subr.mxu0 0.0
        %4533 = vmatpush1.msra.mxu0 0.0
        %4534 = vmatprep.subr.mxu0 0.0
        %4535 = vmatpush1.msra.mxu0 0.0
        %4536 = vmatprep.subr.mxu0 0.0
        %4537 = vmatpush1.msra.mxu0 0.0
        %4538 = vmatprep.subr.mxu0 0.0
        %4539 = vmatpush1.msra.mxu0 0.0
        %4540 = vmatprep.subr.mxu0 0.0
        %4541 = vmatpush1.msra.mxu0 0.0
        %4542 = vmatprep.subr.mxu0 0.0
        %4543 = vmatpush1.msra.mxu0 0.0
        %4544 = vmatprep.subr.mxu0 0.0
        %4545 = vmatpush1.msra.mxu0 0.0
        %4546 = vmatprep.subr.mxu0 0.0
        %4547 = vmatpush1.msra.mxu0 0.0
        %4548 = vmatprep.subr.mxu0 0.0
        %4549 = vmatpush1.msra.mxu0 0.0
        %4550 = vmatprep.subr.mxu0 0.0
        %4551 = vmatpush1.msra.mxu0 0.0
        %4552 = vmatprep.subr.mxu0 0.0
        %4553 = vmatpush1.msra.mxu0 0.0
        %4554 = vmatprep.subr.mxu0 0.0
        %4555 = vmatpush1.msra.mxu0 0.0
        %4556 = vmatprep.subr.mxu0 0.0
        %4557 = vmatpush1.msra.mxu0 0.0
        %4558 = vmatprep.subr.mxu0 0.0
        %4559 = vmatpush1.msra.mxu0 0.0
        %4560 = vmatprep.subr.mxu0 0.0
        %4561 = vmatpush1.msra.mxu0 0.0
        %4562 = vmatprep.subr.mxu0 0.0
        %4563 = vmatpush1.msra.mxu0 0.0
        %4564 = vmatprep.subr.mxu0 0.0
        %4565 = vmatpush1.msra.mxu0 0.0
        %4566 = vmatprep.subr.mxu0 0.0
        %4567 = vmatpush1.msra.mxu0 0.0
        %4568 = vmatprep.subr.mxu0 0.0
        %4569 = vmatpush1.msra.mxu0 0.0
        %4570 = vmatprep.mubr.f32.mxu0 0.0
        %4571 = vmatmul.mubr.f32.gmra.mrb[0].mxu0 %v4501
        %v4572 = vpop.f32.mrb[0].mxu0
        %v4573 = vadd.f32 0.0, %v4572
        %v4574 = vpop.f32.mrb[0].mxu0
        %4575 = vmatprep.mubr.f32.mxu0 0.0
        %4576 = vmatmul.mubr.f32.gmra.mrb[0].mxu0 %v4504
        %v4577 = vpop.f32.mrb[0].mxu0
        %v4578 = vadd.f32 0.0, %v4577
        %v4579 = vpop.f32.mrb[0].mxu0
        %4580 = vdwg.mxu0
        %v4581 = vld [vmem:[%s9 + $0x18] sm:$0xff]
        %v4583 = vsel %vm997, %v4312, 0
        %v4586 = vsel %vm997, %v4317, 0
        %v4589 = vsel %vm997, %v4399, 0
        %v4592 = vsel %vm997, %v4404, 0
        %v4595 = vsel %vm997, %v4486, 0
        %v4598 = vsel %vm997, %v4491, 0
        %v4601 = vsel %vm997, %v4573, 0
        %v4604 = vsel %vm997, %v4578, 0
        %4606 = vmatprep.subr.mxu0 0.0
        %4607 = vmatpush1.msra.mxu0 %v4581
        %4608 = vmatprep.subr.mxu0 0.0
        %4609 = vmatpush1.msra.mxu0 0.0
        %4610 = vmatprep.subr.mxu0 0.0
        %4611 = vmatpush1.msra.mxu0 0.0
        %4612 = vmatprep.subr.mxu0 0.0
        %4613 = vmatpush1.msra.mxu0 0.0
        %4614 = vmatprep.subr.mxu0 0.0
        %4615 = vmatpush1.msra.mxu0 0.0
        %4616 = vmatprep.subr.mxu0 0.0
        %4617 = vmatpush1.msra.mxu0 0.0
        %4618 = vmatprep.subr.mxu0 0.0
        %4619 = vmatpush1.msra.mxu0 0.0
        %4620 = vmatprep.subr.mxu0 0.0
        %4621 = vmatpush1.msra.mxu0 0.0
        %4622 = vmatprep.subr.mxu0 0.0
        %4623 = vmatpush1.msra.mxu0 0.0
        %4624 = vmatprep.subr.mxu0 0.0
        %4625 = vmatpush1.msra.mxu0 0.0
        %4626 = vmatprep.subr.mxu0 0.0
        %4627 = vmatpush1.msra.mxu0 0.0
        %4628 = vmatprep.subr.mxu0 0.0
        %4629 = vmatpush1.msra.mxu0 0.0
        %4630 = vmatprep.subr.mxu0 0.0
        %4631 = vmatpush1.msra.mxu0 0.0
        %4632 = vmatprep.subr.mxu0 0.0
        %4633 = vmatpush1.msra.mxu0 0.0
        %4634 = vmatprep.subr.mxu0 0.0
        %4635 = vmatpush1.msra.mxu0 0.0
        %4636 = vmatprep.subr.mxu0 0.0
        %4637 = vmatpush1.msra.mxu0 0.0
        %4638 = vmatprep.subr.mxu0 0.0
        %4639 = vmatpush1.msra.mxu0 0.0
        %4640 = vmatprep.subr.mxu0 0.0
        %4641 = vmatpush1.msra.mxu0 0.0
        %4642 = vmatprep.subr.mxu0 0.0
        %4643 = vmatpush1.msra.mxu0 0.0
        %4644 = vmatprep.subr.mxu0 0.0
        %4645 = vmatpush1.msra.mxu0 0.0
        %4646 = vmatprep.subr.mxu0 0.0
        %4647 = vmatpush1.msra.mxu0 0.0
        %4648 = vmatprep.subr.mxu0 0.0
        %4649 = vmatpush1.msra.mxu0 0.0
        %4650 = vmatprep.subr.mxu0 0.0
        %4651 = vmatpush1.msra.mxu0 0.0
        %4652 = vmatprep.subr.mxu0 0.0
        %4653 = vmatpush1.msra.mxu0 0.0
        %4654 = vmatprep.subr.mxu0 0.0
        %4655 = vmatpush1.msra.mxu0 0.0
        %4656 = vmatprep.subr.mxu0 0.0
        %4657 = vmatpush1.msra.mxu0 0.0
        %4658 = vmatprep.subr.mxu0 0.0
        %4659 = vmatpush1.msra.mxu0 0.0
        %4660 = vmatprep.subr.mxu0 0.0
        %4661 = vmatpush1.msra.mxu0 0.0
        %4662 = vmatprep.subr.mxu0 0.0
        %4663 = vmatpush1.msra.mxu0 0.0
        %4664 = vmatprep.subr.mxu0 0.0
        %4665 = vmatpush1.msra.mxu0 0.0
        %4666 = vmatprep.subr.mxu0 0.0
        %4667 = vmatpush1.msra.mxu0 0.0
        %4668 = vmatprep.subr.mxu0 0.0
        %4669 = vmatpush1.msra.mxu0 0.0
        %4670 = vmatprep.mubr.f32.mxu0 0.0
        %4671 = vmatmul.mubr.f32.gmra.mrb[0].mxu0 %v4583
        %v4672 = vpop.f32.mrb[0].mxu0
        %v4673 = vadd.f32 0.0, %v4672
        %v4674 = vpop.f32.mrb[0].mxu0
        %4675 = vmatprep.mubr.f32.mxu0 0.0
        %4676 = vmatmul.mubr.f32.gmra.mrb[0].mxu0 %v4586
        %v4677 = vpop.f32.mrb[0].mxu0
        %v4678 = vadd.f32 0.0, %v4677
        %v4679 = vpop.f32.mrb[0].mxu0
        %4680 = vmatprep.mubr.f32.mxu0 0.0
        %4681 = vmatmul.mubr.f32.gmra.mrb[0].mxu0 %v4589
        %v4682 = vpop.f32.mrb[0].mxu0
        %v4683 = vadd.f32 0.0, %v4682
        %v4684 = vpop.f32.mrb[0].mxu0
        %4685 = vmatprep.mubr.f32.mxu0 0.0
        %4686 = vmatmul.mubr.f32.gmra.mrb[0].mxu0 %v4592
        %v4687 = vpop.f32.mrb[0].mxu0
        %v4688 = vadd.f32 0.0, %v4687
        %v4689 = vpop.f32.mrb[0].mxu0
        %4690 = vmatprep.mubr.f32.mxu0 0.0
        %4691 = vmatmul.mubr.f32.gmra.mrb[0].mxu0 %v4595
        %v4692 = vpop.f32.mrb[0].mxu0
        %v4693 = vadd.f32 0.0, %v4692
        %v4694 = vpop.f32.mrb[0].mxu0
        %4695 = vmatprep.mubr.f32.mxu0 0.0
        %4696 = vmatmul.mubr.f32.gmra.mrb[0].mxu0 %v4598
        %v4697 = vpop.f32.mrb[0].mxu0
        %v4698 = vadd.f32 0.0, %v4697
        %v4699 = vpop.f32.mrb[0].mxu0
        %4700 = vmatprep.mubr.f32.mxu0 0.0
        %4701 = vmatmul.mubr.f32.gmra.mrb[0].mxu0 %v4601
        %v4702 = vpop.f32.mrb[0].mxu0
        %v4703 = vadd.f32 0.0, %v4702
        %v4704 = vpop.f32.mrb[0].mxu0
        %4705 = vmatprep.mubr.f32.mxu0 0.0
        %4706 = vmatmul.mubr.f32.gmra.mrb[0].mxu0 %v4604
        %v4707 = vpop.f32.mrb[0].mxu0
        %v4708 = vadd.f32 0.0, %v4707
        %v4709 = vpop.f32.mrb[0].mxu0
        %4710 = vdwg.mxu0
        %v4711 = vadd.f32 %v3773, %v4673
        %v4712 = vadd.f32 %v3774, %v4678
        %v4713 = vadd.f32 %v3775, %v4683
        %v4714 = vadd.f32 %v3776, %v4688
        %v4715 = vadd.f32 %v3777, %v4693
        %v4716 = vadd.f32 %v3778, %v4698
        %v4717 = vadd.f32 %v3779, %v4703
        %v4718 = vadd.f32 %v3780, %v4708
        %4719 = vst.msk [vmem:[%s540] sm:$0xff] %vm580, %v4711
        %4720 = vst.msk [vmem:[%s540 + $0x8] sm:$0xff] %vm580, %v4712
        %4721 = vst.msk [vmem:[%s540 + $0x10] sm:$0xff] %vm580, %v4713
        %4722 = vst.msk [vmem:[%s540 + $0x18] sm:$0xff] %vm580, %v4714
        %4723 = vst.msk [vmem:[%s540 + $0x20] sm:$0xff] %vm580, %v4715
        %4724 = vst.msk [vmem:[%s540 + $0x28] sm:$0xff] %vm580, %v4716
        %4725 = vst.msk [vmem:[%s540 + $0x30] sm:$0xff] %vm580, %v4717
        %4726 = vst.msk [vmem:[%s540 + $0x38] sm:$0xff] %vm580, %v4718
        %s4727 = sand.u32 %s287, 1
        %s4728 = scalar_lea.sflag [#allocation4], %s4727
        %s4729 = sand.u32 %s287, 1
        %s4730 = smul.addr %s4729, 64
        %s4731 = scalar_lea.vmem [#allocation14], %s4730
        // Predicated region
        $region93: #{tpu_custom_call.1} parent=63 // pred_check
          %p4732 = pneg %p297
        $region94: #{tpu_custom_call.1} parent=63 // pred_check_branch
          %4734 = sbr.rel (%p4732) target = $region96
        $region95: #{tpu_custom_call.1} parent=63 // pred_region
          %s4735 = smul.u32 4, %s33
          %s4737 = ssub.s32 1024, 1024
          %4738 = vsyncadd %s4728, %s4737
          %s4739 = smul.addr %s4735, 2
          %s4740 = smul.addr %s4739, 128
          %s4741 = scalar_lea.hbm %s11, %s4740
          %s4742 = sshll.u32 %s4731, 4
          %s4743 = int_to_ptr.vmem [resolvable:$true] %s4742
          %4748 = dma.vmem_to_hbm [thread:$0]  %s4743, 1024, %s4741, %s4728, 128, 128, 8
        $region96: #{tpu_custom_call.1} parent=63 // pred_fallthru
          _
      $region64: #{tpu_custom_call.1} parent=5 // pred_fallthru
        _
      %p4749 = scmp.le.s32.totalorder 2, %s28
      // Predicated region
      $region97: #{tpu_custom_call.1} parent=5 // pred_check
        %p4750 = pneg %p4749
      $region98: #{tpu_custom_call.1} parent=5 // pred_check_branch
        %4752 = sbr.rel (%p4750) target = $region100
      $region99: #{tpu_custom_call.1} parent=5 // pred_region
        %s4753 = ssub.s32 %s28, 2
        // Predicated region
        $region101: #{tpu_custom_call.1} parent=99 // pred_check
          %p4754 = pneg %p303
        $region102: #{tpu_custom_call.1} parent=99 // pred_check_branch
          %4756 = sbr.rel (%p4754) target = $region104
        $region103: #{tpu_custom_call.1} parent=99 // pred_region
          %s4757 = sand.u32 %s288, 1
          %s4758 = scalar_lea.sflag [#allocation4], %s4757
          %s4759 = sand.u32 %s288, 1
          %s4760 = smul.addr %s4759, 64
          %s4761 = scalar_lea.vmem [#allocation14], %s4760
          %4762 = dma.done %s4758, 1024
        $region104: #{tpu_custom_call.1} parent=99 // pred_fallthru
          _
      $region100: #{tpu_custom_call.1} parent=5 // pred_fallthru
        _
    $region6: #{tpu_custom_call.1} parent=1 // loop_footer
      %s32 = sadd.s32 1, %s28
    $region7: #{tpu_custom_call.1} parent=1 // loop_footer_branch
      %27 = sbr.rel target = $region3
    $region8: #{tpu_custom_call.1} parent=1 // loop_exit
      _
    %4763 = vsyncpa [#allocation3], 1
    %s4764 = scalar_lea.sflag [#allocation3], 1
    %4765 = vsyncpa %s4764, 1
    %4766 = vsyncpa [#allocation6], 1
    %s4767 = scalar_lea.sflag [#allocation6], 1
    %4768 = vsyncpa %s4767, 1
    %4769 = vsyncpa [#allocation9], 1
    %4770 = vsyncpa [#allocation12], 1
    %4771 = vsyncpa [#allocation4], 1
    %s4772 = scalar_lea.sflag [#allocation4], 1
    %4773 = vsyncpa %s4772, 1

</llo_original>
